<compile_context>
chip_gen: v5e
topology: v5e:2x2
jax: 0.10.0
libtpu: 0.0.40
codegen_flags: <defaults>
</compile_context>

<pallas_src>
import functools

import numpy as np
import jax
import jax.numpy as jnp
from jax.experimental import pallas as pl
from jax.experimental.pallas import tpu as pltpu


def _bilinear_matrix(out_size: int, in_size: int) -> np.ndarray:
    """Interpolation matrix M (out, in) matching torch Upsample(bilinear, align_corners=False)."""
    M = np.zeros((out_size, in_size), np.float32)
    scale = in_size / out_size
    for i in range(out_size):
        src = (i + 0.5) * scale - 0.5
        src = max(src, 0.0)
        i0 = int(np.floor(src))
        i1 = min(i0 + 1, in_size - 1)
        frac = src - i0
        M[i, i0] += 1.0 - frac
        M[i, i1] += frac
    return M


def _round_up(v: int, m: int) -> int:
    return ((v + m - 1) // m) * m


def _tree_sum(terms):
    """Pairwise-tree sum (shorter dependency chains than a serial fold)."""
    terms = list(terms)
    while len(terms) > 1:
        nxt = [terms[i] + terms[i + 1] for i in range(0, len(terms) - 1, 2)]
        if len(terms) % 2:
            nxt.append(terms[-1])
        terms = nxt
    return terms[0]


def ra1_kernel(x_ref, pred_ref, lca_ref, uwT_ref, w1_ref, w2_ref,
               wsa_ref, bsa_ref, o_ref, pmax_ref, pmean_ref, *,
               W, h, w, HW, HWp, off, padw, Bblk):
    C = x_ref.shape[1]
    BC = Bblk * C

    xb = x_ref[...]                                  # (Bblk, C, HWp) f32, lane-dense
    x2d = xb.reshape(BC, HWp)                        # leading-dim merge (layout no-op)

    # ---------------- Channel attention (SE on [maxpool, avgpool]) ----------------
    if HWp > HW:
        lane = jax.lax.broadcasted_iota(jnp.int32, (1, HWp), 1)
        x_for_max = jnp.where(lane < HW, x2d, -jnp.inf)   # pad zeros must not win the max
    else:
        x_for_max = x2d
    mx = jnp.max(x_for_max, axis=1, keepdims=True)        # (BC, 1)
    av = jnp.sum(x2d, axis=1, keepdims=True) * (1.0 / HW)  # (BC, 1)  (pad lanes are zero)

    w1m = w1_ref[...]                                # (Cmid, C)
    w2m = w2_ref[...]                                # (C, Cmid)
    cas = []
    for b in range(Bblk):                            # tiny matmuls; MXU-fill noise
        vb = jnp.concatenate([mx[b * C:(b + 1) * C, :],
                              av[b * C:(b + 1) * C, :]], axis=1)          # (C, 2)
        hb = jnp.maximum(jnp.dot(w1m, vb, preferred_element_type=jnp.float32), 0.0)
        sb = jnp.dot(w2m, hb, preferred_element_type=jnp.float32)          # (C, 2)
        cas.append(jax.nn.sigmoid(sb[:, 0:1] + sb[:, 1:2]))                # (C, 1)
    ca = cas[0] if Bblk == 1 else jnp.concatenate(cas, axis=0)             # (BC, 1)
    xc3 = xb * ca.reshape(Bblk, C, 1)                # lane-broadcast

    # ---------------- Reverse attention ----------------
    a3 = jax.nn.sigmoid(-pred_ref[...])              # (Bblk, 1, HWp)
    att3 = xc3 * a3                                  # (Bblk, C, HWp)
    att2d = att3.reshape(BC, HWp)

    # ---------------- Bilinear x2 upsample of lca (separable) ----------------
    # Stage 1 (W axis): one lane-contracting MXU matmul.  lca is passed k-major
    # (h, Bblk, C, w) so the merge below is a pure leading-dim reshape.
    lca2d = lca_ref[...].reshape(h * BC, w)
    t1 = jnp.dot(lca2d, uwT_ref[...], preferred_element_type=jnp.float32)  # (h*BC, W)
    # Stage 2 (H axis): exact scale-2 blend (align_corners=False):
    #   out row 2k   = 0.75*in_k + 0.25*in_{k-1}   (clamped at k=0)
    #   out row 2k+1 = 0.75*in_k + 0.25*in_{k+1}   (clamped at k=h-1)
    # Assembled directly into the flat lane layout with a lane concatenate.
    pieces = []
    for k in range(h):
        rk = t1[k * BC:(k + 1) * BC, :]
        km = max(k - 1, 0)
        kp = min(k + 1, h - 1)
        rkm = t1[km * BC:(km + 1) * BC, :]
        rkp = t1[kp * BC:(kp + 1) * BC, :]
        pieces.append(0.75 * rk + 0.25 * rkm)        # output row 2k
        pieces.append(0.75 * rk + 0.25 * rkp)        # output row 2k+1
    if HWp > HW:
        pieces.append(jnp.zeros((BC, HWp - HW), jnp.float32))
    lca_up = jnp.concatenate(pieces, axis=1)         # (BC, HWp) lane-dense

    # ---------------- Spatial attention: 7x7 conv on [chan-max, chan-mean] --------
    mx_rows, mn_rows = [], []
    for b in range(Bblk):
        ab = att2d[b * C:(b + 1) * C, :]
        mx_rows.append(jnp.max(ab, axis=0, keepdims=True))                 # (1, HWp)
        mn_rows.append(jnp.sum(ab, axis=0, keepdims=True) * (1.0 / C))     # (1, HWp)
    smax = mx_rows[0] if Bblk == 1 else jnp.concatenate(mx_rows, axis=0)   # (Bblk, HWp)
    smean = mn_rows[0] if Bblk == 1 else jnp.concatenate(mn_rows, axis=0)

    # Lane-aligned padded rows in persistent VMEM scratch; only the (aligned)
    # margins are zeroed, the central region is fully overwritten each step.
    zl = jnp.zeros((Bblk, off), jnp.float32)
    zr = jnp.zeros((Bblk, padw - off - HWp), jnp.float32)
    pmax_ref[:, 0:off] = zl
    pmax_ref[:, off + HWp:padw] = zr
    pmean_ref[:, 0:off] = zl
    pmean_ref[:, off + HWp:padw] = zr
    pmax_ref[:, off:off + HWp] = smax                # aligned full-width store
    pmean_ref[:, off:off + HWp] = smean

    # Hoist all 98 conv weights (cheap SMEM scalar reads) before the tap loops.
    wts = [[[wsa_ref[ci * 49 + ky * 7 + kx] for kx in range(7)]
            for ky in range(7)] for ci in range(2)]

    # Column index j = p mod W (horizontal boundary masks).
    col = jax.lax.broadcasted_iota(jnp.int32, (1, HWp), 1) % W

    rows = (pmax_ref, pmean_ref)
    # Four independent accumulators -> parallel VALU chains; each tap is read
    # straight from the scratch ref so only the live tap tiles are in vregs.
    # TODO(synk): at large HW express this as banded MXU matmuls instead.
    accs = [jnp.zeros((Bblk, HWp), jnp.float32) for _ in range(4)]
    for kx in range(7):                              # kx: horizontal tap
        dx = kx - 3
        groups = []
        for ci in range(2):                          # ci: [max, mean] channel
            terms = []
            for ky in range(7):                      # ky: vertical tap
                start = off + (ky - 3) * W + dx      # flattened shift (zero-padded)
                terms.append(wts[ci][ky][kx] * rows[ci][:, start:start + HWp])
            groups.append(_tree_sum(terms))
        t = groups[0] + groups[1]
        if dx != 0:                                  # mask columns that wrapped a row
            jb = col + dx
            t = jnp.where((jb >= 0) & (jb < W), t, 0.0)
        accs[kx % 4] = accs[kx % 4] + t
    conv = (accs[0] + accs[1]) + (accs[2] + accs[3])
    sa = jax.nn.sigmoid(conv + bsa_ref[0])           # (Bblk, HWp)

    # ---------------- Final residual add ----------------
    y3 = att3 * sa.reshape(Bblk, 1, HWp) + xb + lca_up.reshape(Bblk, C, HWp)
    o_ref[...] = y3.astype(o_ref.dtype)


def ra1_forward(x, pred, lca, w1, w2, wsa, bsa, *, block_batch=None):
    B, C, H, W = x.shape
    _, _, h, w = lca.shape
    assert H == 2 * h and W == 2 * w, "RA1 uses Upsample(scale_factor=2)"
    HW = H * W
    HWp = _round_up(HW, 128)
    Cmid = w1.shape[0]

    # ---- batch-block size: amortize per-step overhead, keep >=2 steps on v7x ----
    if block_batch is None:
        per_batch_bytes = 4 * (2 * C + 2) * HWp
        budget = 8 * 1024 * 1024
        bblk = 1
        for cand in range(1, B + 1):
            if B % cand:
                continue
            if B >= 2 and B // cand < 2:
                continue
            if cand * per_batch_bytes > budget:
                continue
            bblk = cand
    else:
        bblk = block_batch
        assert B % bblk == 0

    # ---- padded-row geometry for the flattened 7x7 conv (128-aligned margins) ----
    off = _round_up(3 * W + 3, 128)
    padw = off + HWp + off

    # ---- lane-dense padded flats (wrapper-side layout plumbing) ----
    x2 = x.reshape(B, C, HW)
    pred2 = pred.reshape(B, 1, HW)
    if HWp > HW:
        x2 = jnp.pad(x2, ((0, 0), (0, 0), (0, HWp - HW)))
        pred2 = jnp.pad(pred2, ((0, 0), (0, 0), (0, HWp - HW)))
    lca_t = jnp.transpose(lca, (2, 0, 1, 3))          # (h, B, C, w): k-major for clean merge
    uwT = jnp.asarray(_bilinear_matrix(W, w).T)       # (w, W) separable W-axis matrix
    wsa_flat = wsa.reshape(-1).astype(jnp.float32)    # (2*7*7,) in SMEM
    bsa_flat = bsa.reshape(-1).astype(jnp.float32)    # (1,)    in SMEM

    kernel = functools.partial(ra1_kernel, W=W, h=h, w=w, HW=HW, HWp=HWp,
                               off=off, padw=padw, Bblk=bblk)

    grid_spec = pltpu.PrefetchScalarGridSpec(
        num_scalar_prefetch=0,
        grid=(B // bblk,),
        in_specs=[
            pl.BlockSpec((bblk, C, HWp), lambda b: (b, 0, 0)),       # x (lane-dense, padded)
            pl.BlockSpec((bblk, 1, HWp), lambda b: (b, 0, 0)),       # pred
            pl.BlockSpec((h, bblk, C, w), lambda b: (0, b, 0, 0)),   # lca (k-major)
            pl.BlockSpec((w, W), lambda b: (0, 0)),                  # W-axis upsample matrix
            pl.BlockSpec((Cmid, C), lambda b: (0, 0)),               # SE conv1 weight
            pl.BlockSpec((C, Cmid), lambda b: (0, 0)),               # SE conv2 weight
            pl.BlockSpec(memory_space=pltpu.MemorySpace.SMEM),       # 7x7 conv weights
            pl.BlockSpec(memory_space=pltpu.MemorySpace.SMEM),       # 7x7 conv bias
        ],
        out_specs=pl.BlockSpec((bblk, C, HWp), lambda b: (b, 0, 0)),
        scratch_shapes=[pltpu.VMEM((bblk, padw), jnp.float32),       # padded chan-max rows
                        pltpu.VMEM((bblk, padw), jnp.float32)],      # padded chan-mean rows
    )

    # ---- explicit VMEM budget (double-buffered blocks + scratch + headroom),
    #      capped at 64 MiB so the same setting is valid on v7x ----
    block_bytes = 4 * (2 * bblk * C * HWp + bblk * HWp + h * bblk * C * w)
    const_bytes = 4 * (w * W + 2 * Cmid * C)
    scratch_bytes = 4 * 2 * bblk * padw
    vmem_limit = int(min(max(3 * (2 * block_bytes + 2 * const_bytes + scratch_bytes),
                             16 * 1024 * 1024),
                         64 * 1024 * 1024))

    cost = pl.CostEstimate(
        flops=int(B * (2 * C * h * w * W + 4 * C * HW + 196 * HW + 10 * C * HW)),
        transcendentals=int(B * (2 * HW + 2 * C)),
        bytes_accessed=int(4 * B * (2 * C * HW + HW + C * h * w)),
    )

    y = pl.pallas_call(
        kernel,
        out_shape=jax.ShapeDtypeStruct((B, C, HWp), x.dtype),
        grid_spec=grid_spec,
        compiler_params=pltpu.CompilerParams(
            dimension_semantics=("parallel",),       # batch blocks across TCs (v7x)
            vmem_limit_bytes=vmem_limit),
        cost_estimate=cost,
    )(x2, pred2, lca_t, uwT, w1, w2, wsa_flat, bsa_flat)

    if HWp > HW:
        y = y[:, :, :HW]
    return y.reshape(B, C, H, W)


def ra1_reference(x, pred, lca, w1, w2, wsa, bsa):
    """Pure-JAX reference of the PyTorch RA1 forward pass (for validation)."""
    B, C, H, W = x.shape
    _, _, h, w = lca.shape
    hp = jax.lax.Precision.HIGHEST
    # channel attention
    mx = jnp.max(x, axis=(2, 3), keepdims=True)
    av = jnp.mean(x, axis=(2, 3), keepdims=True)

    def se(v):
        vv = v[:, :, 0, 0]
        hid = jnp.maximum(jnp.dot(vv, w1.T, precision=hp), 0.0)
        return jnp.dot(hid, w2.T, precision=hp)

    ca = jax.nn.sigmoid(se(mx) + se(av))[:, :, None, None]
    xc = x * ca
    att = xc * jax.nn.sigmoid(-pred)
    # bilinear x2 upsample
    uh = jnp.asarray(_bilinear_matrix(H, h))
    uw = jnp.asarray(_bilinear_matrix(W, w))
    lca_up = jnp.einsum('ip,bcpq,jq->bcij', uh, lca, uw, precision=hp)
    # spatial attention
    smax = jnp.max(att, axis=1, keepdims=True)
    smean = jnp.mean(att, axis=1, keepdims=True)
    sin = jnp.concatenate([smax, smean], axis=1)
    conv = jax.lax.conv_general_dilated(
        sin, wsa, window_strides=(1, 1), padding=((3, 3), (3, 3)),
        dimension_numbers=('NCHW', 'OIHW', 'NCHW'), precision=hp)
    sa = jax.nn.sigmoid(conv + bsa.reshape(1, 1, 1, 1))
    return att * sa + x + lca_up


if __name__ == "__main__":
    # Small shapes consistent with RA1(in_channel=32, reduction=16, kernel_size=7)
    B, C, H, W = 2, 32, 16, 16
    reduction = 16
    Cmid = C // reduction

    key = jax.random.PRNGKey(0)
    k_x, k_p, k_l, k_w1, k_w2, k_ws, k_bs = jax.random.split(key, 7)

    x = jax.random.normal(k_x, (B, C, H, W), jnp.float32)
    pred = jax.random.normal(k_p, (B, 1, H, W), jnp.float32)
    lca = jax.random.normal(k_l, (B, C, H // 2, W // 2), jnp.float32)

    # Deterministic synthetic parameters (shapes from the module __init__).
    w1 = 0.1 * jax.random.normal(k_w1, (Cmid, C), jnp.float32)        # Conv2d(C, C//r, 1, bias=False)
    w2 = 0.1 * jax.random.normal(k_w2, (C, Cmid), jnp.float32)        # Conv2d(C//r, C, 1, bias=False)
    wsa = 0.05 * jax.random.normal(k_ws, (1, 2, 7, 7), jnp.float32)   # Conv2d(2, 1, 7, padding=3)
    bsa = 0.01 * jax.random.normal(k_bs, (1,), jnp.float32)

    fwd = jax.jit(ra1_forward)
    y = jax.block_until_ready(fwd(x, pred, lca, w1, w2, wsa, bsa))
    assert y.shape == (B, C, H, W)
    assert bool(jnp.all(jnp.isfinite(y)))

    y_ref = jax.block_until_ready(jax.jit(ra1_reference)(x, pred, lca, w1, w2, wsa, bsa))
    max_err = float(jnp.max(jnp.abs(y - y_ref)))
    assert bool(jnp.allclose(y, y_ref, atol=2e-3, rtol=2e-3)), max_err

    print("KERNEL_OK")
</pallas_src>

<mosaic_0001>
module attributes {stable_mosaic.version = 11 : i64} {
  func.func @ra1_kernel(%arg0: i32, %arg1: memref<1x32x256xf32, #tpu.memory_space<vmem>>, %arg2: memref<1x1x256xf32, #tpu.memory_space<vmem>>, %arg3: memref<8x1x32x8xf32, #tpu.memory_space<vmem>>, %arg4: memref<8x16xf32, #tpu.memory_space<vmem>>, %arg5: memref<2x32xf32, #tpu.memory_space<vmem>>, %arg6: memref<32x2xf32, #tpu.memory_space<vmem>>, %arg7: memref<98xf32, #tpu.memory_space<smem>>, %arg8: memref<1xf32, #tpu.memory_space<smem>>, %arg9: memref<1x32x256xf32, #tpu.memory_space<vmem>>, %arg10: memref<1x512xf32, #tpu.memory_space<vmem>>, %arg11: memref<1x512xf32, #tpu.memory_space<vmem>>) attributes {dimension_semantics = [#tpu.dimension_semantics<parallel>], iteration_bounds = array<i64: 2>, scalar_prefetch = 0 : i64, scratch_operands = 2 : i64, tpu.core_type = #tpu.core_type<tc>, window_params = [{transform_indices = @transform_0, window_bounds = array<i64: 1, 32, 256>}, {transform_indices = @transform_1, window_bounds = array<i64: 1, 1, 256>}, {transform_indices = @transform_2, window_bounds = array<i64: 8, 1, 32, 8>}, {pipeline_mode = #tpu.pipeline_mode<synchronous>, transform_indices = @transform_3, window_bounds = array<i64: 8, 16>}, {pipeline_mode = #tpu.pipeline_mode<synchronous>, transform_indices = @transform_4, window_bounds = array<i64: 2, 32>}, {pipeline_mode = #tpu.pipeline_mode<synchronous>, transform_indices = @transform_5, window_bounds = array<i64: 32, 2>}, {transform_indices = @transform_6, window_bounds = array<i64: 98>}, {transform_indices = @transform_7, window_bounds = array<i64: 1>}, {transform_indices = @transform_8, window_bounds = array<i64: 1, 32, 256>}]} {
    %c0 = arith.constant 0 : index
    %c0_0 = arith.constant 0 : index
    %c0_1 = arith.constant 0 : index
    %0 = vector.load %arg1[%c0, %c0_0, %c0_1] : memref<1x32x256xf32, #tpu.memory_space<vmem>>, vector<1x32x256xf32>
    %1 = vector.shape_cast %0 : vector<1x32x256xf32> to vector<32x256xf32>
    %cst = arith.constant dense<0xFF800000> : vector<32xf32>
    %2 = vector.multi_reduction <maximumf>, %1, %cst [1] : vector<32x256xf32> to vector<32xf32>
    %3 = vector.shape_cast %2 : vector<32xf32> to vector<32x1xf32>
    %cst_2 = arith.constant dense<0.000000e+00> : vector<32xf32>
    %4 = vector.multi_reduction <add>, %1, %cst_2 [1] : vector<32x256xf32> to vector<32xf32>
    %5 = vector.shape_cast %4 : vector<32xf32> to vector<32x1xf32>
    %cst_3 = arith.constant 3.906250e-03 : f32
    %6 = vector.broadcast %cst_3 : f32 to vector<32x1xf32>
    %7 = arith.mulf %5, %6 : vector<32x1xf32>
    %c0_4 = arith.constant 0 : index
    %c0_5 = arith.constant 0 : index
    %8 = vector.load %arg5[%c0_4, %c0_5] : memref<2x32xf32, #tpu.memory_space<vmem>>, vector<2x32xf32>
    %c0_6 = arith.constant 0 : index
    %c0_7 = arith.constant 0 : index
    %9 = vector.load %arg6[%c0_6, %c0_7] : memref<32x2xf32, #tpu.memory_space<vmem>>, vector<32x2xf32>
    %10 = tpu.concatenate %3, %7 in 1 : vector<32x1xf32>, vector<32x1xf32> -> vector<32x2xf32>
    %cst_8 = arith.constant dense<0.000000e+00> : vector<2x2xf32>
    %11 = tpu.matmul %8, %10, %cst_8 {dimension_numbers = #tpu.dot_dimension_numbers<[1], [0], [0], [1], [0, 0, 1, 1], [], []>} : vector<2x32xf32>, vector<32x2xf32>, vector<2x2xf32> -> vector<2x2xf32>
    %cst_9 = arith.constant 0.000000e+00 : f32
    %12 = vector.broadcast %cst_9 : f32 to vector<2x2xf32>
    %13 = arith.maximumf %11, %12 : vector<2x2xf32>
    %cst_10 = arith.constant dense<0.000000e+00> : vector<32x2xf32>
    %14 = tpu.matmul %9, %13, %cst_10 {dimension_numbers = #tpu.dot_dimension_numbers<[1], [0], [0], [1], [0, 0, 1, 1], [], []>} : vector<32x2xf32>, vector<2x2xf32>, vector<32x2xf32> -> vector<32x2xf32>
    %15 = vector.extract_strided_slice %14 {offsets = [0, 0], sizes = [32, 1], strides = [1, 1]} : vector<32x2xf32> to vector<32x1xf32>
    %16 = vector.extract_strided_slice %14 {offsets = [0, 1], sizes = [32, 1], strides = [1, 1]} : vector<32x2xf32> to vector<32x1xf32>
    %17 = arith.addf %15, %16 : vector<32x1xf32>
    %18 = arith.negf %17 : vector<32x1xf32>
    %19 = math.exp %18 : vector<32x1xf32>
    %cst_11 = arith.constant 1.000000e+00 : f32
    %20 = vector.broadcast %cst_11 : f32 to vector<32x1xf32>
    %21 = arith.addf %20, %19 : vector<32x1xf32>
    %22 = arith.divf %20, %21 : vector<32x1xf32>
    %23 = vector.shape_cast %22 : vector<32x1xf32> to vector<1x32x1xf32>
    %24 = vector.broadcast %23 : vector<1x32x1xf32> to vector<1x32x256xf32>
    %25 = arith.mulf %0, %24 : vector<1x32x256xf32>
    %c0_12 = arith.constant 0 : index
    %c0_13 = arith.constant 0 : index
    %c0_14 = arith.constant 0 : index
    %26 = vector.load %arg2[%c0_12, %c0_13, %c0_14] : memref<1x1x256xf32, #tpu.memory_space<vmem>>, vector<1x1x256xf32>
    %cst_15 = arith.constant 0.000000e+00 : f32
    %27 = vector.broadcast %cst_15 : f32 to vector<1x1x256xf32>
    %28 = arith.subf %27, %26 : vector<1x1x256xf32>
    %29 = arith.negf %28 : vector<1x1x256xf32>
    %30 = math.exp %29 : vector<1x1x256xf32>
    %cst_16 = arith.constant 1.000000e+00 : f32
    %31 = vector.broadcast %cst_16 : f32 to vector<1x1x256xf32>
    %32 = arith.addf %31, %30 : vector<1x1x256xf32>
    %33 = arith.divf %31, %32 : vector<1x1x256xf32>
    %34 = vector.broadcast %33 : vector<1x1x256xf32> to vector<1x32x256xf32>
    %35 = arith.mulf %25, %34 : vector<1x32x256xf32>
    %36 = vector.shape_cast %35 : vector<1x32x256xf32> to vector<32x256xf32>
    %c0_17 = arith.constant 0 : index
    %c0_18 = arith.constant 0 : index
    %c0_19 = arith.constant 0 : index
    %c0_20 = arith.constant 0 : index
    %37 = vector.load %arg3[%c0_17, %c0_18, %c0_19, %c0_20] : memref<8x1x32x8xf32, #tpu.memory_space<vmem>>, vector<8x1x32x8xf32>
    %38 = vector.shape_cast %37 : vector<8x1x32x8xf32> to vector<256x8xf32>
    %c0_21 = arith.constant 0 : index
    %c0_22 = arith.constant 0 : index
    %39 = vector.load %arg4[%c0_21, %c0_22] : memref<8x16xf32, #tpu.memory_space<vmem>>, vector<8x16xf32>
    %cst_23 = arith.constant dense<0.000000e+00> : vector<256x16xf32>
    %40 = tpu.matmul %38, %39, %cst_23 {dimension_numbers = #tpu.dot_dimension_numbers<[1], [0], [0], [1], [0, 0, 1, 1], [], []>} : vector<256x8xf32>, vector<8x16xf32>, vector<256x16xf32> -> vector<256x16xf32>
    %41 = vector.extract_strided_slice %40 {offsets = [0, 0], sizes = [32, 16], strides = [1, 1]} : vector<256x16xf32> to vector<32x16xf32>
    %42 = vector.extract_strided_slice %40 {offsets = [0, 0], sizes = [32, 16], strides = [1, 1]} : vector<256x16xf32> to vector<32x16xf32>
    %43 = vector.extract_strided_slice %40 {offsets = [32, 0], sizes = [32, 16], strides = [1, 1]} : vector<256x16xf32> to vector<32x16xf32>
    %cst_24 = arith.constant 7.500000e-01 : f32
    %44 = vector.broadcast %cst_24 : f32 to vector<32x16xf32>
    %45 = arith.mulf %44, %41 : vector<32x16xf32>
    %cst_25 = arith.constant 2.500000e-01 : f32
    %46 = vector.broadcast %cst_25 : f32 to vector<32x16xf32>
    %47 = arith.mulf %46, %42 : vector<32x16xf32>
    %48 = arith.addf %45, %47 : vector<32x16xf32>
    %cst_26 = arith.constant 7.500000e-01 : f32
    %49 = vector.broadcast %cst_26 : f32 to vector<32x16xf32>
    %50 = arith.mulf %49, %41 : vector<32x16xf32>
    %cst_27 = arith.constant 2.500000e-01 : f32
    %51 = vector.broadcast %cst_27 : f32 to vector<32x16xf32>
    %52 = arith.mulf %51, %43 : vector<32x16xf32>
    %53 = arith.addf %50, %52 : vector<32x16xf32>
    %54 = vector.extract_strided_slice %40 {offsets = [32, 0], sizes = [32, 16], strides = [1, 1]} : vector<256x16xf32> to vector<32x16xf32>
    %55 = vector.extract_strided_slice %40 {offsets = [0, 0], sizes = [32, 16], strides = [1, 1]} : vector<256x16xf32> to vector<32x16xf32>
    %56 = vector.extract_strided_slice %40 {offsets = [64, 0], sizes = [32, 16], strides = [1, 1]} : vector<256x16xf32> to vector<32x16xf32>
    %cst_28 = arith.constant 7.500000e-01 : f32
    %57 = vector.broadcast %cst_28 : f32 to vector<32x16xf32>
    %58 = arith.mulf %57, %54 : vector<32x16xf32>
    %cst_29 = arith.constant 2.500000e-01 : f32
    %59 = vector.broadcast %cst_29 : f32 to vector<32x16xf32>
    %60 = arith.mulf %59, %55 : vector<32x16xf32>
    %61 = arith.addf %58, %60 : vector<32x16xf32>
    %cst_30 = arith.constant 7.500000e-01 : f32
    %62 = vector.broadcast %cst_30 : f32 to vector<32x16xf32>
    %63 = arith.mulf %62, %54 : vector<32x16xf32>
    %cst_31 = arith.constant 2.500000e-01 : f32
    %64 = vector.broadcast %cst_31 : f32 to vector<32x16xf32>
    %65 = arith.mulf %64, %56 : vector<32x16xf32>
    %66 = arith.addf %63, %65 : vector<32x16xf32>
    %67 = vector.extract_strided_slice %40 {offsets = [64, 0], sizes = [32, 16], strides = [1, 1]} : vector<256x16xf32> to vector<32x16xf32>
    %68 = vector.extract_strided_slice %40 {offsets = [32, 0], sizes = [32, 16], strides = [1, 1]} : vector<256x16xf32> to vector<32x16xf32>
    %69 = vector.extract_strided_slice %40 {offsets = [96, 0], sizes = [32, 16], strides = [1, 1]} : vector<256x16xf32> to vector<32x16xf32>
    %cst_32 = arith.constant 7.500000e-01 : f32
    %70 = vector.broadcast %cst_32 : f32 to vector<32x16xf32>
    %71 = arith.mulf %70, %67 : vector<32x16xf32>
    %cst_33 = arith.constant 2.500000e-01 : f32
    %72 = vector.broadcast %cst_33 : f32 to vector<32x16xf32>
    %73 = arith.mulf %72, %68 : vector<32x16xf32>
    %74 = arith.addf %71, %73 : vector<32x16xf32>
    %cst_34 = arith.constant 7.500000e-01 : f32
    %75 = vector.broadcast %cst_34 : f32 to vector<32x16xf32>
    %76 = arith.mulf %75, %67 : vector<32x16xf32>
    %cst_35 = arith.constant 2.500000e-01 : f32
    %77 = vector.broadcast %cst_35 : f32 to vector<32x16xf32>
    %78 = arith.mulf %77, %69 : vector<32x16xf32>
    %79 = arith.addf %76, %78 : vector<32x16xf32>
    %80 = vector.extract_strided_slice %40 {offsets = [96, 0], sizes = [32, 16], strides = [1, 1]} : vector<256x16xf32> to vector<32x16xf32>
    %81 = vector.extract_strided_slice %40 {offsets = [64, 0], sizes = [32, 16], strides = [1, 1]} : vector<256x16xf32> to vector<32x16xf32>
    %82 = vector.extract_strided_slice %40 {offsets = [128, 0], sizes = [32, 16], strides = [1, 1]} : vector<256x16xf32> to vector<32x16xf32>
    %cst_36 = arith.constant 7.500000e-01 : f32
    %83 = vector.broadcast %cst_36 : f32 to vector<32x16xf32>
    %84 = arith.mulf %83, %80 : vector<32x16xf32>
    %cst_37 = arith.constant 2.500000e-01 : f32
    %85 = vector.broadcast %cst_37 : f32 to vector<32x16xf32>
    %86 = arith.mulf %85, %81 : vector<32x16xf32>
    %87 = arith.addf %84, %86 : vector<32x16xf32>
    %cst_38 = arith.constant 7.500000e-01 : f32
    %88 = vector.broadcast %cst_38 : f32 to vector<32x16xf32>
    %89 = arith.mulf %88, %80 : vector<32x16xf32>
    %cst_39 = arith.constant 2.500000e-01 : f32
    %90 = vector.broadcast %cst_39 : f32 to vector<32x16xf32>
    %91 = arith.mulf %90, %82 : vector<32x16xf32>
    %92 = arith.addf %89, %91 : vector<32x16xf32>
    %93 = vector.extract_strided_slice %40 {offsets = [128, 0], sizes = [32, 16], strides = [1, 1]} : vector<256x16xf32> to vector<32x16xf32>
    %94 = vector.extract_strided_slice %40 {offsets = [96, 0], sizes = [32, 16], strides = [1, 1]} : vector<256x16xf32> to vector<32x16xf32>
    %95 = vector.extract_strided_slice %40 {offsets = [160, 0], sizes = [32, 16], strides = [1, 1]} : vector<256x16xf32> to vector<32x16xf32>
    %cst_40 = arith.constant 7.500000e-01 : f32
    %96 = vector.broadcast %cst_40 : f32 to vector<32x16xf32>
    %97 = arith.mulf %96, %93 : vector<32x16xf32>
    %cst_41 = arith.constant 2.500000e-01 : f32
    %98 = vector.broadcast %cst_41 : f32 to vector<32x16xf32>
    %99 = arith.mulf %98, %94 : vector<32x16xf32>
    %100 = arith.addf %97, %99 : vector<32x16xf32>
    %cst_42 = arith.constant 7.500000e-01 : f32
    %101 = vector.broadcast %cst_42 : f32 to vector<32x16xf32>
    %102 = arith.mulf %101, %93 : vector<32x16xf32>
    %cst_43 = arith.constant 2.500000e-01 : f32
    %103 = vector.broadcast %cst_43 : f32 to vector<32x16xf32>
    %104 = arith.mulf %103, %95 : vector<32x16xf32>
    %105 = arith.addf %102, %104 : vector<32x16xf32>
    %106 = vector.extract_strided_slice %40 {offsets = [160, 0], sizes = [32, 16], strides = [1, 1]} : vector<256x16xf32> to vector<32x16xf32>
    %107 = vector.extract_strided_slice %40 {offsets = [128, 0], sizes = [32, 16], strides = [1, 1]} : vector<256x16xf32> to vector<32x16xf32>
    %108 = vector.extract_strided_slice %40 {offsets = [192, 0], sizes = [32, 16], strides = [1, 1]} : vector<256x16xf32> to vector<32x16xf32>
    %cst_44 = arith.constant 7.500000e-01 : f32
    %109 = vector.broadcast %cst_44 : f32 to vector<32x16xf32>
    %110 = arith.mulf %109, %106 : vector<32x16xf32>
    %cst_45 = arith.constant 2.500000e-01 : f32
    %111 = vector.broadcast %cst_45 : f32 to vector<32x16xf32>
    %112 = arith.mulf %111, %107 : vector<32x16xf32>
    %113 = arith.addf %110, %112 : vector<32x16xf32>
    %cst_46 = arith.constant 7.500000e-01 : f32
    %114 = vector.broadcast %cst_46 : f32 to vector<32x16xf32>
    %115 = arith.mulf %114, %106 : vector<32x16xf32>
    %cst_47 = arith.constant 2.500000e-01 : f32
    %116 = vector.broadcast %cst_47 : f32 to vector<32x16xf32>
    %117 = arith.mulf %116, %108 : vector<32x16xf32>
    %118 = arith.addf %115, %117 : vector<32x16xf32>
    %119 = vector.extract_strided_slice %40 {offsets = [192, 0], sizes = [32, 16], strides = [1, 1]} : vector<256x16xf32> to vector<32x16xf32>
    %120 = vector.extract_strided_slice %40 {offsets = [160, 0], sizes = [32, 16], strides = [1, 1]} : vector<256x16xf32> to vector<32x16xf32>
    %121 = vector.extract_strided_slice %40 {offsets = [224, 0], sizes = [32, 16], strides = [1, 1]} : vector<256x16xf32> to vector<32x16xf32>
    %cst_48 = arith.constant 7.500000e-01 : f32
    %122 = vector.broadcast %cst_48 : f32 to vector<32x16xf32>
    %123 = arith.mulf %122, %119 : vector<32x16xf32>
    %cst_49 = arith.constant 2.500000e-01 : f32
    %124 = vector.broadcast %cst_49 : f32 to vector<32x16xf32>
    %125 = arith.mulf %124, %120 : vector<32x16xf32>
    %126 = arith.addf %123, %125 : vector<32x16xf32>
    %cst_50 = arith.constant 7.500000e-01 : f32
    %127 = vector.broadcast %cst_50 : f32 to vector<32x16xf32>
    %128 = arith.mulf %127, %119 : vector<32x16xf32>
    %cst_51 = arith.constant 2.500000e-01 : f32
    %129 = vector.broadcast %cst_51 : f32 to vector<32x16xf32>
    %130 = arith.mulf %129, %121 : vector<32x16xf32>
    %131 = arith.addf %128, %130 : vector<32x16xf32>
    %132 = vector.extract_strided_slice %40 {offsets = [224, 0], sizes = [32, 16], strides = [1, 1]} : vector<256x16xf32> to vector<32x16xf32>
    %133 = vector.extract_strided_slice %40 {offsets = [192, 0], sizes = [32, 16], strides = [1, 1]} : vector<256x16xf32> to vector<32x16xf32>
    %134 = vector.extract_strided_slice %40 {offsets = [224, 0], sizes = [32, 16], strides = [1, 1]} : vector<256x16xf32> to vector<32x16xf32>
    %cst_52 = arith.constant 7.500000e-01 : f32
    %135 = vector.broadcast %cst_52 : f32 to vector<32x16xf32>
    %136 = arith.mulf %135, %132 : vector<32x16xf32>
    %cst_53 = arith.constant 2.500000e-01 : f32
    %137 = vector.broadcast %cst_53 : f32 to vector<32x16xf32>
    %138 = arith.mulf %137, %133 : vector<32x16xf32>
    %139 = arith.addf %136, %138 : vector<32x16xf32>
    %cst_54 = arith.constant 7.500000e-01 : f32
    %140 = vector.broadcast %cst_54 : f32 to vector<32x16xf32>
    %141 = arith.mulf %140, %132 : vector<32x16xf32>
    %cst_55 = arith.constant 2.500000e-01 : f32
    %142 = vector.broadcast %cst_55 : f32 to vector<32x16xf32>
    %143 = arith.mulf %142, %134 : vector<32x16xf32>
    %144 = arith.addf %141, %143 : vector<32x16xf32>
    %145 = tpu.concatenate %48, %53, %61, %66, %74, %79, %87, %92, %100, %105, %113, %118, %126, %131, %139, %144 in 1 : vector<32x16xf32>, vector<32x16xf32>, vector<32x16xf32>, vector<32x16xf32>, vector<32x16xf32>, vector<32x16xf32>, vector<32x16xf32>, vector<32x16xf32>, vector<32x16xf32>, vector<32x16xf32>, vector<32x16xf32>, vector<32x16xf32>, vector<32x16xf32>, vector<32x16xf32>, vector<32x16xf32>, vector<32x16xf32> -> vector<32x256xf32>
    %cst_56 = arith.constant dense<0xFF800000> : vector<256xf32>
    %146 = vector.multi_reduction <maximumf>, %36, %cst_56 [0] : vector<32x256xf32> to vector<256xf32>
    %147 = vector.shape_cast %146 : vector<256xf32> to vector<1x256xf32>
    %cst_57 = arith.constant dense<0.000000e+00> : vector<256xf32>
    %148 = vector.multi_reduction <add>, %36, %cst_57 [0] : vector<32x256xf32> to vector<256xf32>
    %149 = vector.shape_cast %148 : vector<256xf32> to vector<1x256xf32>
    %cst_58 = arith.constant 3.125000e-02 : f32
    %150 = vector.broadcast %cst_58 : f32 to vector<1x256xf32>
    %151 = arith.mulf %149, %150 : vector<1x256xf32>
    %cst_59 = arith.constant 0.000000e+00 : f32
    %152 = vector.broadcast %cst_59 : f32 to vector<1x128xf32>
    %cst_60 = arith.constant 0.000000e+00 : f32
    %153 = vector.broadcast %cst_60 : f32 to vector<1x128xf32>
    %c0_61 = arith.constant 0 : index
    %c0_62 = arith.constant 0 : index
    %154 = vector.load %arg10[%c0_61, %c0_62] : memref<1x512xf32, #tpu.memory_space<vmem>>, vector<1x128xf32>
    tpu.vector_store %arg10[%c0_61, %c0_62], %152 {strides = array<i32>} : memref<1x512xf32, #tpu.memory_space<vmem>>, vector<1x128xf32>,
    %c0_63 = arith.constant 0 : index
    %c384 = arith.constant 384 : index
    %155 = vector.load %arg10[%c0_63, %c384] : memref<1x512xf32, #tpu.memory_space<vmem>>, vector<1x128xf32>
    tpu.vector_store %arg10[%c0_63, %c384], %153 {strides = array<i32>} : memref<1x512xf32, #tpu.memory_space<vmem>>, vector<1x128xf32>,
    %c0_64 = arith.constant 0 : index
    %c0_65 = arith.constant 0 : index
    %156 = vector.load %arg11[%c0_64, %c0_65] : memref<1x512xf32, #tpu.memory_space<vmem>>, vector<1x128xf32>
    tpu.vector_store %arg11[%c0_64, %c0_65], %152 {strides = array<i32>} : memref<1x512xf32, #tpu.memory_space<vmem>>, vector<1x128xf32>,
    %c0_66 = arith.constant 0 : index
    %c384_67 = arith.constant 384 : index
    %157 = vector.load %arg11[%c0_66, %c384_67] : memref<1x512xf32, #tpu.memory_space<vmem>>, vector<1x128xf32>
    tpu.vector_store %arg11[%c0_66, %c384_67], %153 {strides = array<i32>} : memref<1x512xf32, #tpu.memory_space<vmem>>, vector<1x128xf32>,
    %c0_68 = arith.constant 0 : index
    %c128 = arith.constant 128 : index
    %158 = vector.load %arg10[%c0_68, %c128] : memref<1x512xf32, #tpu.memory_space<vmem>>, vector<1x256xf32>
    tpu.vector_store %arg10[%c0_68, %c128], %147 {strides = array<i32>} : memref<1x512xf32, #tpu.memory_space<vmem>>, vector<1x256xf32>,
    %c0_69 = arith.constant 0 : index
    %c128_70 = arith.constant 128 : index
    %159 = vector.load %arg11[%c0_69, %c128_70] : memref<1x512xf32, #tpu.memory_space<vmem>>, vector<1x256xf32>
    tpu.vector_store %arg11[%c0_69, %c128_70], %151 {strides = array<i32>} : memref<1x512xf32, #tpu.memory_space<vmem>>, vector<1x256xf32>,
    %c0_71 = arith.constant 0 : index
    %160 = memref.load %arg7[%c0_71] : memref<98xf32, #tpu.memory_space<smem>>
    %c1 = arith.constant 1 : index
    %161 = memref.load %arg7[%c1] : memref<98xf32, #tpu.memory_space<smem>>
    %c2 = arith.constant 2 : index
    %162 = memref.load %arg7[%c2] : memref<98xf32, #tpu.memory_space<smem>>
    %c3 = arith.constant 3 : index
    %163 = memref.load %arg7[%c3] : memref<98xf32, #tpu.memory_space<smem>>
    %c4 = arith.constant 4 : index
    %164 = memref.load %arg7[%c4] : memref<98xf32, #tpu.memory_space<smem>>
    %c5 = arith.constant 5 : index
    %165 = memref.load %arg7[%c5] : memref<98xf32, #tpu.memory_space<smem>>
    %c6 = arith.constant 6 : index
    %166 = memref.load %arg7[%c6] : memref<98xf32, #tpu.memory_space<smem>>
    %c7 = arith.constant 7 : index
    %167 = memref.load %arg7[%c7] : memref<98xf32, #tpu.memory_space<smem>>
    %c8 = arith.constant 8 : index
    %168 = memref.load %arg7[%c8] : memref<98xf32, #tpu.memory_space<smem>>
    %c9 = arith.constant 9 : index
    %169 = memref.load %arg7[%c9] : memref<98xf32, #tpu.memory_space<smem>>
    %c10 = arith.constant 10 : index
    %170 = memref.load %arg7[%c10] : memref<98xf32, #tpu.memory_space<smem>>
    %c11 = arith.constant 11 : index
    %171 = memref.load %arg7[%c11] : memref<98xf32, #tpu.memory_space<smem>>
    %c12 = arith.constant 12 : index
    %172 = memref.load %arg7[%c12] : memref<98xf32, #tpu.memory_space<smem>>
    %c13 = arith.constant 13 : index
    %173 = memref.load %arg7[%c13] : memref<98xf32, #tpu.memory_space<smem>>
    %c14 = arith.constant 14 : index
    %174 = memref.load %arg7[%c14] : memref<98xf32, #tpu.memory_space<smem>>
    %c15 = arith.constant 15 : index
    %175 = memref.load %arg7[%c15] : memref<98xf32, #tpu.memory_space<smem>>
    %c16 = arith.constant 16 : index
    %176 = memref.load %arg7[%c16] : memref<98xf32, #tpu.memory_space<smem>>
    %c17 = arith.constant 17 : index
    %177 = memref.load %arg7[%c17] : memref<98xf32, #tpu.memory_space<smem>>
    %c18 = arith.constant 18 : index
    %178 = memref.load %arg7[%c18] : memref<98xf32, #tpu.memory_space<smem>>
    %c19 = arith.constant 19 : index
    %179 = memref.load %arg7[%c19] : memref<98xf32, #tpu.memory_space<smem>>
    %c20 = arith.constant 20 : index
    %180 = memref.load %arg7[%c20] : memref<98xf32, #tpu.memory_space<smem>>
    %c21 = arith.constant 21 : index
    %181 = memref.load %arg7[%c21] : memref<98xf32, #tpu.memory_space<smem>>
    %c22 = arith.constant 22 : index
    %182 = memref.load %arg7[%c22] : memref<98xf32, #tpu.memory_space<smem>>
    %c23 = arith.constant 23 : index
    %183 = memref.load %arg7[%c23] : memref<98xf32, #tpu.memory_space<smem>>
    %c24 = arith.constant 24 : index
    %184 = memref.load %arg7[%c24] : memref<98xf32, #tpu.memory_space<smem>>
    %c25 = arith.constant 25 : index
    %185 = memref.load %arg7[%c25] : memref<98xf32, #tpu.memory_space<smem>>
    %c26 = arith.constant 26 : index
    %186 = memref.load %arg7[%c26] : memref<98xf32, #tpu.memory_space<smem>>
    %c27 = arith.constant 27 : index
    %187 = memref.load %arg7[%c27] : memref<98xf32, #tpu.memory_space<smem>>
    %c28 = arith.constant 28 : index
    %188 = memref.load %arg7[%c28] : memref<98xf32, #tpu.memory_space<smem>>
    %c29 = arith.constant 29 : index
    %189 = memref.load %arg7[%c29] : memref<98xf32, #tpu.memory_space<smem>>
    %c30 = arith.constant 30 : index
    %190 = memref.load %arg7[%c30] : memref<98xf32, #tpu.memory_space<smem>>
    %c31 = arith.constant 31 : index
    %191 = memref.load %arg7[%c31] : memref<98xf32, #tpu.memory_space<smem>>
    %c32 = arith.constant 32 : index
    %192 = memref.load %arg7[%c32] : memref<98xf32, #tpu.memory_space<smem>>
    %c33 = arith.constant 33 : index
    %193 = memref.load %arg7[%c33] : memref<98xf32, #tpu.memory_space<smem>>
    %c34 = arith.constant 34 : index
    %194 = memref.load %arg7[%c34] : memref<98xf32, #tpu.memory_space<smem>>
    %c35 = arith.constant 35 : index
    %195 = memref.load %arg7[%c35] : memref<98xf32, #tpu.memory_space<smem>>
    %c36 = arith.constant 36 : index
    %196 = memref.load %arg7[%c36] : memref<98xf32, #tpu.memory_space<smem>>
    %c37 = arith.constant 37 : index
    %197 = memref.load %arg7[%c37] : memref<98xf32, #tpu.memory_space<smem>>
    %c38 = arith.constant 38 : index
    %198 = memref.load %arg7[%c38] : memref<98xf32, #tpu.memory_space<smem>>
    %c39 = arith.constant 39 : index
    %199 = memref.load %arg7[%c39] : memref<98xf32, #tpu.memory_space<smem>>
    %c40 = arith.constant 40 : index
    %200 = memref.load %arg7[%c40] : memref<98xf32, #tpu.memory_space<smem>>
    %c41 = arith.constant 41 : index
    %201 = memref.load %arg7[%c41] : memref<98xf32, #tpu.memory_space<smem>>
    %c42 = arith.constant 42 : index
    %202 = memref.load %arg7[%c42] : memref<98xf32, #tpu.memory_space<smem>>
    %c43 = arith.constant 43 : index
    %203 = memref.load %arg7[%c43] : memref<98xf32, #tpu.memory_space<smem>>
    %c44 = arith.constant 44 : index
    %204 = memref.load %arg7[%c44] : memref<98xf32, #tpu.memory_space<smem>>
    %c45 = arith.constant 45 : index
    %205 = memref.load %arg7[%c45] : memref<98xf32, #tpu.memory_space<smem>>
    %c46 = arith.constant 46 : index
    %206 = memref.load %arg7[%c46] : memref<98xf32, #tpu.memory_space<smem>>
    %c47 = arith.constant 47 : index
    %207 = memref.load %arg7[%c47] : memref<98xf32, #tpu.memory_space<smem>>
    %c48 = arith.constant 48 : index
    %208 = memref.load %arg7[%c48] : memref<98xf32, #tpu.memory_space<smem>>
    %c49 = arith.constant 49 : index
    %209 = memref.load %arg7[%c49] : memref<98xf32, #tpu.memory_space<smem>>
    %c50 = arith.constant 50 : index
    %210 = memref.load %arg7[%c50] : memref<98xf32, #tpu.memory_space<smem>>
    %c51 = arith.constant 51 : index
    %211 = memref.load %arg7[%c51] : memref<98xf32, #tpu.memory_space<smem>>
    %c52 = arith.constant 52 : index
    %212 = memref.load %arg7[%c52] : memref<98xf32, #tpu.memory_space<smem>>
    %c53 = arith.constant 53 : index
    %213 = memref.load %arg7[%c53] : memref<98xf32, #tpu.memory_space<smem>>
    %c54 = arith.constant 54 : index
    %214 = memref.load %arg7[%c54] : memref<98xf32, #tpu.memory_space<smem>>
    %c55 = arith.constant 55 : index
    %215 = memref.load %arg7[%c55] : memref<98xf32, #tpu.memory_space<smem>>
    %c56 = arith.constant 56 : index
    %216 = memref.load %arg7[%c56] : memref<98xf32, #tpu.memory_space<smem>>
    %c57 = arith.constant 57 : index
    %217 = memref.load %arg7[%c57] : memref<98xf32, #tpu.memory_space<smem>>
    %c58 = arith.constant 58 : index
    %218 = memref.load %arg7[%c58] : memref<98xf32, #tpu.memory_space<smem>>
    %c59 = arith.constant 59 : index
    %219 = memref.load %arg7[%c59] : memref<98xf32, #tpu.memory_space<smem>>
    %c60 = arith.constant 60 : index
    %220 = memref.load %arg7[%c60] : memref<98xf32, #tpu.memory_space<smem>>
    %c61 = arith.constant 61 : index
    %221 = memref.load %arg7[%c61] : memref<98xf32, #tpu.memory_space<smem>>
    %c62 = arith.constant 62 : index
    %222 = memref.load %arg7[%c62] : memref<98xf32, #tpu.memory_space<smem>>
    %c63 = arith.constant 63 : index
    %223 = memref.load %arg7[%c63] : memref<98xf32, #tpu.memory_space<smem>>
    %c64 = arith.constant 64 : index
    %224 = memref.load %arg7[%c64] : memref<98xf32, #tpu.memory_space<smem>>
    %c65 = arith.constant 65 : index
    %225 = memref.load %arg7[%c65] : memref<98xf32, #tpu.memory_space<smem>>
    %c66 = arith.constant 66 : index
    %226 = memref.load %arg7[%c66] : memref<98xf32, #tpu.memory_space<smem>>
    %c67 = arith.constant 67 : index
    %227 = memref.load %arg7[%c67] : memref<98xf32, #tpu.memory_space<smem>>
    %c68 = arith.constant 68 : index
    %228 = memref.load %arg7[%c68] : memref<98xf32, #tpu.memory_space<smem>>
    %c69 = arith.constant 69 : index
    %229 = memref.load %arg7[%c69] : memref<98xf32, #tpu.memory_space<smem>>
    %c70 = arith.constant 70 : index
    %230 = memref.load %arg7[%c70] : memref<98xf32, #tpu.memory_space<smem>>
    %c71 = arith.constant 71 : index
    %231 = memref.load %arg7[%c71] : memref<98xf32, #tpu.memory_space<smem>>
    %c72 = arith.constant 72 : index
    %232 = memref.load %arg7[%c72] : memref<98xf32, #tpu.memory_space<smem>>
    %c73 = arith.constant 73 : index
    %233 = memref.load %arg7[%c73] : memref<98xf32, #tpu.memory_space<smem>>
    %c74 = arith.constant 74 : index
    %234 = memref.load %arg7[%c74] : memref<98xf32, #tpu.memory_space<smem>>
    %c75 = arith.constant 75 : index
    %235 = memref.load %arg7[%c75] : memref<98xf32, #tpu.memory_space<smem>>
    %c76 = arith.constant 76 : index
    %236 = memref.load %arg7[%c76] : memref<98xf32, #tpu.memory_space<smem>>
    %c77 = arith.constant 77 : index
    %237 = memref.load %arg7[%c77] : memref<98xf32, #tpu.memory_space<smem>>
    %c78 = arith.constant 78 : index
    %238 = memref.load %arg7[%c78] : memref<98xf32, #tpu.memory_space<smem>>
    %c79 = arith.constant 79 : index
    %239 = memref.load %arg7[%c79] : memref<98xf32, #tpu.memory_space<smem>>
    %c80 = arith.constant 80 : index
    %240 = memref.load %arg7[%c80] : memref<98xf32, #tpu.memory_space<smem>>
    %c81 = arith.constant 81 : index
    %241 = memref.load %arg7[%c81] : memref<98xf32, #tpu.memory_space<smem>>
    %c82 = arith.constant 82 : index
    %242 = memref.load %arg7[%c82] : memref<98xf32, #tpu.memory_space<smem>>
    %c83 = arith.constant 83 : index
    %243 = memref.load %arg7[%c83] : memref<98xf32, #tpu.memory_space<smem>>
    %c84 = arith.constant 84 : index
    %244 = memref.load %arg7[%c84] : memref<98xf32, #tpu.memory_space<smem>>
    %c85 = arith.constant 85 : index
    %245 = memref.load %arg7[%c85] : memref<98xf32, #tpu.memory_space<smem>>
    %c86 = arith.constant 86 : index
    %246 = memref.load %arg7[%c86] : memref<98xf32, #tpu.memory_space<smem>>
    %c87 = arith.constant 87 : index
    %247 = memref.load %arg7[%c87] : memref<98xf32, #tpu.memory_space<smem>>
    %c88 = arith.constant 88 : index
    %248 = memref.load %arg7[%c88] : memref<98xf32, #tpu.memory_space<smem>>
    %c89 = arith.constant 89 : index
    %249 = memref.load %arg7[%c89] : memref<98xf32, #tpu.memory_space<smem>>
    %c90 = arith.constant 90 : index
    %250 = memref.load %arg7[%c90] : memref<98xf32, #tpu.memory_space<smem>>
    %c91 = arith.constant 91 : index
    %251 = memref.load %arg7[%c91] : memref<98xf32, #tpu.memory_space<smem>>
    %c92 = arith.constant 92 : index
    %252 = memref.load %arg7[%c92] : memref<98xf32, #tpu.memory_space<smem>>
    %c93 = arith.constant 93 : index
    %253 = memref.load %arg7[%c93] : memref<98xf32, #tpu.memory_space<smem>>
    %c94 = arith.constant 94 : index
    %254 = memref.load %arg7[%c94] : memref<98xf32, #tpu.memory_space<smem>>
    %c95 = arith.constant 95 : index
    %255 = memref.load %arg7[%c95] : memref<98xf32, #tpu.memory_space<smem>>
    %c96 = arith.constant 96 : index
    %256 = memref.load %arg7[%c96] : memref<98xf32, #tpu.memory_space<smem>>
    %c97 = arith.constant 97 : index
    %257 = memref.load %arg7[%c97] : memref<98xf32, #tpu.memory_space<smem>>
    %258 = tpu.iota {dimensions = array<i32: 1>} : vector<1x256xi32>
    %c16_i32 = arith.constant 16 : i32
    %c0_i32 = arith.constant 0 : i32
    %259 = arith.cmpi eq, %c16_i32, %c0_i32 : i32
    %c1_i32 = arith.constant 1 : i32
    %260 = arith.select %259, %c1_i32, %c16_i32 : i32
    %261 = vector.broadcast %260 : i32 to vector<1x256xi32>
    %262 = arith.remsi %258, %261 : vector<1x256xi32>
    %c0_i32_72 = arith.constant 0 : i32
    %263 = vector.broadcast %c0_i32_72 : i32 to vector<1x256xi32>
    %264 = arith.cmpi ne, %262, %263 : vector<1x256xi32>
    %c0_i32_73 = arith.constant 0 : i32
    %265 = vector.broadcast %c0_i32_73 : i32 to vector<1x256xi32>
    %266 = arith.cmpi slt, %262, %265 : vector<1x256xi32>
    %c0_i32_74 = arith.constant 0 : i32
    %267 = arith.cmpi slt, %260, %c0_i32_74 : i32
    %268 = vector.broadcast %267 : i1 to vector<1x256xi1>
    %269 = vector.broadcast %268 : vector<1x256xi1> to vector<1x256xi1>
    %270 = arith.xori %266, %269 : vector<1x256xi1>
    %271 = arith.andi %270, %264 : vector<1x256xi1>
    %272 = vector.broadcast %260 : i32 to vector<1x256xi32>
    %273 = arith.addi %262, %272 : vector<1x256xi32>
    %274 = arith.select %271, %273, %262 : vector<1x256xi1>, vector<1x256xi32>
    %cst_75 = arith.constant 0.000000e+00 : f32
    %275 = vector.broadcast %cst_75 : f32 to vector<1x256xf32>
    %cst_76 = arith.constant 0.000000e+00 : f32
    %276 = vector.broadcast %cst_76 : f32 to vector<1x256xf32>
    %cst_77 = arith.constant 0.000000e+00 : f32
    %277 = vector.broadcast %cst_77 : f32 to vector<1x256xf32>
    %cst_78 = arith.constant 0.000000e+00 : f32
    %278 = vector.broadcast %cst_78 : f32 to vector<1x256xf32>
    %c0_79 = arith.constant 0 : index
    %c77_80 = arith.constant 77 : index
    %279 = vector.load %arg10[%c0_79, %c77_80] : memref<1x512xf32, #tpu.memory_space<vmem>>, vector<1x256xf32>
    %280 = vector.broadcast %160 : f32 to vector<1x256xf32>
    %281 = arith.mulf %280, %279 : vector<1x256xf32>
    %c0_81 = arith.constant 0 : index
    %c93_82 = arith.constant 93 : index
    %282 = vector.load %arg10[%c0_81, %c93_82] : memref<1x512xf32, #tpu.memory_space<vmem>>, vector<1x256xf32>
    %283 = vector.broadcast %167 : f32 to vector<1x256xf32>
    %284 = arith.mulf %283, %282 : vector<1x256xf32>
    %c0_83 = arith.constant 0 : index
    %c109 = arith.constant 109 : index
    %285 = vector.load %arg10[%c0_83, %c109] : memref<1x512xf32, #tpu.memory_space<vmem>>, vector<1x256xf32>
    %286 = vector.broadcast %174 : f32 to vector<1x256xf32>
    %287 = arith.mulf %286, %285 : vector<1x256xf32>
    %c0_84 = arith.constant 0 : index
    %c125 = arith.constant 125 : index
    %288 = vector.load %arg10[%c0_84, %c125] : memref<1x512xf32, #tpu.memory_space<vmem>>, vector<1x256xf32>
    %289 = vector.broadcast %181 : f32 to vector<1x256xf32>
    %290 = arith.mulf %289, %288 : vector<1x256xf32>
    %c0_85 = arith.constant 0 : index
    %c141 = arith.constant 141 : index
    %291 = vector.load %arg10[%c0_85, %c141] : memref<1x512xf32, #tpu.memory_space<vmem>>, vector<1x256xf32>
    %292 = vector.broadcast %188 : f32 to vector<1x256xf32>
    %293 = arith.mulf %292, %291 : vector<1x256xf32>
    %c0_86 = arith.constant 0 : index
    %c157 = arith.constant 157 : index
    %294 = vector.load %arg10[%c0_86, %c157] : memref<1x512xf32, #tpu.memory_space<vmem>>, vector<1x256xf32>
    %295 = vector.broadcast %195 : f32 to vector<1x256xf32>
    %296 = arith.mulf %295, %294 : vector<1x256xf32>
    %c0_87 = arith.constant 0 : index
    %c173 = arith.constant 173 : index
    %297 = vector.load %arg10[%c0_87, %c173] : memref<1x512xf32, #tpu.memory_space<vmem>>, vector<1x256xf32>
    %298 = vector.broadcast %202 : f32 to vector<1x256xf32>
    %299 = arith.mulf %298, %297 : vector<1x256xf32>
    %300 = arith.addf %281, %284 : vector<1x256xf32>
    %301 = arith.addf %287, %290 : vector<1x256xf32>
    %302 = arith.addf %293, %296 : vector<1x256xf32>
    %303 = arith.addf %300, %301 : vector<1x256xf32>
    %304 = arith.addf %302, %299 : vector<1x256xf32>
    %305 = arith.addf %303, %304 : vector<1x256xf32>
    %c0_88 = arith.constant 0 : index
    %c77_89 = arith.constant 77 : index
    %306 = vector.load %arg11[%c0_88, %c77_89] : memref<1x512xf32, #tpu.memory_space<vmem>>, vector<1x256xf32>
    %307 = vector.broadcast %209 : f32 to vector<1x256xf32>
    %308 = arith.mulf %307, %306 : vector<1x256xf32>
    %c0_90 = arith.constant 0 : index
    %c93_91 = arith.constant 93 : index
    %309 = vector.load %arg11[%c0_90, %c93_91] : memref<1x512xf32, #tpu.memory_space<vmem>>, vector<1x256xf32>
    %310 = vector.broadcast %216 : f32 to vector<1x256xf32>
    %311 = arith.mulf %310, %309 : vector<1x256xf32>
    %c0_92 = arith.constant 0 : index
    %c109_93 = arith.constant 109 : index
    %312 = vector.load %arg11[%c0_92, %c109_93] : memref<1x512xf32, #tpu.memory_space<vmem>>, vector<1x256xf32>
    %313 = vector.broadcast %223 : f32 to vector<1x256xf32>
    %314 = arith.mulf %313, %312 : vector<1x256xf32>
    %c0_94 = arith.constant 0 : index
    %c125_95 = arith.constant 125 : index
    %315 = vector.load %arg11[%c0_94, %c125_95] : memref<1x512xf32, #tpu.memory_space<vmem>>, vector<1x256xf32>
    %316 = vector.broadcast %230 : f32 to vector<1x256xf32>
    %317 = arith.mulf %316, %315 : vector<1x256xf32>
    %c0_96 = arith.constant 0 : index
    %c141_97 = arith.constant 141 : index
    %318 = vector.load %arg11[%c0_96, %c141_97] : memref<1x512xf32, #tpu.memory_space<vmem>>, vector<1x256xf32>
    %319 = vector.broadcast %237 : f32 to vector<1x256xf32>
    %320 = arith.mulf %319, %318 : vector<1x256xf32>
    %c0_98 = arith.constant 0 : index
    %c157_99 = arith.constant 157 : index
    %321 = vector.load %arg11[%c0_98, %c157_99] : memref<1x512xf32, #tpu.memory_space<vmem>>, vector<1x256xf32>
    %322 = vector.broadcast %244 : f32 to vector<1x256xf32>
    %323 = arith.mulf %322, %321 : vector<1x256xf32>
    %c0_100 = arith.constant 0 : index
    %c173_101 = arith.constant 173 : index
    %324 = vector.load %arg11[%c0_100, %c173_101] : memref<1x512xf32, #tpu.memory_space<vmem>>, vector<1x256xf32>
    %325 = vector.broadcast %251 : f32 to vector<1x256xf32>
    %326 = arith.mulf %325, %324 : vector<1x256xf32>
    %327 = arith.addf %308, %311 : vector<1x256xf32>
    %328 = arith.addf %314, %317 : vector<1x256xf32>
    %329 = arith.addf %320, %323 : vector<1x256xf32>
    %330 = arith.addf %327, %328 : vector<1x256xf32>
    %331 = arith.addf %329, %326 : vector<1x256xf32>
    %332 = arith.addf %330, %331 : vector<1x256xf32>
    %333 = arith.addf %305, %332 : vector<1x256xf32>
    %c-3_i32 = arith.constant -3 : i32
    %334 = vector.broadcast %c-3_i32 : i32 to vector<1x256xi32>
    %335 = arith.addi %274, %334 : vector<1x256xi32>
    %c0_i32_102 = arith.constant 0 : i32
    %336 = vector.broadcast %c0_i32_102 : i32 to vector<1x256xi32>
    %337 = arith.cmpi sge, %335, %336 : vector<1x256xi32>
    %c16_i32_103 = arith.constant 16 : i32
    %338 = vector.broadcast %c16_i32_103 : i32 to vector<1x256xi32>
    %339 = arith.cmpi slt, %335, %338 : vector<1x256xi32>
    %340 = arith.andi %337, %339 : vector<1x256xi1>
    %cst_104 = arith.constant 0.000000e+00 : f32
    %341 = vector.broadcast %cst_104 : f32 to vector<1x256xf32>
    %342 = arith.select %340, %333, %341 : vector<1x256xi1>, vector<1x256xf32>
    %343 = arith.addf %275, %342 : vector<1x256xf32>
    %c0_105 = arith.constant 0 : index
    %c78_106 = arith.constant 78 : index
    %344 = vector.load %arg10[%c0_105, %c78_106] : memref<1x512xf32, #tpu.memory_space<vmem>>, vector<1x256xf32>
    %345 = vector.broadcast %161 : f32 to vector<1x256xf32>
    %346 = arith.mulf %345, %344 : vector<1x256xf32>
    %c0_107 = arith.constant 0 : index
    %c94_108 = arith.constant 94 : index
    %347 = vector.load %arg10[%c0_107, %c94_108] : memref<1x512xf32, #tpu.memory_space<vmem>>, vector<1x256xf32>
    %348 = vector.broadcast %168 : f32 to vector<1x256xf32>
    %349 = arith.mulf %348, %347 : vector<1x256xf32>
    %c0_109 = arith.constant 0 : index
    %c110 = arith.constant 110 : index
    %350 = vector.load %arg10[%c0_109, %c110] : memref<1x512xf32, #tpu.memory_space<vmem>>, vector<1x256xf32>
    %351 = vector.broadcast %175 : f32 to vector<1x256xf32>
    %352 = arith.mulf %351, %350 : vector<1x256xf32>
    %c0_110 = arith.constant 0 : index
    %c126 = arith.constant 126 : index
    %353 = vector.load %arg10[%c0_110, %c126] : memref<1x512xf32, #tpu.memory_space<vmem>>, vector<1x256xf32>
    %354 = vector.broadcast %182 : f32 to vector<1x256xf32>
    %355 = arith.mulf %354, %353 : vector<1x256xf32>
    %c0_111 = arith.constant 0 : index
    %c142 = arith.constant 142 : index
    %356 = vector.load %arg10[%c0_111, %c142] : memref<1x512xf32, #tpu.memory_space<vmem>>, vector<1x256xf32>
    %357 = vector.broadcast %189 : f32 to vector<1x256xf32>
    %358 = arith.mulf %357, %356 : vector<1x256xf32>
    %c0_112 = arith.constant 0 : index
    %c158 = arith.constant 158 : index
    %359 = vector.load %arg10[%c0_112, %c158] : memref<1x512xf32, #tpu.memory_space<vmem>>, vector<1x256xf32>
    %360 = vector.broadcast %196 : f32 to vector<1x256xf32>
    %361 = arith.mulf %360, %359 : vector<1x256xf32>
    %c0_113 = arith.constant 0 : index
    %c174 = arith.constant 174 : index
    %362 = vector.load %arg10[%c0_113, %c174] : memref<1x512xf32, #tpu.memory_space<vmem>>, vector<1x256xf32>
    %363 = vector.broadcast %203 : f32 to vector<1x256xf32>
    %364 = arith.mulf %363, %362 : vector<1x256xf32>
    %365 = arith.addf %346, %349 : vector<1x256xf32>
    %366 = arith.addf %352, %355 : vector<1x256xf32>
    %367 = arith.addf %358, %361 : vector<1x256xf32>
    %368 = arith.addf %365, %366 : vector<1x256xf32>
    %369 = arith.addf %367, %364 : vector<1x256xf32>
    %370 = arith.addf %368, %369 : vector<1x256xf32>
    %c0_114 = arith.constant 0 : index
    %c78_115 = arith.constant 78 : index
    %371 = vector.load %arg11[%c0_114, %c78_115] : memref<1x512xf32, #tpu.memory_space<vmem>>, vector<1x256xf32>
    %372 = vector.broadcast %210 : f32 to vector<1x256xf32>
    %373 = arith.mulf %372, %371 : vector<1x256xf32>
    %c0_116 = arith.constant 0 : index
    %c94_117 = arith.constant 94 : index
    %374 = vector.load %arg11[%c0_116, %c94_117] : memref<1x512xf32, #tpu.memory_space<vmem>>, vector<1x256xf32>
    %375 = vector.broadcast %217 : f32 to vector<1x256xf32>
    %376 = arith.mulf %375, %374 : vector<1x256xf32>
    %c0_118 = arith.constant 0 : index
    %c110_119 = arith.constant 110 : index
    %377 = vector.load %arg11[%c0_118, %c110_119] : memref<1x512xf32, #tpu.memory_space<vmem>>, vector<1x256xf32>
    %378 = vector.broadcast %224 : f32 to vector<1x256xf32>
    %379 = arith.mulf %378, %377 : vector<1x256xf32>
    %c0_120 = arith.constant 0 : index
    %c126_121 = arith.constant 126 : index
    %380 = vector.load %arg11[%c0_120, %c126_121] : memref<1x512xf32, #tpu.memory_space<vmem>>, vector<1x256xf32>
    %381 = vector.broadcast %231 : f32 to vector<1x256xf32>
    %382 = arith.mulf %381, %380 : vector<1x256xf32>
    %c0_122 = arith.constant 0 : index
    %c142_123 = arith.constant 142 : index
    %383 = vector.load %arg11[%c0_122, %c142_123] : memref<1x512xf32, #tpu.memory_space<vmem>>, vector<1x256xf32>
    %384 = vector.broadcast %238 : f32 to vector<1x256xf32>
    %385 = arith.mulf %384, %383 : vector<1x256xf32>
    %c0_124 = arith.constant 0 : index
    %c158_125 = arith.constant 158 : index
    %386 = vector.load %arg11[%c0_124, %c158_125] : memref<1x512xf32, #tpu.memory_space<vmem>>, vector<1x256xf32>
    %387 = vector.broadcast %245 : f32 to vector<1x256xf32>
    %388 = arith.mulf %387, %386 : vector<1x256xf32>
    %c0_126 = arith.constant 0 : index
    %c174_127 = arith.constant 174 : index
    %389 = vector.load %arg11[%c0_126, %c174_127] : memref<1x512xf32, #tpu.memory_space<vmem>>, vector<1x256xf32>
    %390 = vector.broadcast %252 : f32 to vector<1x256xf32>
    %391 = arith.mulf %390, %389 : vector<1x256xf32>
    %392 = arith.addf %373, %376 : vector<1x256xf32>
    %393 = arith.addf %379, %382 : vector<1x256xf32>
    %394 = arith.addf %385, %388 : vector<1x256xf32>
    %395 = arith.addf %392, %393 : vector<1x256xf32>
    %396 = arith.addf %394, %391 : vector<1x256xf32>
    %397 = arith.addf %395, %396 : vector<1x256xf32>
    %398 = arith.addf %370, %397 : vector<1x256xf32>
    %c-2_i32 = arith.constant -2 : i32
    %399 = vector.broadcast %c-2_i32 : i32 to vector<1x256xi32>
    %400 = arith.addi %274, %399 : vector<1x256xi32>
    %c0_i32_128 = arith.constant 0 : i32
    %401 = vector.broadcast %c0_i32_128 : i32 to vector<1x256xi32>
    %402 = arith.cmpi sge, %400, %401 : vector<1x256xi32>
    %c16_i32_129 = arith.constant 16 : i32
    %403 = vector.broadcast %c16_i32_129 : i32 to vector<1x256xi32>
    %404 = arith.cmpi slt, %400, %403 : vector<1x256xi32>
    %405 = arith.andi %402, %404 : vector<1x256xi1>
    %cst_130 = arith.constant 0.000000e+00 : f32
    %406 = vector.broadcast %cst_130 : f32 to vector<1x256xf32>
    %407 = arith.select %405, %398, %406 : vector<1x256xi1>, vector<1x256xf32>
    %408 = arith.addf %276, %407 : vector<1x256xf32>
    %c0_131 = arith.constant 0 : index
    %c79_132 = arith.constant 79 : index
    %409 = vector.load %arg10[%c0_131, %c79_132] : memref<1x512xf32, #tpu.memory_space<vmem>>, vector<1x256xf32>
    %410 = vector.broadcast %162 : f32 to vector<1x256xf32>
    %411 = arith.mulf %410, %409 : vector<1x256xf32>
    %c0_133 = arith.constant 0 : index
    %c95_134 = arith.constant 95 : index
    %412 = vector.load %arg10[%c0_133, %c95_134] : memref<1x512xf32, #tpu.memory_space<vmem>>, vector<1x256xf32>
    %413 = vector.broadcast %169 : f32 to vector<1x256xf32>
    %414 = arith.mulf %413, %412 : vector<1x256xf32>
    %c0_135 = arith.constant 0 : index
    %c111 = arith.constant 111 : index
    %415 = vector.load %arg10[%c0_135, %c111] : memref<1x512xf32, #tpu.memory_space<vmem>>, vector<1x256xf32>
    %416 = vector.broadcast %176 : f32 to vector<1x256xf32>
    %417 = arith.mulf %416, %415 : vector<1x256xf32>
    %c0_136 = arith.constant 0 : index
    %c127 = arith.constant 127 : index
    %418 = vector.load %arg10[%c0_136, %c127] : memref<1x512xf32, #tpu.memory_space<vmem>>, vector<1x256xf32>
    %419 = vector.broadcast %183 : f32 to vector<1x256xf32>
    %420 = arith.mulf %419, %418 : vector<1x256xf32>
    %c0_137 = arith.constant 0 : index
    %c143 = arith.constant 143 : index
    %421 = vector.load %arg10[%c0_137, %c143] : memref<1x512xf32, #tpu.memory_space<vmem>>, vector<1x256xf32>
    %422 = vector.broadcast %190 : f32 to vector<1x256xf32>
    %423 = arith.mulf %422, %421 : vector<1x256xf32>
    %c0_138 = arith.constant 0 : index
    %c159 = arith.constant 159 : index
    %424 = vector.load %arg10[%c0_138, %c159] : memref<1x512xf32, #tpu.memory_space<vmem>>, vector<1x256xf32>
    %425 = vector.broadcast %197 : f32 to vector<1x256xf32>
    %426 = arith.mulf %425, %424 : vector<1x256xf32>
    %c0_139 = arith.constant 0 : index
    %c175 = arith.constant 175 : index
    %427 = vector.load %arg10[%c0_139, %c175] : memref<1x512xf32, #tpu.memory_space<vmem>>, vector<1x256xf32>
    %428 = vector.broadcast %204 : f32 to vector<1x256xf32>
    %429 = arith.mulf %428, %427 : vector<1x256xf32>
    %430 = arith.addf %411, %414 : vector<1x256xf32>
    %431 = arith.addf %417, %420 : vector<1x256xf32>
    %432 = arith.addf %423, %426 : vector<1x256xf32>
    %433 = arith.addf %430, %431 : vector<1x256xf32>
    %434 = arith.addf %432, %429 : vector<1x256xf32>
    %435 = arith.addf %433, %434 : vector<1x256xf32>
    %c0_140 = arith.constant 0 : index
    %c79_141 = arith.constant 79 : index
    %436 = vector.load %arg11[%c0_140, %c79_141] : memref<1x512xf32, #tpu.memory_space<vmem>>, vector<1x256xf32>
    %437 = vector.broadcast %211 : f32 to vector<1x256xf32>
    %438 = arith.mulf %437, %436 : vector<1x256xf32>
    %c0_142 = arith.constant 0 : index
    %c95_143 = arith.constant 95 : index
    %439 = vector.load %arg11[%c0_142, %c95_143] : memref<1x512xf32, #tpu.memory_space<vmem>>, vector<1x256xf32>
    %440 = vector.broadcast %218 : f32 to vector<1x256xf32>
    %441 = arith.mulf %440, %439 : vector<1x256xf32>
    %c0_144 = arith.constant 0 : index
    %c111_145 = arith.constant 111 : index
    %442 = vector.load %arg11[%c0_144, %c111_145] : memref<1x512xf32, #tpu.memory_space<vmem>>, vector<1x256xf32>
    %443 = vector.broadcast %225 : f32 to vector<1x256xf32>
    %444 = arith.mulf %443, %442 : vector<1x256xf32>
    %c0_146 = arith.constant 0 : index
    %c127_147 = arith.constant 127 : index
    %445 = vector.load %arg11[%c0_146, %c127_147] : memref<1x512xf32, #tpu.memory_space<vmem>>, vector<1x256xf32>
    %446 = vector.broadcast %232 : f32 to vector<1x256xf32>
    %447 = arith.mulf %446, %445 : vector<1x256xf32>
    %c0_148 = arith.constant 0 : index
    %c143_149 = arith.constant 143 : index
    %448 = vector.load %arg11[%c0_148, %c143_149] : memref<1x512xf32, #tpu.memory_space<vmem>>, vector<1x256xf32>
    %449 = vector.broadcast %239 : f32 to vector<1x256xf32>
    %450 = arith.mulf %449, %448 : vector<1x256xf32>
    %c0_150 = arith.constant 0 : index
    %c159_151 = arith.constant 159 : index
    %451 = vector.load %arg11[%c0_150, %c159_151] : memref<1x512xf32, #tpu.memory_space<vmem>>, vector<1x256xf32>
    %452 = vector.broadcast %246 : f32 to vector<1x256xf32>
    %453 = arith.mulf %452, %451 : vector<1x256xf32>
    %c0_152 = arith.constant 0 : index
    %c175_153 = arith.constant 175 : index
    %454 = vector.load %arg11[%c0_152, %c175_153] : memref<1x512xf32, #tpu.memory_space<vmem>>, vector<1x256xf32>
    %455 = vector.broadcast %253 : f32 to vector<1x256xf32>
    %456 = arith.mulf %455, %454 : vector<1x256xf32>
    %457 = arith.addf %438, %441 : vector<1x256xf32>
    %458 = arith.addf %444, %447 : vector<1x256xf32>
    %459 = arith.addf %450, %453 : vector<1x256xf32>
    %460 = arith.addf %457, %458 : vector<1x256xf32>
    %461 = arith.addf %459, %456 : vector<1x256xf32>
    %462 = arith.addf %460, %461 : vector<1x256xf32>
    %463 = arith.addf %435, %462 : vector<1x256xf32>
    %c-1_i32 = arith.constant -1 : i32
    %464 = vector.broadcast %c-1_i32 : i32 to vector<1x256xi32>
    %465 = arith.addi %274, %464 : vector<1x256xi32>
    %c0_i32_154 = arith.constant 0 : i32
    %466 = vector.broadcast %c0_i32_154 : i32 to vector<1x256xi32>
    %467 = arith.cmpi sge, %465, %466 : vector<1x256xi32>
    %c16_i32_155 = arith.constant 16 : i32
    %468 = vector.broadcast %c16_i32_155 : i32 to vector<1x256xi32>
    %469 = arith.cmpi slt, %465, %468 : vector<1x256xi32>
    %470 = arith.andi %467, %469 : vector<1x256xi1>
    %cst_156 = arith.constant 0.000000e+00 : f32
    %471 = vector.broadcast %cst_156 : f32 to vector<1x256xf32>
    %472 = arith.select %470, %463, %471 : vector<1x256xi1>, vector<1x256xf32>
    %473 = arith.addf %277, %472 : vector<1x256xf32>
    %c0_157 = arith.constant 0 : index
    %c80_158 = arith.constant 80 : index
    %474 = vector.load %arg10[%c0_157, %c80_158] : memref<1x512xf32, #tpu.memory_space<vmem>>, vector<1x256xf32>
    %475 = vector.broadcast %163 : f32 to vector<1x256xf32>
    %476 = arith.mulf %475, %474 : vector<1x256xf32>
    %c0_159 = arith.constant 0 : index
    %c96_160 = arith.constant 96 : index
    %477 = vector.load %arg10[%c0_159, %c96_160] : memref<1x512xf32, #tpu.memory_space<vmem>>, vector<1x256xf32>
    %478 = vector.broadcast %170 : f32 to vector<1x256xf32>
    %479 = arith.mulf %478, %477 : vector<1x256xf32>
    %c0_161 = arith.constant 0 : index
    %c112 = arith.constant 112 : index
    %480 = vector.load %arg10[%c0_161, %c112] : memref<1x512xf32, #tpu.memory_space<vmem>>, vector<1x256xf32>
    %481 = vector.broadcast %177 : f32 to vector<1x256xf32>
    %482 = arith.mulf %481, %480 : vector<1x256xf32>
    %c0_162 = arith.constant 0 : index
    %c128_163 = arith.constant 128 : index
    %483 = vector.load %arg10[%c0_162, %c128_163] : memref<1x512xf32, #tpu.memory_space<vmem>>, vector<1x256xf32>
    %484 = vector.broadcast %184 : f32 to vector<1x256xf32>
    %485 = arith.mulf %484, %483 : vector<1x256xf32>
    %c0_164 = arith.constant 0 : index
    %c144 = arith.constant 144 : index
    %486 = vector.load %arg10[%c0_164, %c144] : memref<1x512xf32, #tpu.memory_space<vmem>>, vector<1x256xf32>
    %487 = vector.broadcast %191 : f32 to vector<1x256xf32>
    %488 = arith.mulf %487, %486 : vector<1x256xf32>
    %c0_165 = arith.constant 0 : index
    %c160 = arith.constant 160 : index
    %489 = vector.load %arg10[%c0_165, %c160] : memref<1x512xf32, #tpu.memory_space<vmem>>, vector<1x256xf32>
    %490 = vector.broadcast %198 : f32 to vector<1x256xf32>
    %491 = arith.mulf %490, %489 : vector<1x256xf32>
    %c0_166 = arith.constant 0 : index
    %c176 = arith.constant 176 : index
    %492 = vector.load %arg10[%c0_166, %c176] : memref<1x512xf32, #tpu.memory_space<vmem>>, vector<1x256xf32>
    %493 = vector.broadcast %205 : f32 to vector<1x256xf32>
    %494 = arith.mulf %493, %492 : vector<1x256xf32>
    %495 = arith.addf %476, %479 : vector<1x256xf32>
    %496 = arith.addf %482, %485 : vector<1x256xf32>
    %497 = arith.addf %488, %491 : vector<1x256xf32>
    %498 = arith.addf %495, %496 : vector<1x256xf32>
    %499 = arith.addf %497, %494 : vector<1x256xf32>
    %500 = arith.addf %498, %499 : vector<1x256xf32>
    %c0_167 = arith.constant 0 : index
    %c80_168 = arith.constant 80 : index
    %501 = vector.load %arg11[%c0_167, %c80_168] : memref<1x512xf32, #tpu.memory_space<vmem>>, vector<1x256xf32>
    %502 = vector.broadcast %212 : f32 to vector<1x256xf32>
    %503 = arith.mulf %502, %501 : vector<1x256xf32>
    %c0_169 = arith.constant 0 : index
    %c96_170 = arith.constant 96 : index
    %504 = vector.load %arg11[%c0_169, %c96_170] : memref<1x512xf32, #tpu.memory_space<vmem>>, vector<1x256xf32>
    %505 = vector.broadcast %219 : f32 to vector<1x256xf32>
    %506 = arith.mulf %505, %504 : vector<1x256xf32>
    %c0_171 = arith.constant 0 : index
    %c112_172 = arith.constant 112 : index
    %507 = vector.load %arg11[%c0_171, %c112_172] : memref<1x512xf32, #tpu.memory_space<vmem>>, vector<1x256xf32>
    %508 = vector.broadcast %226 : f32 to vector<1x256xf32>
    %509 = arith.mulf %508, %507 : vector<1x256xf32>
    %c0_173 = arith.constant 0 : index
    %c128_174 = arith.constant 128 : index
    %510 = vector.load %arg11[%c0_173, %c128_174] : memref<1x512xf32, #tpu.memory_space<vmem>>, vector<1x256xf32>
    %511 = vector.broadcast %233 : f32 to vector<1x256xf32>
    %512 = arith.mulf %511, %510 : vector<1x256xf32>
    %c0_175 = arith.constant 0 : index
    %c144_176 = arith.constant 144 : index
    %513 = vector.load %arg11[%c0_175, %c144_176] : memref<1x512xf32, #tpu.memory_space<vmem>>, vector<1x256xf32>
    %514 = vector.broadcast %240 : f32 to vector<1x256xf32>
    %515 = arith.mulf %514, %513 : vector<1x256xf32>
    %c0_177 = arith.constant 0 : index
    %c160_178 = arith.constant 160 : index
    %516 = vector.load %arg11[%c0_177, %c160_178] : memref<1x512xf32, #tpu.memory_space<vmem>>, vector<1x256xf32>
    %517 = vector.broadcast %247 : f32 to vector<1x256xf32>
    %518 = arith.mulf %517, %516 : vector<1x256xf32>
    %c0_179 = arith.constant 0 : index
    %c176_180 = arith.constant 176 : index
    %519 = vector.load %arg11[%c0_179, %c176_180] : memref<1x512xf32, #tpu.memory_space<vmem>>, vector<1x256xf32>
    %520 = vector.broadcast %254 : f32 to vector<1x256xf32>
    %521 = arith.mulf %520, %519 : vector<1x256xf32>
    %522 = arith.addf %503, %506 : vector<1x256xf32>
    %523 = arith.addf %509, %512 : vector<1x256xf32>
    %524 = arith.addf %515, %518 : vector<1x256xf32>
    %525 = arith.addf %522, %523 : vector<1x256xf32>
    %526 = arith.addf %524, %521 : vector<1x256xf32>
    %527 = arith.addf %525, %526 : vector<1x256xf32>
    %528 = arith.addf %500, %527 : vector<1x256xf32>
    %529 = arith.addf %278, %528 : vector<1x256xf32>
    %c0_181 = arith.constant 0 : index
    %c81_182 = arith.constant 81 : index
    %530 = vector.load %arg10[%c0_181, %c81_182] : memref<1x512xf32, #tpu.memory_space<vmem>>, vector<1x256xf32>
    %531 = vector.broadcast %164 : f32 to vector<1x256xf32>
    %532 = arith.mulf %531, %530 : vector<1x256xf32>
    %c0_183 = arith.constant 0 : index
    %c97_184 = arith.constant 97 : index
    %533 = vector.load %arg10[%c0_183, %c97_184] : memref<1x512xf32, #tpu.memory_space<vmem>>, vector<1x256xf32>
    %534 = vector.broadcast %171 : f32 to vector<1x256xf32>
    %535 = arith.mulf %534, %533 : vector<1x256xf32>
    %c0_185 = arith.constant 0 : index
    %c113 = arith.constant 113 : index
    %536 = vector.load %arg10[%c0_185, %c113] : memref<1x512xf32, #tpu.memory_space<vmem>>, vector<1x256xf32>
    %537 = vector.broadcast %178 : f32 to vector<1x256xf32>
    %538 = arith.mulf %537, %536 : vector<1x256xf32>
    %c0_186 = arith.constant 0 : index
    %c129 = arith.constant 129 : index
    %539 = vector.load %arg10[%c0_186, %c129] : memref<1x512xf32, #tpu.memory_space<vmem>>, vector<1x256xf32>
    %540 = vector.broadcast %185 : f32 to vector<1x256xf32>
    %541 = arith.mulf %540, %539 : vector<1x256xf32>
    %c0_187 = arith.constant 0 : index
    %c145 = arith.constant 145 : index
    %542 = vector.load %arg10[%c0_187, %c145] : memref<1x512xf32, #tpu.memory_space<vmem>>, vector<1x256xf32>
    %543 = vector.broadcast %192 : f32 to vector<1x256xf32>
    %544 = arith.mulf %543, %542 : vector<1x256xf32>
    %c0_188 = arith.constant 0 : index
    %c161 = arith.constant 161 : index
    %545 = vector.load %arg10[%c0_188, %c161] : memref<1x512xf32, #tpu.memory_space<vmem>>, vector<1x256xf32>
    %546 = vector.broadcast %199 : f32 to vector<1x256xf32>
    %547 = arith.mulf %546, %545 : vector<1x256xf32>
    %c0_189 = arith.constant 0 : index
    %c177 = arith.constant 177 : index
    %548 = vector.load %arg10[%c0_189, %c177] : memref<1x512xf32, #tpu.memory_space<vmem>>, vector<1x256xf32>
    %549 = vector.broadcast %206 : f32 to vector<1x256xf32>
    %550 = arith.mulf %549, %548 : vector<1x256xf32>
    %551 = arith.addf %532, %535 : vector<1x256xf32>
    %552 = arith.addf %538, %541 : vector<1x256xf32>
    %553 = arith.addf %544, %547 : vector<1x256xf32>
    %554 = arith.addf %551, %552 : vector<1x256xf32>
    %555 = arith.addf %553, %550 : vector<1x256xf32>
    %556 = arith.addf %554, %555 : vector<1x256xf32>
    %c0_190 = arith.constant 0 : index
    %c81_191 = arith.constant 81 : index
    %557 = vector.load %arg11[%c0_190, %c81_191] : memref<1x512xf32, #tpu.memory_space<vmem>>, vector<1x256xf32>
    %558 = vector.broadcast %213 : f32 to vector<1x256xf32>
    %559 = arith.mulf %558, %557 : vector<1x256xf32>
    %c0_192 = arith.constant 0 : index
    %c97_193 = arith.constant 97 : index
    %560 = vector.load %arg11[%c0_192, %c97_193] : memref<1x512xf32, #tpu.memory_space<vmem>>, vector<1x256xf32>
    %561 = vector.broadcast %220 : f32 to vector<1x256xf32>
    %562 = arith.mulf %561, %560 : vector<1x256xf32>
    %c0_194 = arith.constant 0 : index
    %c113_195 = arith.constant 113 : index
    %563 = vector.load %arg11[%c0_194, %c113_195] : memref<1x512xf32, #tpu.memory_space<vmem>>, vector<1x256xf32>
    %564 = vector.broadcast %227 : f32 to vector<1x256xf32>
    %565 = arith.mulf %564, %563 : vector<1x256xf32>
    %c0_196 = arith.constant 0 : index
    %c129_197 = arith.constant 129 : index
    %566 = vector.load %arg11[%c0_196, %c129_197] : memref<1x512xf32, #tpu.memory_space<vmem>>, vector<1x256xf32>
    %567 = vector.broadcast %234 : f32 to vector<1x256xf32>
    %568 = arith.mulf %567, %566 : vector<1x256xf32>
    %c0_198 = arith.constant 0 : index
    %c145_199 = arith.constant 145 : index
    %569 = vector.load %arg11[%c0_198, %c145_199] : memref<1x512xf32, #tpu.memory_space<vmem>>, vector<1x256xf32>
    %570 = vector.broadcast %241 : f32 to vector<1x256xf32>
    %571 = arith.mulf %570, %569 : vector<1x256xf32>
    %c0_200 = arith.constant 0 : index
    %c161_201 = arith.constant 161 : index
    %572 = vector.load %arg11[%c0_200, %c161_201] : memref<1x512xf32, #tpu.memory_space<vmem>>, vector<1x256xf32>
    %573 = vector.broadcast %248 : f32 to vector<1x256xf32>
    %574 = arith.mulf %573, %572 : vector<1x256xf32>
    %c0_202 = arith.constant 0 : index
    %c177_203 = arith.constant 177 : index
    %575 = vector.load %arg11[%c0_202, %c177_203] : memref<1x512xf32, #tpu.memory_space<vmem>>, vector<1x256xf32>
    %576 = vector.broadcast %255 : f32 to vector<1x256xf32>
    %577 = arith.mulf %576, %575 : vector<1x256xf32>
    %578 = arith.addf %559, %562 : vector<1x256xf32>
    %579 = arith.addf %565, %568 : vector<1x256xf32>
    %580 = arith.addf %571, %574 : vector<1x256xf32>
    %581 = arith.addf %578, %579 : vector<1x256xf32>
    %582 = arith.addf %580, %577 : vector<1x256xf32>
    %583 = arith.addf %581, %582 : vector<1x256xf32>
    %584 = arith.addf %556, %583 : vector<1x256xf32>
    %c1_i32_204 = arith.constant 1 : i32
    %585 = vector.broadcast %c1_i32_204 : i32 to vector<1x256xi32>
    %586 = arith.addi %274, %585 : vector<1x256xi32>
    %c0_i32_205 = arith.constant 0 : i32
    %587 = vector.broadcast %c0_i32_205 : i32 to vector<1x256xi32>
    %588 = arith.cmpi sge, %586, %587 : vector<1x256xi32>
    %c16_i32_206 = arith.constant 16 : i32
    %589 = vector.broadcast %c16_i32_206 : i32 to vector<1x256xi32>
    %590 = arith.cmpi slt, %586, %589 : vector<1x256xi32>
    %591 = arith.andi %588, %590 : vector<1x256xi1>
    %cst_207 = arith.constant 0.000000e+00 : f32
    %592 = vector.broadcast %cst_207 : f32 to vector<1x256xf32>
    %593 = arith.select %591, %584, %592 : vector<1x256xi1>, vector<1x256xf32>
    %594 = arith.addf %343, %593 : vector<1x256xf32>
    %c0_208 = arith.constant 0 : index
    %c82_209 = arith.constant 82 : index
    %595 = vector.load %arg10[%c0_208, %c82_209] : memref<1x512xf32, #tpu.memory_space<vmem>>, vector<1x256xf32>
    %596 = vector.broadcast %165 : f32 to vector<1x256xf32>
    %597 = arith.mulf %596, %595 : vector<1x256xf32>
    %c0_210 = arith.constant 0 : index
    %c98 = arith.constant 98 : index
    %598 = vector.load %arg10[%c0_210, %c98] : memref<1x512xf32, #tpu.memory_space<vmem>>, vector<1x256xf32>
    %599 = vector.broadcast %172 : f32 to vector<1x256xf32>
    %600 = arith.mulf %599, %598 : vector<1x256xf32>
    %c0_211 = arith.constant 0 : index
    %c114 = arith.constant 114 : index
    %601 = vector.load %arg10[%c0_211, %c114] : memref<1x512xf32, #tpu.memory_space<vmem>>, vector<1x256xf32>
    %602 = vector.broadcast %179 : f32 to vector<1x256xf32>
    %603 = arith.mulf %602, %601 : vector<1x256xf32>
    %c0_212 = arith.constant 0 : index
    %c130 = arith.constant 130 : index
    %604 = vector.load %arg10[%c0_212, %c130] : memref<1x512xf32, #tpu.memory_space<vmem>>, vector<1x256xf32>
    %605 = vector.broadcast %186 : f32 to vector<1x256xf32>
    %606 = arith.mulf %605, %604 : vector<1x256xf32>
    %c0_213 = arith.constant 0 : index
    %c146 = arith.constant 146 : index
    %607 = vector.load %arg10[%c0_213, %c146] : memref<1x512xf32, #tpu.memory_space<vmem>>, vector<1x256xf32>
    %608 = vector.broadcast %193 : f32 to vector<1x256xf32>
    %609 = arith.mulf %608, %607 : vector<1x256xf32>
    %c0_214 = arith.constant 0 : index
    %c162 = arith.constant 162 : index
    %610 = vector.load %arg10[%c0_214, %c162] : memref<1x512xf32, #tpu.memory_space<vmem>>, vector<1x256xf32>
    %611 = vector.broadcast %200 : f32 to vector<1x256xf32>
    %612 = arith.mulf %611, %610 : vector<1x256xf32>
    %c0_215 = arith.constant 0 : index
    %c178 = arith.constant 178 : index
    %613 = vector.load %arg10[%c0_215, %c178] : memref<1x512xf32, #tpu.memory_space<vmem>>, vector<1x256xf32>
    %614 = vector.broadcast %207 : f32 to vector<1x256xf32>
    %615 = arith.mulf %614, %613 : vector<1x256xf32>
    %616 = arith.addf %597, %600 : vector<1x256xf32>
    %617 = arith.addf %603, %606 : vector<1x256xf32>
    %618 = arith.addf %609, %612 : vector<1x256xf32>
    %619 = arith.addf %616, %617 : vector<1x256xf32>
    %620 = arith.addf %618, %615 : vector<1x256xf32>
    %621 = arith.addf %619, %620 : vector<1x256xf32>
    %c0_216 = arith.constant 0 : index
    %c82_217 = arith.constant 82 : index
    %622 = vector.load %arg11[%c0_216, %c82_217] : memref<1x512xf32, #tpu.memory_space<vmem>>, vector<1x256xf32>
    %623 = vector.broadcast %214 : f32 to vector<1x256xf32>
    %624 = arith.mulf %623, %622 : vector<1x256xf32>
    %c0_218 = arith.constant 0 : index
    %c98_219 = arith.constant 98 : index
    %625 = vector.load %arg11[%c0_218, %c98_219] : memref<1x512xf32, #tpu.memory_space<vmem>>, vector<1x256xf32>
    %626 = vector.broadcast %221 : f32 to vector<1x256xf32>
    %627 = arith.mulf %626, %625 : vector<1x256xf32>
    %c0_220 = arith.constant 0 : index
    %c114_221 = arith.constant 114 : index
    %628 = vector.load %arg11[%c0_220, %c114_221] : memref<1x512xf32, #tpu.memory_space<vmem>>, vector<1x256xf32>
    %629 = vector.broadcast %228 : f32 to vector<1x256xf32>
    %630 = arith.mulf %629, %628 : vector<1x256xf32>
    %c0_222 = arith.constant 0 : index
    %c130_223 = arith.constant 130 : index
    %631 = vector.load %arg11[%c0_222, %c130_223] : memref<1x512xf32, #tpu.memory_space<vmem>>, vector<1x256xf32>
    %632 = vector.broadcast %235 : f32 to vector<1x256xf32>
    %633 = arith.mulf %632, %631 : vector<1x256xf32>
    %c0_224 = arith.constant 0 : index
    %c146_225 = arith.constant 146 : index
    %634 = vector.load %arg11[%c0_224, %c146_225] : memref<1x512xf32, #tpu.memory_space<vmem>>, vector<1x256xf32>
    %635 = vector.broadcast %242 : f32 to vector<1x256xf32>
    %636 = arith.mulf %635, %634 : vector<1x256xf32>
    %c0_226 = arith.constant 0 : index
    %c162_227 = arith.constant 162 : index
    %637 = vector.load %arg11[%c0_226, %c162_227] : memref<1x512xf32, #tpu.memory_space<vmem>>, vector<1x256xf32>
    %638 = vector.broadcast %249 : f32 to vector<1x256xf32>
    %639 = arith.mulf %638, %637 : vector<1x256xf32>
    %c0_228 = arith.constant 0 : index
    %c178_229 = arith.constant 178 : index
    %640 = vector.load %arg11[%c0_228, %c178_229] : memref<1x512xf32, #tpu.memory_space<vmem>>, vector<1x256xf32>
    %641 = vector.broadcast %256 : f32 to vector<1x256xf32>
    %642 = arith.mulf %641, %640 : vector<1x256xf32>
    %643 = arith.addf %624, %627 : vector<1x256xf32>
    %644 = arith.addf %630, %633 : vector<1x256xf32>
    %645 = arith.addf %636, %639 : vector<1x256xf32>
    %646 = arith.addf %643, %644 : vector<1x256xf32>
    %647 = arith.addf %645, %642 : vector<1x256xf32>
    %648 = arith.addf %646, %647 : vector<1x256xf32>
    %649 = arith.addf %621, %648 : vector<1x256xf32>
    %c2_i32 = arith.constant 2 : i32
    %650 = vector.broadcast %c2_i32 : i32 to vector<1x256xi32>
    %651 = arith.addi %274, %650 : vector<1x256xi32>
    %c0_i32_230 = arith.constant 0 : i32
    %652 = vector.broadcast %c0_i32_230 : i32 to vector<1x256xi32>
    %653 = arith.cmpi sge, %651, %652 : vector<1x256xi32>
    %c16_i32_231 = arith.constant 16 : i32
    %654 = vector.broadcast %c16_i32_231 : i32 to vector<1x256xi32>
    %655 = arith.cmpi slt, %651, %654 : vector<1x256xi32>
    %656 = arith.andi %653, %655 : vector<1x256xi1>
    %cst_232 = arith.constant 0.000000e+00 : f32
    %657 = vector.broadcast %cst_232 : f32 to vector<1x256xf32>
    %658 = arith.select %656, %649, %657 : vector<1x256xi1>, vector<1x256xf32>
    %659 = arith.addf %408, %658 : vector<1x256xf32>
    %c0_233 = arith.constant 0 : index
    %c83_234 = arith.constant 83 : index
    %660 = vector.load %arg10[%c0_233, %c83_234] : memref<1x512xf32, #tpu.memory_space<vmem>>, vector<1x256xf32>
    %661 = vector.broadcast %166 : f32 to vector<1x256xf32>
    %662 = arith.mulf %661, %660 : vector<1x256xf32>
    %c0_235 = arith.constant 0 : index
    %c99 = arith.constant 99 : index
    %663 = vector.load %arg10[%c0_235, %c99] : memref<1x512xf32, #tpu.memory_space<vmem>>, vector<1x256xf32>
    %664 = vector.broadcast %173 : f32 to vector<1x256xf32>
    %665 = arith.mulf %664, %663 : vector<1x256xf32>
    %c0_236 = arith.constant 0 : index
    %c115 = arith.constant 115 : index
    %666 = vector.load %arg10[%c0_236, %c115] : memref<1x512xf32, #tpu.memory_space<vmem>>, vector<1x256xf32>
    %667 = vector.broadcast %180 : f32 to vector<1x256xf32>
    %668 = arith.mulf %667, %666 : vector<1x256xf32>
    %c0_237 = arith.constant 0 : index
    %c131 = arith.constant 131 : index
    %669 = vector.load %arg10[%c0_237, %c131] : memref<1x512xf32, #tpu.memory_space<vmem>>, vector<1x256xf32>
    %670 = vector.broadcast %187 : f32 to vector<1x256xf32>
    %671 = arith.mulf %670, %669 : vector<1x256xf32>
    %c0_238 = arith.constant 0 : index
    %c147 = arith.constant 147 : index
    %672 = vector.load %arg10[%c0_238, %c147] : memref<1x512xf32, #tpu.memory_space<vmem>>, vector<1x256xf32>
    %673 = vector.broadcast %194 : f32 to vector<1x256xf32>
    %674 = arith.mulf %673, %672 : vector<1x256xf32>
    %c0_239 = arith.constant 0 : index
    %c163 = arith.constant 163 : index
    %675 = vector.load %arg10[%c0_239, %c163] : memref<1x512xf32, #tpu.memory_space<vmem>>, vector<1x256xf32>
    %676 = vector.broadcast %201 : f32 to vector<1x256xf32>
    %677 = arith.mulf %676, %675 : vector<1x256xf32>
    %c0_240 = arith.constant 0 : index
    %c179 = arith.constant 179 : index
    %678 = vector.load %arg10[%c0_240, %c179] : memref<1x512xf32, #tpu.memory_space<vmem>>, vector<1x256xf32>
    %679 = vector.broadcast %208 : f32 to vector<1x256xf32>
    %680 = arith.mulf %679, %678 : vector<1x256xf32>
    %681 = arith.addf %662, %665 : vector<1x256xf32>
    %682 = arith.addf %668, %671 : vector<1x256xf32>
    %683 = arith.addf %674, %677 : vector<1x256xf32>
    %684 = arith.addf %681, %682 : vector<1x256xf32>
    %685 = arith.addf %683, %680 : vector<1x256xf32>
    %686 = arith.addf %684, %685 : vector<1x256xf32>
    %c0_241 = arith.constant 0 : index
    %c83_242 = arith.constant 83 : index
    %687 = vector.load %arg11[%c0_241, %c83_242] : memref<1x512xf32, #tpu.memory_space<vmem>>, vector<1x256xf32>
    %688 = vector.broadcast %215 : f32 to vector<1x256xf32>
    %689 = arith.mulf %688, %687 : vector<1x256xf32>
    %c0_243 = arith.constant 0 : index
    %c99_244 = arith.constant 99 : index
    %690 = vector.load %arg11[%c0_243, %c99_244] : memref<1x512xf32, #tpu.memory_space<vmem>>, vector<1x256xf32>
    %691 = vector.broadcast %222 : f32 to vector<1x256xf32>
    %692 = arith.mulf %691, %690 : vector<1x256xf32>
    %c0_245 = arith.constant 0 : index
    %c115_246 = arith.constant 115 : index
    %693 = vector.load %arg11[%c0_245, %c115_246] : memref<1x512xf32, #tpu.memory_space<vmem>>, vector<1x256xf32>
    %694 = vector.broadcast %229 : f32 to vector<1x256xf32>
    %695 = arith.mulf %694, %693 : vector<1x256xf32>
    %c0_247 = arith.constant 0 : index
    %c131_248 = arith.constant 131 : index
    %696 = vector.load %arg11[%c0_247, %c131_248] : memref<1x512xf32, #tpu.memory_space<vmem>>, vector<1x256xf32>
    %697 = vector.broadcast %236 : f32 to vector<1x256xf32>
    %698 = arith.mulf %697, %696 : vector<1x256xf32>
    %c0_249 = arith.constant 0 : index
    %c147_250 = arith.constant 147 : index
    %699 = vector.load %arg11[%c0_249, %c147_250] : memref<1x512xf32, #tpu.memory_space<vmem>>, vector<1x256xf32>
    %700 = vector.broadcast %243 : f32 to vector<1x256xf32>
    %701 = arith.mulf %700, %699 : vector<1x256xf32>
    %c0_251 = arith.constant 0 : index
    %c163_252 = arith.constant 163 : index
    %702 = vector.load %arg11[%c0_251, %c163_252] : memref<1x512xf32, #tpu.memory_space<vmem>>, vector<1x256xf32>
    %703 = vector.broadcast %250 : f32 to vector<1x256xf32>
    %704 = arith.mulf %703, %702 : vector<1x256xf32>
    %c0_253 = arith.constant 0 : index
    %c179_254 = arith.constant 179 : index
    %705 = vector.load %arg11[%c0_253, %c179_254] : memref<1x512xf32, #tpu.memory_space<vmem>>, vector<1x256xf32>
    %706 = vector.broadcast %257 : f32 to vector<1x256xf32>
    %707 = arith.mulf %706, %705 : vector<1x256xf32>
    %708 = arith.addf %689, %692 : vector<1x256xf32>
    %709 = arith.addf %695, %698 : vector<1x256xf32>
    %710 = arith.addf %701, %704 : vector<1x256xf32>
    %711 = arith.addf %708, %709 : vector<1x256xf32>
    %712 = arith.addf %710, %707 : vector<1x256xf32>
    %713 = arith.addf %711, %712 : vector<1x256xf32>
    %714 = arith.addf %686, %713 : vector<1x256xf32>
    %c3_i32 = arith.constant 3 : i32
    %715 = vector.broadcast %c3_i32 : i32 to vector<1x256xi32>
    %716 = arith.addi %274, %715 : vector<1x256xi32>
    %c0_i32_255 = arith.constant 0 : i32
    %717 = vector.broadcast %c0_i32_255 : i32 to vector<1x256xi32>
    %718 = arith.cmpi sge, %716, %717 : vector<1x256xi32>
    %c16_i32_256 = arith.constant 16 : i32
    %719 = vector.broadcast %c16_i32_256 : i32 to vector<1x256xi32>
    %720 = arith.cmpi slt, %716, %719 : vector<1x256xi32>
    %721 = arith.andi %718, %720 : vector<1x256xi1>
    %cst_257 = arith.constant 0.000000e+00 : f32
    %722 = vector.broadcast %cst_257 : f32 to vector<1x256xf32>
    %723 = arith.select %721, %714, %722 : vector<1x256xi1>, vector<1x256xf32>
    %724 = arith.addf %473, %723 : vector<1x256xf32>
    %725 = arith.addf %594, %659 : vector<1x256xf32>
    %726 = arith.addf %724, %529 : vector<1x256xf32>
    %727 = arith.addf %725, %726 : vector<1x256xf32>
    %c0_258 = arith.constant 0 : index
    %728 = memref.load %arg8[%c0_258] : memref<1xf32, #tpu.memory_space<smem>>
    %729 = vector.broadcast %728 : f32 to vector<1x256xf32>
    %730 = arith.addf %727, %729 : vector<1x256xf32>
    %731 = arith.negf %730 : vector<1x256xf32>
    %732 = math.exp %731 : vector<1x256xf32>
    %cst_259 = arith.constant 1.000000e+00 : f32
    %733 = vector.broadcast %cst_259 : f32 to vector<1x256xf32>
    %734 = arith.addf %733, %732 : vector<1x256xf32>
    %735 = arith.divf %733, %734 : vector<1x256xf32>
    %736 = vector.shape_cast %735 : vector<1x256xf32> to vector<1x1x256xf32>
    %737 = vector.broadcast %736 : vector<1x1x256xf32> to vector<1x32x256xf32>
    %738 = arith.mulf %35, %737 : vector<1x32x256xf32>
    %739 = arith.addf %738, %0 : vector<1x32x256xf32>
    %740 = vector.shape_cast %145 : vector<32x256xf32> to vector<1x32x256xf32>
    %741 = arith.addf %739, %740 : vector<1x32x256xf32>
    %c0_260 = arith.constant 0 : index
    %c0_261 = arith.constant 0 : index
    %c0_262 = arith.constant 0 : index
    %742 = vector.load %arg9[%c0_260, %c0_261, %c0_262] : memref<1x32x256xf32, #tpu.memory_space<vmem>>, vector<1x32x256xf32>
    tpu.vector_store %arg9[%c0_260, %c0_261, %c0_262], %741 {strides = array<i32>} : memref<1x32x256xf32, #tpu.memory_space<vmem>>, vector<1x32x256xf32>,
    return
  }
  func.func @transform_0(%arg0: i32) -> (i32, i32, i32) {
    %c0_i32 = arith.constant 0 : i32
    %c0_i32_0 = arith.constant 0 : i32
    %c0_i32_1 = arith.constant 0 : i32
    return %arg0, %c0_i32, %c0_i32_0 : i32, i32, i32
  }
  func.func @transform_1(%arg0: i32) -> (i32, i32, i32) {
    %c0_i32 = arith.constant 0 : i32
    %c0_i32_0 = arith.constant 0 : i32
    %c0_i32_1 = arith.constant 0 : i32
    return %arg0, %c0_i32, %c0_i32_0 : i32, i32, i32
  }
  func.func @transform_2(%arg0: i32) -> (i32, i32, i32, i32) {
    %c0_i32 = arith.constant 0 : i32
    %c0_i32_0 = arith.constant 0 : i32
    %c0_i32_1 = arith.constant 0 : i32
    %c0_i32_2 = arith.constant 0 : i32
    return %c0_i32, %arg0, %c0_i32_0, %c0_i32_1 : i32, i32, i32, i32
  }
  func.func @transform_3(%arg0: i32) -> (i32, i32) {
    %c0_i32 = arith.constant 0 : i32
    %c0_i32_0 = arith.constant 0 : i32
    %c0_i32_1 = arith.constant 0 : i32
    return %c0_i32, %c0_i32_0 : i32, i32
  }
  func.func @transform_4(%arg0: i32) -> (i32, i32) {
    %c0_i32 = arith.constant 0 : i32
    %c0_i32_0 = arith.constant 0 : i32
    %c0_i32_1 = arith.constant 0 : i32
    return %c0_i32, %c0_i32_0 : i32, i32
  }
  func.func @transform_5(%arg0: i32) -> (i32, i32) {
    %c0_i32 = arith.constant 0 : i32
    %c0_i32_0 = arith.constant 0 : i32
    %c0_i32_1 = arith.constant 0 : i32
    return %c0_i32, %c0_i32_0 : i32, i32
  }
  func.func @transform_6(%arg0: i32) -> i32 {
    %c0_i32 = arith.constant 0 : i32
    %c0_i32_0 = arith.constant 0 : i32
    return %c0_i32 : i32
  }
  func.func @transform_7(%arg0: i32) -> i32 {
    %c0_i32 = arith.constant 0 : i32
    %c0_i32_0 = arith.constant 0 : i32
    return %c0_i32 : i32
  }
  func.func @transform_8(%arg0: i32) -> (i32, i32, i32) {
    %c0_i32 = arith.constant 0 : i32
    %c0_i32_0 = arith.constant 0 : i32
    %c0_i32_1 = arith.constant 0 : i32
    return %arg0, %c0_i32, %c0_i32_0 : i32, i32, i32
  }
}

</mosaic_0001>

<llo_original>
// kernel: ra1_forward.1
$region0: #{ra1_forward.1}
  #allocation0 [shape = 'u32[]', space=smem, size = 0x4, offset = 0x4, fixed_abs, tag = 'smem constant byte address 0x4 - core index']
  #allocation1 [shape = 'u32[72,128]{1,0:T(1,128)}', space=vmem, size = 0x9000, scoped, tag = 'internal scratch']
  #allocation2 [shape = 'f32[1,512]{1,0:T(1,128)}', space=vmem, size = 0x800, scoped, tag = 'scratch operand']
  #allocation3 [shape = 'f32[1,512]{1,0:T(1,128)}', space=vmem, size = 0x800, scoped, tag = 'scratch operand']
  #allocation4 [shape = 'f32[1]{0:T(128)S(6)}', space=smem, size = 0x200, scoped, tag = 'scoped memory for ra1_forward.1']
  %s0 = inlined_call_operand.vmem [shape: f32[2,32,256], index: 0, kind: input, shape index: {}]
  %s1 = inlined_call_operand.vmem [shape: f32[2,1,256], index: 1, kind: input, shape index: {}]
  %s2 = inlined_call_operand.vmem [shape: f32[8,2,32,8], index: 2, kind: input, shape index: {}]
  %s3 = inlined_call_operand.vmem [shape: f32[8,16], index: 3, kind: input, shape index: {}]
  %s4 = inlined_call_operand.vmem [shape: f32[2,32], index: 4, kind: input, shape index: {}]
  %s5 = inlined_call_operand.vmem [shape: f32[32,2], index: 5, kind: input, shape index: {}]
  %s6 = inlined_call_operand.vmem [shape: f32[98], index: 6, kind: input, shape index: {}]
  %s7 = inlined_call_operand.<no memory space> [shape: f32[1], index: 7, kind: input, shape index: {}]
  %s8 = inlined_call_operand.vmem [shape: f32[2,32,256], index: 8, kind: output, shape index: {}]
  %s9 = sld [smem:[#allocation0]]
  $region107: #{ra1_forward.1} parent=0
    _
  %s11 = ssub.s32 1, %s9
  %s12 = scalar_select 0, %s11, %s9
  %13 = sst [smem:[#allocation4]] %s7
  $region1: #{ra1_forward.1} parent=0
    #allocation5 [shape = 'u8[262144]{0}', space=vmem, size = 0x40000, scoped, tag = 'input window, operand 2']
    #allocation6 [shape = 'u8[512]{0}', space=smem, size = 0x200, scoped, tag = 'input window, operand 6, single buffered']
    #allocation7 [shape = 's32[2]{0}', space=sflag, size = 0x8, scoped, tag = 'scoped memory for ra1_forward.1']
    %14 = vsyncpa [#allocation7], 0
    loop: start=0, step=1, limit=4
    $region2: #{ra1_forward.1} parent=1 // loop_pre_header
      _
    $region3: #{ra1_forward.1} parent=1 // loop_header
      %s16 = sphi 0, %s20
      %p17 = scmp.ge.s32.totalorder %s16, 4
      %s26 = sphi 0, %s28
      %s29 = sphi 0, %s26
      %s30 = sphi 0, %s29
      %s46 = sphi 0, %s30
      %s52 = sphi 0, %s54
      %s55 = sphi 0, %s52
      %s56 = sphi 0, %s55
      %s72 = sphi 0, %s56
      %s78 = sphi 0, %s80
      %s81 = sphi 0, %s78
      %s82 = sphi 0, %s81
      %s98 = sphi 0, %s82
      %s102 = sphi 0, %s102
      %s104 = sphi 0, %s102
      %s105 = sphi 0, %s104
      %s119 = sphi 0, %s105
      %s123 = sphi 0, %s123
      %s125 = sphi 0, %s123
      %s126 = sphi 0, %s125
      %s140 = sphi 0, %s126
      %s144 = sphi 0, %s144
      %s146 = sphi 0, %s144
      %s147 = sphi 0, %s146
      %s161 = sphi 0, %s147
      %s165 = sphi 0, %s165
      %s167 = sphi 0, %s165
      %s168 = sphi 0, %s167
      %s182 = sphi 0, %s168
      %s186 = sphi 0, %s186
      %s188 = sphi 0, %s186
      %s189 = sphi 0, %s188
      %s203 = sphi 0, %s189
      %s209 = sphi 0, %s211
      %s212 = sphi 0, %s209
      %s213 = sphi 0, %s212
      %s229 = sphi 0, %s213
    $region4: #{ra1_forward.1} parent=1 // loop_header_branch
      %19 = sbr.rel (%p17) target = $region8
    $region5: #{ra1_forward.1} parent=1 // loop_body
      %s21 = ssub.s32 %s16, 1
      %s22 = ssub.s32 %s16, 2
      %s23 = sadd.s32 %s16, 1
      %s24 = ssub.s32 %s16, %s23
      %p25 = scmp.eq.s32.totalorder %s24, 0
      %s27 = sadd.s32 %s26, 1
      %s28 = scalar_select %p25, %s26, %s27
      %p31 = pneg %p25
      %p32 = scmp.eq.s32.totalorder %s16, 1
      %p33 = por %p31, %p32
      %p34 = scmp.ne.s32.totalorder %s26, %s29
      %p35 = scmp.eq.s32.totalorder %s16, 0
      %p36 = por %p34, %p35
      %p37 = scmp.ne.s32.totalorder %s26, %s29
      %p38 = scmp.eq.s32.totalorder %s21, 1
      %p39 = por %p37, %p38
      %p40 = scmp.ne.s32.totalorder %s29, %s30
      %p41 = scmp.eq.s32.totalorder %s21, 0
      %p42 = por %p40, %p41
      %p43 = scmp.ne.s32.totalorder %s29, %s30
      %p44 = scmp.eq.s32.totalorder %s22, 1
      %p45 = por %p43, %p44
      %p47 = scmp.ne.s32.totalorder %s30, %s46
      %p48 = scmp.eq.s32.totalorder %s22, 0
      %p49 = por %p47, %p48
      %s50 = ssub.s32 %s16, %s23
      %p51 = scmp.eq.s32.totalorder %s50, 0
      %s53 = sadd.s32 %s52, 1
      %s54 = scalar_select %p51, %s52, %s53
      %p57 = pneg %p51
      %p58 = scmp.eq.s32.totalorder %s16, 1
      %p59 = por %p57, %p58
      %p60 = scmp.ne.s32.totalorder %s52, %s55
      %p61 = scmp.eq.s32.totalorder %s16, 0
      %p62 = por %p60, %p61
      %p63 = scmp.ne.s32.totalorder %s52, %s55
      %p64 = scmp.eq.s32.totalorder %s21, 1
      %p65 = por %p63, %p64
      %p66 = scmp.ne.s32.totalorder %s55, %s56
      %p67 = scmp.eq.s32.totalorder %s21, 0
      %p68 = por %p66, %p67
      %p69 = scmp.ne.s32.totalorder %s55, %s56
      %p70 = scmp.eq.s32.totalorder %s22, 1
      %p71 = por %p69, %p70
      %p73 = scmp.ne.s32.totalorder %s56, %s72
      %p74 = scmp.eq.s32.totalorder %s22, 0
      %p75 = por %p73, %p74
      %s76 = ssub.s32 %s16, %s23
      %p77 = scmp.eq.s32.totalorder %s76, 0
      %s79 = sadd.s32 %s78, 1
      %s80 = scalar_select %p77, %s78, %s79
      %p83 = pneg %p77
      %p84 = scmp.eq.s32.totalorder %s16, 1
      %p85 = por %p83, %p84
      %p86 = scmp.ne.s32.totalorder %s78, %s81
      %p87 = scmp.eq.s32.totalorder %s16, 0
      %p88 = por %p86, %p87
      %p89 = scmp.ne.s32.totalorder %s78, %s81
      %p90 = scmp.eq.s32.totalorder %s21, 1
      %p91 = por %p89, %p90
      %p92 = scmp.ne.s32.totalorder %s81, %s82
      %p93 = scmp.eq.s32.totalorder %s21, 0
      %p94 = por %p92, %p93
      %p95 = scmp.ne.s32.totalorder %s81, %s82
      %p96 = scmp.eq.s32.totalorder %s22, 1
      %p97 = por %p95, %p96
      %p99 = scmp.ne.s32.totalorder %s82, %s98
      %p100 = scmp.eq.s32.totalorder %s22, 0
      %p101 = por %p99, %p100
      %s103 = sadd.s32 %s102, 1
      %p106 = scmp.eq.s32.totalorder %s16, 1
      %p107 = scmp.ne.s32.totalorder %s102, %s104
      %p108 = scmp.eq.s32.totalorder %s16, 0
      %p109 = por %p107, %p108
      %p110 = scmp.ne.s32.totalorder %s102, %s104
      %p111 = scmp.eq.s32.totalorder %s21, 1
      %p112 = por %p110, %p111
      %p113 = scmp.ne.s32.totalorder %s104, %s105
      %p114 = scmp.eq.s32.totalorder %s21, 0
      %p115 = por %p113, %p114
      %p116 = scmp.ne.s32.totalorder %s104, %s105
      %p117 = scmp.eq.s32.totalorder %s22, 1
      %p118 = por %p116, %p117
      %p120 = scmp.ne.s32.totalorder %s105, %s119
      %p121 = scmp.eq.s32.totalorder %s22, 0
      %p122 = por %p120, %p121
      %s124 = sadd.s32 %s123, 1
      %p127 = scmp.eq.s32.totalorder %s16, 1
      %p128 = scmp.ne.s32.totalorder %s123, %s125
      %p129 = scmp.eq.s32.totalorder %s16, 0
      %p130 = por %p128, %p129
      %p131 = scmp.ne.s32.totalorder %s123, %s125
      %p132 = scmp.eq.s32.totalorder %s21, 1
      %p133 = por %p131, %p132
      %p134 = scmp.ne.s32.totalorder %s125, %s126
      %p135 = scmp.eq.s32.totalorder %s21, 0
      %p136 = por %p134, %p135
      %p137 = scmp.ne.s32.totalorder %s125, %s126
      %p138 = scmp.eq.s32.totalorder %s22, 1
      %p139 = por %p137, %p138
      %p141 = scmp.ne.s32.totalorder %s126, %s140
      %p142 = scmp.eq.s32.totalorder %s22, 0
      %p143 = por %p141, %p142
      %s145 = sadd.s32 %s144, 1
      %p148 = scmp.eq.s32.totalorder %s16, 1
      %p149 = scmp.ne.s32.totalorder %s144, %s146
      %p150 = scmp.eq.s32.totalorder %s16, 0
      %p151 = por %p149, %p150
      %p152 = scmp.ne.s32.totalorder %s144, %s146
      %p153 = scmp.eq.s32.totalorder %s21, 1
      %p154 = por %p152, %p153
      %p155 = scmp.ne.s32.totalorder %s146, %s147
      %p156 = scmp.eq.s32.totalorder %s21, 0
      %p157 = por %p155, %p156
      %p158 = scmp.ne.s32.totalorder %s146, %s147
      %p159 = scmp.eq.s32.totalorder %s22, 1
      %p160 = por %p158, %p159
      %p162 = scmp.ne.s32.totalorder %s147, %s161
      %p163 = scmp.eq.s32.totalorder %s22, 0
      %p164 = por %p162, %p163
      %s166 = sadd.s32 %s165, 1
      %p169 = scmp.eq.s32.totalorder %s16, 1
      %p170 = scmp.ne.s32.totalorder %s165, %s167
      %p171 = scmp.eq.s32.totalorder %s16, 0
      %p172 = por %p170, %p171
      %p173 = scmp.ne.s32.totalorder %s165, %s167
      %p174 = scmp.eq.s32.totalorder %s21, 1
      %p175 = por %p173, %p174
      %p176 = scmp.ne.s32.totalorder %s167, %s168
      %p177 = scmp.eq.s32.totalorder %s21, 0
      %p178 = por %p176, %p177
      %p179 = scmp.ne.s32.totalorder %s167, %s168
      %p180 = scmp.eq.s32.totalorder %s22, 1
      %p181 = por %p179, %p180
      %p183 = scmp.ne.s32.totalorder %s168, %s182
      %p184 = scmp.eq.s32.totalorder %s22, 0
      %p185 = por %p183, %p184
      %s187 = sadd.s32 %s186, 1
      %p190 = scmp.eq.s32.totalorder %s16, 1
      %p191 = scmp.ne.s32.totalorder %s186, %s188
      %p192 = scmp.eq.s32.totalorder %s16, 0
      %p193 = por %p191, %p192
      %p194 = scmp.ne.s32.totalorder %s186, %s188
      %p195 = scmp.eq.s32.totalorder %s21, 1
      %p196 = por %p194, %p195
      %p197 = scmp.ne.s32.totalorder %s188, %s189
      %p198 = scmp.eq.s32.totalorder %s21, 0
      %p199 = por %p197, %p198
      %p200 = scmp.ne.s32.totalorder %s188, %s189
      %p201 = scmp.eq.s32.totalorder %s22, 1
      %p202 = por %p200, %p201
      %p204 = scmp.ne.s32.totalorder %s189, %s203
      %p205 = scmp.eq.s32.totalorder %s22, 0
      %p206 = por %p204, %p205
      %s207 = ssub.s32 %s16, %s23
      %p208 = scmp.eq.s32.totalorder %s207, 0
      %s210 = sadd.s32 %s209, 1
      %s211 = scalar_select %p208, %s209, %s210
      %p214 = pneg %p208
      %p215 = scmp.eq.s32.totalorder %s16, 1
      %p216 = por %p214, %p215
      %p217 = scmp.ne.s32.totalorder %s209, %s212
      %p218 = scmp.eq.s32.totalorder %s16, 0
      %p219 = por %p217, %p218
      %p220 = scmp.ne.s32.totalorder %s209, %s212
      %p221 = scmp.eq.s32.totalorder %s21, 1
      %p222 = por %p220, %p221
      %p223 = scmp.ne.s32.totalorder %s212, %s213
      %p224 = scmp.eq.s32.totalorder %s21, 0
      %p225 = por %p223, %p224
      %p226 = scmp.ne.s32.totalorder %s212, %s213
      %p227 = scmp.eq.s32.totalorder %s22, 1
      %p228 = por %p226, %p227
      %p230 = scmp.ne.s32.totalorder %s213, %s229
      %p231 = scmp.eq.s32.totalorder %s22, 0
      %p232 = por %p230, %p231
      %p233 = scmp.le.s32.totalorder 1, %s16
      %p234 = scmp.lt.s32.totalorder %s16, 3
      %p235 = pnand %p233, %p234
      %p236 = pneg %p235
      // Predicated region
      $region9: #{ra1_forward.1} parent=5 // pred_check
        _
      $region10: #{ra1_forward.1} parent=5 // pred_check_branch
        %238 = sbr.rel (%p235) target = $region12
      $region11: #{ra1_forward.1} parent=5 // pred_region
        %s239 = ssub.s32 %s16, 1
        // Predicated region
        $region13: #{ra1_forward.1} parent=11 // pred_check
          %p240 = pneg %p115
        $region14: #{ra1_forward.1} parent=11 // pred_check_branch
          %242 = sbr.rel (%p240) target = $region16
        $region15: #{ra1_forward.1} parent=11 // pred_region
          _
        $region16: #{ra1_forward.1} parent=11 // pred_fallthru
          _
        // Predicated region
        $region17: #{ra1_forward.1} parent=11 // pred_check
          %p243 = pneg %p136
        $region18: #{ra1_forward.1} parent=11 // pred_check_branch
          %245 = sbr.rel (%p243) target = $region20
        $region19: #{ra1_forward.1} parent=11 // pred_region
          _
        $region20: #{ra1_forward.1} parent=11 // pred_fallthru
          _
        // Predicated region
        $region21: #{ra1_forward.1} parent=11 // pred_check
          %p246 = pneg %p157
        $region22: #{ra1_forward.1} parent=11 // pred_check_branch
          %248 = sbr.rel (%p246) target = $region24
        $region23: #{ra1_forward.1} parent=11 // pred_region
          _
        $region24: #{ra1_forward.1} parent=11 // pred_fallthru
          _
        // Predicated region
        $region25: #{ra1_forward.1} parent=11 // pred_check
          %p249 = pneg %p178
        $region26: #{ra1_forward.1} parent=11 // pred_check_branch
          %251 = sbr.rel (%p249) target = $region28
        $region27: #{ra1_forward.1} parent=11 // pred_region
          %253 = vsyncadd [#allocation7], 0
          %s255 = sshll.u32 %s6, 4
          %s256 = int_to_ptr.vmem [resolvable:$true] %s255
          %258 = dma.vmem_to_smem %s256, 16, [#allocation6], [#allocation7]
        $region28: #{ra1_forward.1} parent=11 // pred_fallthru
          _
        // Predicated region
        $region29: #{ra1_forward.1} parent=11 // pred_check
          %p259 = pneg %p199
        $region30: #{ra1_forward.1} parent=11 // pred_check_branch
          %261 = sbr.rel (%p259) target = $region32
        $region31: #{ra1_forward.1} parent=11 // pred_region
          _
        $region32: #{ra1_forward.1} parent=11 // pred_fallthru
          _
      $region12: #{ra1_forward.1} parent=5 // pred_fallthru
        _
      %p262 = scmp.lt.s32.totalorder %s16, 2
      // Predicated region
      $region33: #{ra1_forward.1} parent=5 // pred_check
        %p263 = pneg %p262
      $region34: #{ra1_forward.1} parent=5 // pred_check_branch
        %265 = sbr.rel (%p263) target = $region36
      $region35: #{ra1_forward.1} parent=5 // pred_region
        // Predicated region
        $region37: #{ra1_forward.1} parent=35 // pred_check
          %p266 = pneg %p36
        $region38: #{ra1_forward.1} parent=35 // pred_check_branch
          %268 = sbr.rel (%p266) target = $region40
        $region39: #{ra1_forward.1} parent=35 // pred_region
          %p269 = scmp.lt.s32.totalorder %s16, 1
          %s270 = scalar_select %p269, %s16, 1
          %s271 = smul.addr %s270, 8
          %s272 = smul.addr %s271, 8
          %s273 = scalar_lea.vmem %s0, %s272
        $region40: #{ra1_forward.1} parent=35 // pred_fallthru
          _
        // Predicated region
        $region41: #{ra1_forward.1} parent=35 // pred_check
          %p274 = pneg %p62
        $region42: #{ra1_forward.1} parent=35 // pred_check_branch
          %276 = sbr.rel (%p274) target = $region44
        $region43: #{ra1_forward.1} parent=35 // pred_region
          %p277 = scmp.lt.s32.totalorder %s16, 1
          %s278 = scalar_select %p277, %s16, 1
          %s279 = smul.addr %s278, 2
          %s280 = scalar_lea.vmem %s1, %s279
        $region44: #{ra1_forward.1} parent=35 // pred_fallthru
          _
        // Predicated region
        $region45: #{ra1_forward.1} parent=35 // pred_check
          %p281 = pneg %p88
        $region46: #{ra1_forward.1} parent=35 // pred_check_branch
          %283 = sbr.rel (%p281) target = $region48
        $region47: #{ra1_forward.1} parent=35 // pred_region
          %s284 = sand.u32 %s78, 1
          %s285 = sand.u32 %s78, 1
          %s286 = smul.addr %s285, 256
          %s287 = scalar_lea.vmem [#allocation5], %s286
          %s288 = smul.addr %s16, 4
          %s289 = smul.addr %s288, 8
          %s290 = scalar_lea.vmem %s2, %s289
          // Predicated region
          $region49: #{ra1_forward.1} parent=47 // pred_check
            _
          $region50: #{ra1_forward.1} parent=47 // pred_check_branch
            %292 = sbr.rel (0) target = $region52
          $region51: #{ra1_forward.1} parent=47 // pred_region
            // Predicated region
            $region53: #{ra1_forward.1} parent=51 // pred_check
              _
            $region54: #{ra1_forward.1} parent=51 // pred_check_branch
              %294 = sbr.rel (0) target = $region56
            $region55: #{ra1_forward.1} parent=51 // pred_region
              // Predicated region
              $region68: #{ra1_forward.1} parent=55 // pred_check
                _
              $region69: #{ra1_forward.1} parent=55 // pred_check_branch
                %372 = sbr.rel (0) target = $region71
              $region70: #{ra1_forward.1} parent=55 // pred_region
                loop: start=0, step=1, limit=1
                $region72: #{ra1_forward.1} parent=70 // loop_pre_header
                  _
                $region73: #{ra1_forward.1} parent=70 // loop_header
                  %s374 = sphi 0, %s378
                  %p375 = scmp.ge.s32.totalorder %s374, 1
                  %s379 = sphi %s290, %s290
                  %s380 = sphi %s287, %s287
                $region74: #{ra1_forward.1} parent=70 // loop_header_branch
                  %377 = sbr.rel (%p375) target = $region78
                $region75: #{ra1_forward.1} parent=70 // loop_body
                  %v381 = vld [vmem:[%s379] sm:$0xff]
                  %382 = vst [vmem:[%s380] sm:$0xff] %v381
                  %v383 = vld [vmem:[%s379 + $0x8] sm:$0xff]
                  %384 = vst [vmem:[%s380 + $0x8] sm:$0xff] %v383
                  %v385 = vld [vmem:[%s379 + $0x10] sm:$0xff]
                  %386 = vst [vmem:[%s380 + $0x10] sm:$0xff] %v385
                  %v387 = vld [vmem:[%s379 + $0x18] sm:$0xff]
                  %388 = vst [vmem:[%s380 + $0x18] sm:$0xff] %v387
                  %v389 = vld [vmem:[%s379 + $0x40] sm:$0xff]
                  %390 = vst [vmem:[%s380 + $0x20] sm:$0xff] %v389
                  %v391 = vld [vmem:[%s379 + $0x48] sm:$0xff]
                  %392 = vst [vmem:[%s380 + $0x28] sm:$0xff] %v391
                  %v393 = vld [vmem:[%s379 + $0x50] sm:$0xff]
                  %394 = vst [vmem:[%s380 + $0x30] sm:$0xff] %v393
                  %v395 = vld [vmem:[%s379 + $0x58] sm:$0xff]
                  %396 = vst [vmem:[%s380 + $0x38] sm:$0xff] %v395
                  %v397 = vld [vmem:[%s379 + $0x80] sm:$0xff]
                  %398 = vst [vmem:[%s380 + $0x40] sm:$0xff] %v397
                  %v399 = vld [vmem:[%s379 + $0x88] sm:$0xff]
                  %400 = vst [vmem:[%s380 + $0x48] sm:$0xff] %v399
                  %v401 = vld [vmem:[%s379 + $0x90] sm:$0xff]
                  %402 = vst [vmem:[%s380 + $0x50] sm:$0xff] %v401
                  %v403 = vld [vmem:[%s379 + $0x98] sm:$0xff]
                  %404 = vst [vmem:[%s380 + $0x58] sm:$0xff] %v403
                  %v405 = vld [vmem:[%s379 + $0xc0] sm:$0xff]
                  %406 = vst [vmem:[%s380 + $0x60] sm:$0xff] %v405
                  %v407 = vld [vmem:[%s379 + $0xc8] sm:$0xff]
                  %408 = vst [vmem:[%s380 + $0x68] sm:$0xff] %v407
                  %v409 = vld [vmem:[%s379 + $0xd0] sm:$0xff]
                  %410 = vst [vmem:[%s380 + $0x70] sm:$0xff] %v409
                  %v411 = vld [vmem:[%s379 + $0xd8] sm:$0xff]
                  %412 = vst [vmem:[%s380 + $0x78] sm:$0xff] %v411
                  %v413 = vld [vmem:[%s379 + $0x100] sm:$0xff]
                  %414 = vst [vmem:[%s380 + $0x80] sm:$0xff] %v413
                  %v415 = vld [vmem:[%s379 + $0x108] sm:$0xff]
                  %416 = vst [vmem:[%s380 + $0x88] sm:$0xff] %v415
                  %v417 = vld [vmem:[%s379 + $0x110] sm:$0xff]
                  %418 = vst [vmem:[%s380 + $0x90] sm:$0xff] %v417
                  %v419 = vld [vmem:[%s379 + $0x118] sm:$0xff]
                  %420 = vst [vmem:[%s380 + $0x98] sm:$0xff] %v419
                  %v421 = vld [vmem:[%s379 + $0x140] sm:$0xff]
                  %422 = vst [vmem:[%s380 + $0xa0] sm:$0xff] %v421
                  %v423 = vld [vmem:[%s379 + $0x148] sm:$0xff]
                  %424 = vst [vmem:[%s380 + $0xa8] sm:$0xff] %v423
                  %v425 = vld [vmem:[%s379 + $0x150] sm:$0xff]
                  %426 = vst [vmem:[%s380 + $0xb0] sm:$0xff] %v425
                  %v427 = vld [vmem:[%s379 + $0x158] sm:$0xff]
                  %428 = vst [vmem:[%s380 + $0xb8] sm:$0xff] %v427
                  %v429 = vld [vmem:[%s379 + $0x180] sm:$0xff]
                  %430 = vst [vmem:[%s380 + $0xc0] sm:$0xff] %v429
                  %v431 = vld [vmem:[%s379 + $0x188] sm:$0xff]
                  %432 = vst [vmem:[%s380 + $0xc8] sm:$0xff] %v431
                  %v433 = vld [vmem:[%s379 + $0x190] sm:$0xff]
                  %434 = vst [vmem:[%s380 + $0xd0] sm:$0xff] %v433
                  %v435 = vld [vmem:[%s379 + $0x198] sm:$0xff]
                  %436 = vst [vmem:[%s380 + $0xd8] sm:$0xff] %v435
                  %v437 = vld [vmem:[%s379 + $0x1c0] sm:$0xff]
                  %438 = vst [vmem:[%s380 + $0xe0] sm:$0xff] %v437
                  %v439 = vld [vmem:[%s379 + $0x1c8] sm:$0xff]
                  %440 = vst [vmem:[%s380 + $0xe8] sm:$0xff] %v439
                  %v441 = vld [vmem:[%s379 + $0x1d0] sm:$0xff]
                  %442 = vst [vmem:[%s380 + $0xf0] sm:$0xff] %v441
                  %v443 = vld [vmem:[%s379 + $0x1d8] sm:$0xff]
                  %444 = vst [vmem:[%s380 + $0xf8] sm:$0xff] %v443
                $region76: #{ra1_forward.1} parent=70 // loop_footer
                  %s378 = sadd.s32 1, %s374
                $region77: #{ra1_forward.1} parent=70 // loop_footer_branch
                  %373 = sbr.rel target = $region73
                $region78: #{ra1_forward.1} parent=70 // loop_exit
                  _
              $region71: #{ra1_forward.1} parent=55 // pred_fallthru
                _
              // Predicated region
              $region79: #{ra1_forward.1} parent=55 // pred_check
                _
              $region80: #{ra1_forward.1} parent=55 // pred_check_branch
                %446 = sbr.rel target = $region82
              $region81: #{ra1_forward.1} parent=55 // pred_region
                _
              $region82: #{ra1_forward.1} parent=55 // pred_fallthru
                _
            $region56: #{ra1_forward.1} parent=51 // pred_fallthru
              _
            // Predicated region
            $region57: #{ra1_forward.1} parent=51 // pred_check
              _
            $region58: #{ra1_forward.1} parent=51 // pred_check_branch
              %296 = sbr.rel target = $region60
            $region59: #{ra1_forward.1} parent=51 // pred_region
              %s298 = ssub.s32 256, 1
              loop: start=0, step=1, limit=1
              $region61: #{ra1_forward.1} parent=59 // loop_pre_header
                _
              $region62: #{ra1_forward.1} parent=59 // loop_header
                %s300 = sphi 0, %s304
                %p301 = scmp.ge.s32.totalorder %s300, 1
                %s305 = sphi %s290, %s290
                %s306 = sphi %s287, %s287
              $region63: #{ra1_forward.1} parent=59 // loop_header_branch
                %303 = sbr.rel (%p301) target = $region67
              $region64: #{ra1_forward.1} parent=59 // loop_body
                %v307 = vld [vmem:[%s305] sm:%s298]
                %308 = vst [vmem:[%s306] sm:%s298] %v307
                %v309 = vld [vmem:[%s305 + $0x8] sm:%s298]
                %310 = vst [vmem:[%s306 + $0x8] sm:%s298] %v309
                %v311 = vld [vmem:[%s305 + $0x10] sm:%s298]
                %312 = vst [vmem:[%s306 + $0x10] sm:%s298] %v311
                %v313 = vld [vmem:[%s305 + $0x18] sm:%s298]
                %314 = vst [vmem:[%s306 + $0x18] sm:%s298] %v313
                %v315 = vld [vmem:[%s305 + $0x40] sm:%s298]
                %316 = vst [vmem:[%s306 + $0x20] sm:%s298] %v315
                %v317 = vld [vmem:[%s305 + $0x48] sm:%s298]
                %318 = vst [vmem:[%s306 + $0x28] sm:%s298] %v317
                %v319 = vld [vmem:[%s305 + $0x50] sm:%s298]
                %320 = vst [vmem:[%s306 + $0x30] sm:%s298] %v319
                %v321 = vld [vmem:[%s305 + $0x58] sm:%s298]
                %322 = vst [vmem:[%s306 + $0x38] sm:%s298] %v321
                %v323 = vld [vmem:[%s305 + $0x80] sm:%s298]
                %324 = vst [vmem:[%s306 + $0x40] sm:%s298] %v323
                %v325 = vld [vmem:[%s305 + $0x88] sm:%s298]
                %326 = vst [vmem:[%s306 + $0x48] sm:%s298] %v325
                %v327 = vld [vmem:[%s305 + $0x90] sm:%s298]
                %328 = vst [vmem:[%s306 + $0x50] sm:%s298] %v327
                %v329 = vld [vmem:[%s305 + $0x98] sm:%s298]
                %330 = vst [vmem:[%s306 + $0x58] sm:%s298] %v329
                %v331 = vld [vmem:[%s305 + $0xc0] sm:%s298]
                %332 = vst [vmem:[%s306 + $0x60] sm:%s298] %v331
                %v333 = vld [vmem:[%s305 + $0xc8] sm:%s298]
                %334 = vst [vmem:[%s306 + $0x68] sm:%s298] %v333
                %v335 = vld [vmem:[%s305 + $0xd0] sm:%s298]
                %336 = vst [vmem:[%s306 + $0x70] sm:%s298] %v335
                %v337 = vld [vmem:[%s305 + $0xd8] sm:%s298]
                %338 = vst [vmem:[%s306 + $0x78] sm:%s298] %v337
                %v339 = vld [vmem:[%s305 + $0x100] sm:%s298]
                %340 = vst [vmem:[%s306 + $0x80] sm:%s298] %v339
                %v341 = vld [vmem:[%s305 + $0x108] sm:%s298]
                %342 = vst [vmem:[%s306 + $0x88] sm:%s298] %v341
                %v343 = vld [vmem:[%s305 + $0x110] sm:%s298]
                %344 = vst [vmem:[%s306 + $0x90] sm:%s298] %v343
                %v345 = vld [vmem:[%s305 + $0x118] sm:%s298]
                %346 = vst [vmem:[%s306 + $0x98] sm:%s298] %v345
                %v347 = vld [vmem:[%s305 + $0x140] sm:%s298]
                %348 = vst [vmem:[%s306 + $0xa0] sm:%s298] %v347
                %v349 = vld [vmem:[%s305 + $0x148] sm:%s298]
                %350 = vst [vmem:[%s306 + $0xa8] sm:%s298] %v349
                %v351 = vld [vmem:[%s305 + $0x150] sm:%s298]
                %352 = vst [vmem:[%s306 + $0xb0] sm:%s298] %v351
                %v353 = vld [vmem:[%s305 + $0x158] sm:%s298]
                %354 = vst [vmem:[%s306 + $0xb8] sm:%s298] %v353
                %v355 = vld [vmem:[%s305 + $0x180] sm:%s298]
                %356 = vst [vmem:[%s306 + $0xc0] sm:%s298] %v355
                %v357 = vld [vmem:[%s305 + $0x188] sm:%s298]
                %358 = vst [vmem:[%s306 + $0xc8] sm:%s298] %v357
                %v359 = vld [vmem:[%s305 + $0x190] sm:%s298]
                %360 = vst [vmem:[%s306 + $0xd0] sm:%s298] %v359
                %v361 = vld [vmem:[%s305 + $0x198] sm:%s298]
                %362 = vst [vmem:[%s306 + $0xd8] sm:%s298] %v361
                %v363 = vld [vmem:[%s305 + $0x1c0] sm:%s298]
                %364 = vst [vmem:[%s306 + $0xe0] sm:%s298] %v363
                %v365 = vld [vmem:[%s305 + $0x1c8] sm:%s298]
                %366 = vst [vmem:[%s306 + $0xe8] sm:%s298] %v365
                %v367 = vld [vmem:[%s305 + $0x1d0] sm:%s298]
                %368 = vst [vmem:[%s306 + $0xf0] sm:%s298] %v367
                %v369 = vld [vmem:[%s305 + $0x1d8] sm:%s298]
                %370 = vst [vmem:[%s306 + $0xf8] sm:%s298] %v369
              $region65: #{ra1_forward.1} parent=59 // loop_footer
                %s304 = sadd.s32 1, %s300
              $region66: #{ra1_forward.1} parent=59 // loop_footer_branch
                %299 = sbr.rel target = $region62
              $region67: #{ra1_forward.1} parent=59 // loop_exit
                _
            $region60: #{ra1_forward.1} parent=51 // pred_fallthru
              _
          $region52: #{ra1_forward.1} parent=47 // pred_fallthru
            _
          %447 = vnop
        $region48: #{ra1_forward.1} parent=35 // pred_fallthru
          _
      $region36: #{ra1_forward.1} parent=5 // pred_fallthru
        _
      %p448 = scmp.le.s32.totalorder 1, %s16
      %p449 = scmp.lt.s32.totalorder %s16, 3
      %p450 = pnand %p448, %p449
      %p451 = pneg %p450
      // Predicated region
      $region83: #{ra1_forward.1} parent=5 // pred_check
        _
      $region84: #{ra1_forward.1} parent=5 // pred_check_branch
        %453 = sbr.rel (%p450) target = $region86
      $region85: #{ra1_forward.1} parent=5 // pred_region
        %s454 = ssub.s32 %s16, 1
        %s455 = sand.u32 %s81, 1
        %s456 = sand.u32 %s81, 1
        %s457 = smul.addr %s456, 256
        %s458 = scalar_lea.vmem [#allocation5], %s457
        // Predicated region
        $region87: #{ra1_forward.1} parent=85 // pred_check
          %p459 = pneg %p94
        $region88: #{ra1_forward.1} parent=85 // pred_check_branch
          %461 = sbr.rel (%p459) target = $region90
        $region89: #{ra1_forward.1} parent=85 // pred_region
          _
        $region90: #{ra1_forward.1} parent=85 // pred_fallthru
          _
        // Predicated region
        $region91: #{ra1_forward.1} parent=85 // pred_check
          %p462 = pneg %p178
        $region92: #{ra1_forward.1} parent=85 // pred_check_branch
          %464 = sbr.rel (%p462) target = $region94
        $region93: #{ra1_forward.1} parent=85 // pred_region
          %466 = dma.done [#allocation7], 16
        $region94: #{ra1_forward.1} parent=85 // pred_fallthru
          _
        %467 = sfence
        %p468 = scmp.lt.s32.totalorder %s21, 1
        %s469 = scalar_select %p468, %s21, 1
        %s470 = smul.addr %s469, 8
        %s471 = smul.addr %s470, 8
        %s472 = scalar_lea.vmem %s0, %s471
        %p473 = pneg %p42
        %p474 = pneg %p39
        %p475 = scmp.lt.s32.totalorder %s21, 1
        %s476 = scalar_select %p475, %s21, 1
        %s477 = smul.addr %s476, 2
        %s478 = scalar_lea.vmem %s1, %s477
        %p479 = pneg %p68
        %p480 = pneg %p65
        %s481 = sand.u32 %s81, 1
        %s482 = sand.u32 %s81, 1
        %s483 = smul.addr %s482, 256
        %s484 = scalar_lea.vmem [#allocation5], %s483
        %p485 = pneg %p94
        %p486 = pneg %p91
        %p487 = pneg %p115
        %p488 = pneg %p112
        %p489 = pneg %p136
        %p490 = pneg %p133
        %p491 = pneg %p157
        %p492 = pneg %p154
        %p493 = pneg %p178
        %p494 = pneg %p175
        %p495 = pneg %p199
        %p496 = pneg %p196
        %p497 = pneg %p225
        %p498 = pneg %p222
        %p499 = scmp.lt.s32.totalorder %s21, 1
        %s500 = scalar_select %p499, %s21, 1
        %s501 = smul.addr %s500, 8
        %s502 = smul.addr %s501, 8
        %s503 = scalar_lea.vmem %s8, %s502
        %p504 = scmp.lt.s32.totalorder %s21, 1
        %s505 = scalar_select %p504, %s21, 1
        %s506 = smul.addr %s505, 8
        %s507 = smul.addr %s506, 8
        %s508 = scalar_lea.vmem %s0, %s507
        %p509 = scmp.lt.s32.totalorder %s21, 1
        %s510 = scalar_select %p509, %s21, 1
        %s511 = smul.addr %s510, 2
        %s512 = scalar_lea.vmem %s1, %s511
        %p513 = scmp.lt.s32.totalorder %s21, 1
        %s514 = scalar_select %p513, %s21, 1
        %s515 = smul.addr %s514, 8
        %s516 = smul.addr %s515, 8
        %s517 = scalar_lea.vmem %s8, %s516
        %v518 = vld [vmem:[%s508] sm:$0xff]
        %v519 = vld [vmem:[%s508 + $0x8] sm:$0xff]
        %v520 = vld [vmem:[%s508 + $0x10] sm:$0xff]
        %v521 = vld [vmem:[%s508 + $0x18] sm:$0xff]
        %v522 = vld [vmem:[%s508 + $0x20] sm:$0xff]
        %v523 = vld [vmem:[%s508 + $0x28] sm:$0xff]
        %v524 = vld [vmem:[%s508 + $0x30] sm:$0xff]
        %v525 = vld [vmem:[%s508 + $0x38] sm:$0xff]
        %v526 = vmax.f32 %v518, %v519
        %527 = vmax.xlane.f32.xlu0 %v526
        %v528 = vpop.xlane.xlu0 %527
        %v529 = vmax.f32 %v520, %v521
        %530 = vmax.xlane.f32.xlu0 %v529
        %v531 = vpop.xlane.xlu0 %530
        %v532 = vmax.f32 %v522, %v523
        %533 = vmax.xlane.f32.xlu0 %v532
        %v534 = vpop.xlane.xlu0 %533
        %v535 = vmax.f32 %v524, %v525
        %536 = vmax.xlane.f32.xlu0 %v535
        %v537 = vpop.xlane.xlu0 %536
        %v538 = vadd.f32 %v518, %v519
        %539 = vadd.xlane.f32.xlu0 %v538
        %v540 = vpop.xlane.xlu0 %539
        %v541 = vadd.f32 %v520, %v521
        %542 = vadd.xlane.f32.xlu0 %v541
        %v543 = vpop.xlane.xlu0 %542
        %v544 = vadd.f32 %v522, %v523
        %545 = vadd.xlane.f32.xlu0 %v544
        %v546 = vpop.xlane.xlu0 %545
        %v547 = vadd.f32 %v524, %v525
        %548 = vadd.xlane.f32.xlu0 %v547
        %v549 = vpop.xlane.xlu0 %548
        %v550 = vmul.f32 %v540, 0.00390625
        %v551 = vmul.f32 %v543, 0.00390625
        %v552 = vmul.f32 %v546, 0.00390625
        %v553 = vmul.f32 %v549, 0.00390625
        %v554 = vld [vmem:[%s4] sm:$0x3]
        %v555 = vld [vmem:[%s5] sm:$0xff]
        %v556 = vld [vmem:[%s5 + $0x8] sm:$0xff]
        %v557 = vld [vmem:[%s5 + $0x10] sm:$0xff]
        %v558 = vld [vmem:[%s5 + $0x18] sm:$0xff]
        %vm559 = vcmask 7168
        %v560 = vsel %vm559, %v528, %v550
        %v561 = vsel %vm559, %v531, %v551
        %v562 = vsel %vm559, %v534, %v552
        %v563 = vsel %vm559, %v537, %v553
        %vm564 = vcmask 261120
        %v566 = vsel %vm564, %v554, 0
        %568 = vmatpush.msra.mxu0 0.0
        %569 = vmatpush.msra.mxu0 0.0
        %570 = vmatpush.msra.mxu0 0.0
        %571 = vmatpush.msra.mxu0 0.0
        %572 = vmatpush.msra.mxu0 0.0
        %573 = vmatpush.msra.mxu0 0.0
        %574 = vmatpush.msra.mxu0 0.0
        %575 = vmatpush.msra.mxu0 0.0
        %576 = vmatpush.msra.mxu0 0.0
        %577 = vmatpush.msra.mxu0 0.0
        %578 = vmatpush.msra.mxu0 0.0
        %579 = vmatpush.msra.mxu0 0.0
        %580 = vmatpush.msra.mxu0 %v563
        %581 = vmatpush.msra.mxu0 %v562
        %582 = vmatpush.msra.mxu0 %v561
        %583 = vmatpush.msra.mxu0 %v560
        %584 = vmatmul.f32.gmra.mxu0 %v566
        %v585 = vpop.f32.mrf.mxu0
        %v586 = vadd.f32 0.0, %v585
        %587 = vdwg.mxu0
        %v588 = vmax.f32 %v586, 0.0
        %vm589 = vcmask 15360
        %v591 = vsel %vm589, %v555, 0
        %v594 = vsel %vm589, %v556, 0
        %v597 = vsel %vm589, %v557, 0
        %v600 = vsel %vm589, %v558, 0
        %vm602 = vcmask 1041408
        %v604 = vsel %vm602, %v588, 0
        %606 = vmatpush.msra.mxu0 0.0
        %607 = vmatpush.msra.mxu0 0.0
        %608 = vmatpush.msra.mxu0 0.0
        %609 = vmatpush.msra.mxu0 0.0
        %610 = vmatpush.msra.mxu0 0.0
        %611 = vmatpush.msra.mxu0 0.0
        %612 = vmatpush.msra.mxu0 0.0
        %613 = vmatpush.msra.mxu0 0.0
        %614 = vmatpush.msra.mxu0 0.0
        %615 = vmatpush.msra.mxu0 0.0
        %616 = vmatpush.msra.mxu0 0.0
        %617 = vmatpush.msra.mxu0 0.0
        %618 = vmatpush.msra.mxu0 0.0
        %619 = vmatpush.msra.mxu0 0.0
        %620 = vmatpush.msra.mxu0 0.0
        %621 = vmatpush.msra.mxu0 %v604
        %622 = vmatmul.f32.gmra.mxu0 %v591
        %v623 = vpop.f32.mrf.mxu0
        %v624 = vadd.f32 0.0, %v623
        %625 = vmatmul.f32.gmra.mxu0 %v594
        %v626 = vpop.f32.mrf.mxu0
        %v627 = vadd.f32 0.0, %v626
        %628 = vmatmul.f32.gmra.mxu0 %v597
        %v629 = vpop.f32.mrf.mxu0
        %v630 = vadd.f32 0.0, %v629
        %631 = vmatmul.f32.gmra.mxu0 %v600
        %v632 = vpop.f32.mrf.mxu0
        %v633 = vadd.f32 0.0, %v632
        %634 = vdwg.mxu0
        %639 = vrot.lane.b32.xlu0 %v624, 127
        %v640 = vpop.permute.xlu0 %639
        %641 = vrot.lane.b32.xlu0 %v627, 127
        %v642 = vpop.permute.xlu0 %641
        %643 = vrot.lane.b32.xlu0 %v630, 127
        %v644 = vpop.permute.xlu0 %643
        %645 = vrot.lane.b32.xlu0 %v633, 127
        %v646 = vpop.permute.xlu0 %645
        %v651 = vadd.f32 %v624, %v640
        %v652 = vadd.f32 %v627, %v642
        %v653 = vadd.f32 %v630, %v644
        %v654 = vadd.f32 %v633, %v646
        %v655 = vxor.u32 %v651, 2147483648
        %v656 = vxor.u32 %v652, 2147483648
        %v657 = vxor.u32 %v653, 2147483648
        %v658 = vxor.u32 %v654, 2147483648
        %v659 = vmul.f32 %v655, 1.442695
        %v660 = vpow.pop %v659
        %v661 = vmul.f32 %v656, 1.442695
        %v662 = vpow.pop %v661
        %v663 = vmul.f32 %v657, 1.442695
        %v664 = vpow.pop %v663
        %v665 = vmul.f32 %v658, 1.442695
        %v666 = vpow.pop %v665
        %v667 = vadd.f32 %v660, 1.0
        %v668 = vadd.f32 %v662, 1.0
        %v669 = vadd.f32 %v664, 1.0
        %v670 = vadd.f32 %v666, 1.0
        %v671 = vrcp.pop %v667
        %v672 = vmul.f32 %v667, %v671
        %v673 = vsub.f32 1.0, %v672
        %v674 = vmul.f32 %v671, %v673
        %v675 = vadd.f32 %v671, %v674
        %vm676 = vweird.f32 %v667
        %vm677 = vweird.f32 %v671
        %vm678 = vmor %vm676, %vm677
        %v679 = vsel %vm678, %v671, %v675
        %v680 = vand.u32 2147483647, %v667
        %vm681 = vcmp.eq.f32.partialorder %v680, 8.507059e+37
        %v682 = vand.u32 %v667, 2147483648
        %v683 = vor.u32 1.1754944e-38, %v682
        %v684 = vsel %vm681, %v683, %v679
        %v685 = vmul.f32 1.0, %v684
        %v686 = vrcp.pop %v668
        %v687 = vmul.f32 %v668, %v686
        %v688 = vsub.f32 1.0, %v687
        %v689 = vmul.f32 %v686, %v688
        %v690 = vadd.f32 %v686, %v689
        %vm691 = vweird.f32 %v668
        %vm692 = vweird.f32 %v686
        %vm693 = vmor %vm691, %vm692
        %v694 = vsel %vm693, %v686, %v690
        %v695 = vand.u32 2147483647, %v668
        %vm696 = vcmp.eq.f32.partialorder %v695, 8.507059e+37
        %v697 = vand.u32 %v668, 2147483648
        %v698 = vor.u32 1.1754944e-38, %v697
        %v699 = vsel %vm696, %v698, %v694
        %v700 = vmul.f32 1.0, %v699
        %v701 = vrcp.pop %v669
        %v702 = vmul.f32 %v669, %v701
        %v703 = vsub.f32 1.0, %v702
        %v704 = vmul.f32 %v701, %v703
        %v705 = vadd.f32 %v701, %v704
        %vm706 = vweird.f32 %v669
        %vm707 = vweird.f32 %v701
        %vm708 = vmor %vm706, %vm707
        %v709 = vsel %vm708, %v701, %v705
        %v710 = vand.u32 2147483647, %v669
        %vm711 = vcmp.eq.f32.partialorder %v710, 8.507059e+37
        %v712 = vand.u32 %v669, 2147483648
        %v713 = vor.u32 1.1754944e-38, %v712
        %v714 = vsel %vm711, %v713, %v709
        %v715 = vmul.f32 1.0, %v714
        %v716 = vrcp.pop %v670
        %v717 = vmul.f32 %v670, %v716
        %v718 = vsub.f32 1.0, %v717
        %v719 = vmul.f32 %v716, %v718
        %v720 = vadd.f32 %v716, %v719
        %vm721 = vweird.f32 %v670
        %vm722 = vweird.f32 %v716
        %vm723 = vmor %vm721, %vm722
        %v724 = vsel %vm723, %v716, %v720
        %v725 = vand.u32 2147483647, %v670
        %vm726 = vcmp.eq.f32.partialorder %v725, 8.507059e+37
        %v727 = vand.u32 %v670, 2147483648
        %v728 = vor.u32 1.1754944e-38, %v727
        %v729 = vsel %vm726, %v728, %v724
        %v730 = vmul.f32 1.0, %v729
        %732 = vset.pattern.permute.xlu0 0
        %733 = vperm.xlu0 %732, %v685
        %v734 = vpop.permute.xlu0 %733
        %737 = vset.pattern.permute.xlu0 0
        %738 = vperm.xlu0 %737, %v700
        %v739 = vpop.permute.xlu0 %738
        %742 = vset.pattern.permute.xlu0 0
        %743 = vperm.xlu0 %742, %v715
        %v744 = vpop.permute.xlu0 %743
        %747 = vset.pattern.permute.xlu0 0
        %748 = vperm.xlu0 %747, %v730
        %v749 = vpop.permute.xlu0 %748
        %v751 = vmul.f32 %v518, %v734
        %v752 = vmul.f32 %v519, %v734
        %v753 = vmul.f32 %v520, %v739
        %v754 = vmul.f32 %v521, %v739
        %v755 = vmul.f32 %v522, %v744
        %v756 = vmul.f32 %v523, %v744
        %v757 = vmul.f32 %v524, %v749
        %v758 = vmul.f32 %v525, %v749
        %v759 = vld [vmem:[%s512] sm:$0x3]
        %v760 = vsub.f32 0.0, %v759
        %v761 = vxor.u32 %v760, 2147483648
        %v762 = vmul.f32 %v761, 1.442695
        %v763 = vpow.pop %v762
        %v764 = vadd.f32 %v763, 1.0
        %v765 = vrcp.pop %v764
        %v766 = vmul.f32 %v764, %v765
        %v767 = vsub.f32 1.0, %v766
        %v768 = vmul.f32 %v765, %v767
        %v769 = vadd.f32 %v765, %v768
        %vm770 = vweird.f32 %v764
        %vm771 = vweird.f32 %v765
        %vm772 = vmor %vm770, %vm771
        %v773 = vsel %vm772, %v765, %v769
        %v774 = vand.u32 2147483647, %v764
        %vm775 = vcmp.eq.f32.partialorder %v774, 8.507059e+37
        %v776 = vand.u32 %v764, 2147483648
        %v777 = vor.u32 1.1754944e-38, %v776
        %v778 = vsel %vm775, %v777, %v773
        %v779 = vmul.f32 1.0, %v778
        %v781 = vperm.slane %v779, 0
        %v782 = vperm.slane %v779, 1
        %v785 = vmul.f32 %v751, %v781
        %v786 = vmul.f32 %v752, %v782
        %v787 = vmul.f32 %v753, %v781
        %v788 = vmul.f32 %v754, %v782
        %v789 = vmul.f32 %v755, %v781
        %v790 = vmul.f32 %v756, %v782
        %v791 = vmul.f32 %v757, %v781
        %v792 = vmul.f32 %v758, %v782
        %v793 = vld [vmem:[%s458] sm:$0xff]
        %v794 = vld [vmem:[%s458 + $0x8] sm:$0xff]
        %v795 = vld [vmem:[%s458 + $0x10] sm:$0xff]
        %v796 = vld [vmem:[%s458 + $0x18] sm:$0xff]
        %v797 = vld [vmem:[%s458 + $0x20] sm:$0xff]
        %v798 = vld [vmem:[%s458 + $0x28] sm:$0xff]
        %v799 = vld [vmem:[%s458 + $0x30] sm:$0xff]
        %v800 = vld [vmem:[%s458 + $0x38] sm:$0xff]
        %v801 = vld [vmem:[%s458 + $0x40] sm:$0xff]
        %v802 = vld [vmem:[%s458 + $0x48] sm:$0xff]
        %v803 = vld [vmem:[%s458 + $0x50] sm:$0xff]
        %v804 = vld [vmem:[%s458 + $0x58] sm:$0xff]
        %v805 = vld [vmem:[%s458 + $0x60] sm:$0xff]
        %v806 = vld [vmem:[%s458 + $0x68] sm:$0xff]
        %v807 = vld [vmem:[%s458 + $0x70] sm:$0xff]
        %v808 = vld [vmem:[%s458 + $0x78] sm:$0xff]
        %v809 = vld [vmem:[%s458 + $0x80] sm:$0xff]
        %v810 = vld [vmem:[%s458 + $0x88] sm:$0xff]
        %v811 = vld [vmem:[%s458 + $0x90] sm:$0xff]
        %v812 = vld [vmem:[%s458 + $0x98] sm:$0xff]
        %v813 = vld [vmem:[%s458 + $0xa0] sm:$0xff]
        %v814 = vld [vmem:[%s458 + $0xa8] sm:$0xff]
        %v815 = vld [vmem:[%s458 + $0xb0] sm:$0xff]
        %v816 = vld [vmem:[%s458 + $0xb8] sm:$0xff]
        %v817 = vld [vmem:[%s458 + $0xc0] sm:$0xff]
        %v818 = vld [vmem:[%s458 + $0xc8] sm:$0xff]
        %v819 = vld [vmem:[%s458 + $0xd0] sm:$0xff]
        %v820 = vld [vmem:[%s458 + $0xd8] sm:$0xff]
        %v821 = vld [vmem:[%s458 + $0xe0] sm:$0xff]
        %v822 = vld [vmem:[%s458 + $0xe8] sm:$0xff]
        %v823 = vld [vmem:[%s458 + $0xf0] sm:$0xff]
        %v824 = vld [vmem:[%s458 + $0xf8] sm:$0xff]
        %v825 = vld [vmem:[%s3] sm:$0xff]
        %vm826 = vcmask 64512
        %v828 = vsel %vm826, %v793, 0
        %v831 = vsel %vm826, %v794, 0
        %v834 = vsel %vm826, %v795, 0
        %v837 = vsel %vm826, %v796, 0
        %v840 = vsel %vm826, %v797, 0
        %v843 = vsel %vm826, %v798, 0
        %v846 = vsel %vm826, %v799, 0
        %v849 = vsel %vm826, %v800, 0
        %v852 = vsel %vm826, %v801, 0
        %v855 = vsel %vm826, %v802, 0
        %v858 = vsel %vm826, %v803, 0
        %v861 = vsel %vm826, %v804, 0
        %v864 = vsel %vm826, %v805, 0
        %v867 = vsel %vm826, %v806, 0
        %v870 = vsel %vm826, %v807, 0
        %v873 = vsel %vm826, %v808, 0
        %v876 = vsel %vm826, %v809, 0
        %v879 = vsel %vm826, %v810, 0
        %v882 = vsel %vm826, %v811, 0
        %v885 = vsel %vm826, %v812, 0
        %v888 = vsel %vm826, %v813, 0
        %v891 = vsel %vm826, %v814, 0
        %v894 = vsel %vm826, %v815, 0
        %v897 = vsel %vm826, %v816, 0
        %v900 = vsel %vm826, %v817, 0
        %v903 = vsel %vm826, %v818, 0
        %v906 = vsel %vm826, %v819, 0
        %v909 = vsel %vm826, %v820, 0
        %v912 = vsel %vm826, %v821, 0
        %v915 = vsel %vm826, %v822, 0
        %v918 = vsel %vm826, %v823, 0
        %v921 = vsel %vm826, %v824, 0
        %923 = vmatpush.msra.mxu0 0.0
        %924 = vmatpush.msra.mxu0 0.0
        %925 = vmatpush.msra.mxu0 0.0
        %926 = vmatpush.msra.mxu0 0.0
        %927 = vmatpush.msra.mxu0 0.0
        %928 = vmatpush.msra.mxu0 0.0
        %929 = vmatpush.msra.mxu0 0.0
        %930 = vmatpush.msra.mxu0 0.0
        %931 = vmatpush.msra.mxu0 0.0
        %932 = vmatpush.msra.mxu0 0.0
        %933 = vmatpush.msra.mxu0 0.0
        %934 = vmatpush.msra.mxu0 0.0
        %935 = vmatpush.msra.mxu0 0.0
        %936 = vmatpush.msra.mxu0 0.0
        %937 = vmatpush.msra.mxu0 0.0
        %938 = vmatpush.msra.mxu0 %v825
        %939 = vmatmul.f32.gmra.mxu0 %v828
        %v940 = vpop.f32.mrf.mxu0
        %v941 = vadd.f32 0.0, %v940
        %942 = vmatmul.f32.gmra.mxu0 %v831
        %v943 = vpop.f32.mrf.mxu0
        %v944 = vadd.f32 0.0, %v943
        %945 = vmatmul.f32.gmra.mxu0 %v834
        %v946 = vpop.f32.mrf.mxu0
        %v947 = vadd.f32 0.0, %v946
        %948 = vmatmul.f32.gmra.mxu0 %v837
        %v949 = vpop.f32.mrf.mxu0
        %v950 = vadd.f32 0.0, %v949
        %951 = vmatmul.f32.gmra.mxu0 %v840
        %v952 = vpop.f32.mrf.mxu0
        %v953 = vadd.f32 0.0, %v952
        %954 = vmatmul.f32.gmra.mxu0 %v843
        %v955 = vpop.f32.mrf.mxu0
        %v956 = vadd.f32 0.0, %v955
        %957 = vmatmul.f32.gmra.mxu0 %v846
        %v958 = vpop.f32.mrf.mxu0
        %v959 = vadd.f32 0.0, %v958
        %960 = vmatmul.f32.gmra.mxu0 %v849
        %v961 = vpop.f32.mrf.mxu0
        %v962 = vadd.f32 0.0, %v961
        %963 = vmatmul.f32.gmra.mxu0 %v852
        %v964 = vpop.f32.mrf.mxu0
        %v965 = vadd.f32 0.0, %v964
        %966 = vmatmul.f32.gmra.mxu0 %v855
        %v967 = vpop.f32.mrf.mxu0
        %v968 = vadd.f32 0.0, %v967
        %969 = vmatmul.f32.gmra.mxu0 %v858
        %v970 = vpop.f32.mrf.mxu0
        %v971 = vadd.f32 0.0, %v970
        %972 = vmatmul.f32.gmra.mxu0 %v861
        %v973 = vpop.f32.mrf.mxu0
        %v974 = vadd.f32 0.0, %v973
        %975 = vmatmul.f32.gmra.mxu0 %v864
        %v976 = vpop.f32.mrf.mxu0
        %v977 = vadd.f32 0.0, %v976
        %978 = vmatmul.f32.gmra.mxu0 %v867
        %v979 = vpop.f32.mrf.mxu0
        %v980 = vadd.f32 0.0, %v979
        %981 = vmatmul.f32.gmra.mxu0 %v870
        %v982 = vpop.f32.mrf.mxu0
        %v983 = vadd.f32 0.0, %v982
        %984 = vmatmul.f32.gmra.mxu0 %v873
        %v985 = vpop.f32.mrf.mxu0
        %v986 = vadd.f32 0.0, %v985
        %987 = vmatmul.f32.gmra.mxu0 %v876
        %v988 = vpop.f32.mrf.mxu0
        %v989 = vadd.f32 0.0, %v988
        %990 = vmatmul.f32.gmra.mxu0 %v879
        %v991 = vpop.f32.mrf.mxu0
        %v992 = vadd.f32 0.0, %v991
        %993 = vmatmul.f32.gmra.mxu0 %v882
        %v994 = vpop.f32.mrf.mxu0
        %v995 = vadd.f32 0.0, %v994
        %996 = vmatmul.f32.gmra.mxu0 %v885
        %v997 = vpop.f32.mrf.mxu0
        %v998 = vadd.f32 0.0, %v997
        %999 = vmatmul.f32.gmra.mxu0 %v888
        %v1000 = vpop.f32.mrf.mxu0
        %v1001 = vadd.f32 0.0, %v1000
        %1002 = vmatmul.f32.gmra.mxu0 %v891
        %v1003 = vpop.f32.mrf.mxu0
        %v1004 = vadd.f32 0.0, %v1003
        %1005 = vmatmul.f32.gmra.mxu0 %v894
        %v1006 = vpop.f32.mrf.mxu0
        %v1007 = vadd.f32 0.0, %v1006
        %1008 = vmatmul.f32.gmra.mxu0 %v897
        %v1009 = vpop.f32.mrf.mxu0
        %v1010 = vadd.f32 0.0, %v1009
        %1011 = vmatmul.f32.gmra.mxu0 %v900
        %v1012 = vpop.f32.mrf.mxu0
        %v1013 = vadd.f32 0.0, %v1012
        %1014 = vmatmul.f32.gmra.mxu0 %v903
        %v1015 = vpop.f32.mrf.mxu0
        %v1016 = vadd.f32 0.0, %v1015
        %1017 = vmatmul.f32.gmra.mxu0 %v906
        %v1018 = vpop.f32.mrf.mxu0
        %v1019 = vadd.f32 0.0, %v1018
        %1020 = vmatmul.f32.gmra.mxu0 %v909
        %v1021 = vpop.f32.mrf.mxu0
        %v1022 = vadd.f32 0.0, %v1021
        %1023 = vmatmul.f32.gmra.mxu0 %v912
        %v1024 = vpop.f32.mrf.mxu0
        %v1025 = vadd.f32 0.0, %v1024
        %1026 = vmatmul.f32.gmra.mxu0 %v915
        %v1027 = vpop.f32.mrf.mxu0
        %v1028 = vadd.f32 0.0, %v1027
        %1029 = vmatmul.f32.gmra.mxu0 %v918
        %v1030 = vpop.f32.mrf.mxu0
        %v1031 = vadd.f32 0.0, %v1030
        %1032 = vmatmul.f32.gmra.mxu0 %v921
        %v1033 = vpop.f32.mrf.mxu0
        %v1034 = vadd.f32 0.0, %v1033
        %1035 = vdwg.mxu0
        %v1036 = vmul.f32 %v941, 0.75
        %v1037 = vmul.f32 %v944, 0.75
        %v1038 = vmul.f32 %v947, 0.75
        %v1039 = vmul.f32 %v950, 0.75
        %v1040 = vmul.f32 %v941, 0.25
        %v1041 = vmul.f32 %v944, 0.25
        %v1042 = vmul.f32 %v947, 0.25
        %v1043 = vmul.f32 %v950, 0.25
        %v1044 = vadd.f32 %v1036, %v1040
        %v1045 = vadd.f32 %v1037, %v1041
        %v1046 = vadd.f32 %v1038, %v1042
        %v1047 = vadd.f32 %v1039, %v1043
        %v1048 = vmul.f32 %v953, 0.25
        %v1049 = vmul.f32 %v956, 0.25
        %v1050 = vmul.f32 %v959, 0.25
        %v1051 = vmul.f32 %v962, 0.25
        %v1052 = vadd.f32 %v1036, %v1048
        %v1053 = vadd.f32 %v1037, %v1049
        %v1054 = vadd.f32 %v1038, %v1050
        %v1055 = vadd.f32 %v1039, %v1051
        %v1056 = vmul.f32 %v953, 0.75
        %v1057 = vmul.f32 %v956, 0.75
        %v1058 = vmul.f32 %v959, 0.75
        %v1059 = vmul.f32 %v962, 0.75
        %v1060 = vadd.f32 %v1056, %v1040
        %v1061 = vadd.f32 %v1057, %v1041
        %v1062 = vadd.f32 %v1058, %v1042
        %v1063 = vadd.f32 %v1059, %v1043
        %v1064 = vmul.f32 %v965, 0.25
        %v1065 = vmul.f32 %v968, 0.25
        %v1066 = vmul.f32 %v971, 0.25
        %v1067 = vmul.f32 %v974, 0.25
        %v1068 = vadd.f32 %v1056, %v1064
        %v1069 = vadd.f32 %v1057, %v1065
        %v1070 = vadd.f32 %v1058, %v1066
        %v1071 = vadd.f32 %v1059, %v1067
        %v1072 = vmul.f32 %v965, 0.75
        %v1073 = vmul.f32 %v968, 0.75
        %v1074 = vmul.f32 %v971, 0.75
        %v1075 = vmul.f32 %v974, 0.75
        %v1076 = vadd.f32 %v1072, %v1048
        %v1077 = vadd.f32 %v1073, %v1049
        %v1078 = vadd.f32 %v1074, %v1050
        %v1079 = vadd.f32 %v1075, %v1051
        %v1080 = vmul.f32 %v977, 0.25
        %v1081 = vmul.f32 %v980, 0.25
        %v1082 = vmul.f32 %v983, 0.25
        %v1083 = vmul.f32 %v986, 0.25
        %v1084 = vadd.f32 %v1072, %v1080
        %v1085 = vadd.f32 %v1073, %v1081
        %v1086 = vadd.f32 %v1074, %v1082
        %v1087 = vadd.f32 %v1075, %v1083
        %v1088 = vmul.f32 %v977, 0.75
        %v1089 = vmul.f32 %v980, 0.75
        %v1090 = vmul.f32 %v983, 0.75
        %v1091 = vmul.f32 %v986, 0.75
        %v1092 = vadd.f32 %v1088, %v1064
        %v1093 = vadd.f32 %v1089, %v1065
        %v1094 = vadd.f32 %v1090, %v1066
        %v1095 = vadd.f32 %v1091, %v1067
        %v1096 = vmul.f32 %v989, 0.25
        %v1097 = vmul.f32 %v992, 0.25
        %v1098 = vmul.f32 %v995, 0.25
        %v1099 = vmul.f32 %v998, 0.25
        %v1100 = vadd.f32 %v1088, %v1096
        %v1101 = vadd.f32 %v1089, %v1097
        %v1102 = vadd.f32 %v1090, %v1098
        %v1103 = vadd.f32 %v1091, %v1099
        %v1104 = vmul.f32 %v989, 0.75
        %v1105 = vmul.f32 %v992, 0.75
        %v1106 = vmul.f32 %v995, 0.75
        %v1107 = vmul.f32 %v998, 0.75
        %v1108 = vadd.f32 %v1104, %v1080
        %v1109 = vadd.f32 %v1105, %v1081
        %v1110 = vadd.f32 %v1106, %v1082
        %v1111 = vadd.f32 %v1107, %v1083
        %v1112 = vmul.f32 %v1001, 0.25
        %v1113 = vmul.f32 %v1004, 0.25
        %v1114 = vmul.f32 %v1007, 0.25
        %v1115 = vmul.f32 %v1010, 0.25
        %v1116 = vadd.f32 %v1104, %v1112
        %v1117 = vadd.f32 %v1105, %v1113
        %v1118 = vadd.f32 %v1106, %v1114
        %v1119 = vadd.f32 %v1107, %v1115
        %v1120 = vmul.f32 %v1001, 0.75
        %v1121 = vmul.f32 %v1004, 0.75
        %v1122 = vmul.f32 %v1007, 0.75
        %v1123 = vmul.f32 %v1010, 0.75
        %v1124 = vadd.f32 %v1120, %v1096
        %v1125 = vadd.f32 %v1121, %v1097
        %v1126 = vadd.f32 %v1122, %v1098
        %v1127 = vadd.f32 %v1123, %v1099
        %v1128 = vmul.f32 %v1013, 0.25
        %v1129 = vmul.f32 %v1016, 0.25
        %v1130 = vmul.f32 %v1019, 0.25
        %v1131 = vmul.f32 %v1022, 0.25
        %v1132 = vadd.f32 %v1120, %v1128
        %v1133 = vadd.f32 %v1121, %v1129
        %v1134 = vadd.f32 %v1122, %v1130
        %v1135 = vadd.f32 %v1123, %v1131
        %v1136 = vmul.f32 %v1013, 0.75
        %v1137 = vmul.f32 %v1016, 0.75
        %v1138 = vmul.f32 %v1019, 0.75
        %v1139 = vmul.f32 %v1022, 0.75
        %v1140 = vadd.f32 %v1136, %v1112
        %v1141 = vadd.f32 %v1137, %v1113
        %v1142 = vadd.f32 %v1138, %v1114
        %v1143 = vadd.f32 %v1139, %v1115
        %v1144 = vmul.f32 %v1025, 0.25
        %v1145 = vmul.f32 %v1028, 0.25
        %v1146 = vmul.f32 %v1031, 0.25
        %v1147 = vmul.f32 %v1034, 0.25
        %v1148 = vadd.f32 %v1136, %v1144
        %v1149 = vadd.f32 %v1137, %v1145
        %v1150 = vadd.f32 %v1138, %v1146
        %v1151 = vadd.f32 %v1139, %v1147
        %v1152 = vmul.f32 %v1025, 0.75
        %v1153 = vmul.f32 %v1028, 0.75
        %v1154 = vmul.f32 %v1031, 0.75
        %v1155 = vmul.f32 %v1034, 0.75
        %v1156 = vadd.f32 %v1152, %v1128
        %v1157 = vadd.f32 %v1153, %v1129
        %v1158 = vadd.f32 %v1154, %v1130
        %v1159 = vadd.f32 %v1155, %v1131
        %v1160 = vadd.f32 %v1152, %v1144
        %v1161 = vadd.f32 %v1153, %v1145
        %v1162 = vadd.f32 %v1154, %v1146
        %v1163 = vadd.f32 %v1155, %v1147
        %1168 = vrot.lane.b32.xlu0 %v1052, 16
        %v1169 = vpop.permute.xlu0 %1168
        %1170 = vrot.lane.b32.xlu0 %v1053, 16
        %v1171 = vpop.permute.xlu0 %1170
        %1172 = vrot.lane.b32.xlu0 %v1054, 16
        %v1173 = vpop.permute.xlu0 %1172
        %1174 = vrot.lane.b32.xlu0 %v1055, 16
        %v1175 = vpop.permute.xlu0 %1174
        %1184 = vrot.lane.b32.xlu0 %v1060, 32
        %v1185 = vpop.permute.xlu0 %1184
        %1186 = vrot.lane.b32.xlu0 %v1061, 32
        %v1187 = vpop.permute.xlu0 %1186
        %1188 = vrot.lane.b32.xlu0 %v1062, 32
        %v1189 = vpop.permute.xlu0 %1188
        %1190 = vrot.lane.b32.xlu0 %v1063, 32
        %v1191 = vpop.permute.xlu0 %1190
        %1200 = vrot.lane.b32.xlu0 %v1068, 48
        %v1201 = vpop.permute.xlu0 %1200
        %1202 = vrot.lane.b32.xlu0 %v1069, 48
        %v1203 = vpop.permute.xlu0 %1202
        %1204 = vrot.lane.b32.xlu0 %v1070, 48
        %v1205 = vpop.permute.xlu0 %1204
        %1206 = vrot.lane.b32.xlu0 %v1071, 48
        %v1207 = vpop.permute.xlu0 %1206
        %1216 = vrot.lane.b32.xlu0 %v1076, 64
        %v1217 = vpop.permute.xlu0 %1216
        %1218 = vrot.lane.b32.xlu0 %v1077, 64
        %v1219 = vpop.permute.xlu0 %1218
        %1220 = vrot.lane.b32.xlu0 %v1078, 64
        %v1221 = vpop.permute.xlu0 %1220
        %1222 = vrot.lane.b32.xlu0 %v1079, 64
        %v1223 = vpop.permute.xlu0 %1222
        %1232 = vrot.lane.b32.xlu0 %v1084, 80
        %v1233 = vpop.permute.xlu0 %1232
        %1234 = vrot.lane.b32.xlu0 %v1085, 80
        %v1235 = vpop.permute.xlu0 %1234
        %1236 = vrot.lane.b32.xlu0 %v1086, 80
        %v1237 = vpop.permute.xlu0 %1236
        %1238 = vrot.lane.b32.xlu0 %v1087, 80
        %v1239 = vpop.permute.xlu0 %1238
        %1248 = vrot.lane.b32.xlu0 %v1092, 96
        %v1249 = vpop.permute.xlu0 %1248
        %1250 = vrot.lane.b32.xlu0 %v1093, 96
        %v1251 = vpop.permute.xlu0 %1250
        %1252 = vrot.lane.b32.xlu0 %v1094, 96
        %v1253 = vpop.permute.xlu0 %1252
        %1254 = vrot.lane.b32.xlu0 %v1095, 96
        %v1255 = vpop.permute.xlu0 %1254
        %1264 = vrot.lane.b32.xlu0 %v1100, 112
        %v1265 = vpop.permute.xlu0 %1264
        %1266 = vrot.lane.b32.xlu0 %v1101, 112
        %v1267 = vpop.permute.xlu0 %1266
        %1268 = vrot.lane.b32.xlu0 %v1102, 112
        %v1269 = vpop.permute.xlu0 %1268
        %1270 = vrot.lane.b32.xlu0 %v1103, 112
        %v1271 = vpop.permute.xlu0 %1270
        %1280 = vrot.lane.b32.xlu0 %v1116, 16
        %v1281 = vpop.permute.xlu0 %1280
        %1282 = vrot.lane.b32.xlu0 %v1117, 16
        %v1283 = vpop.permute.xlu0 %1282
        %1284 = vrot.lane.b32.xlu0 %v1118, 16
        %v1285 = vpop.permute.xlu0 %1284
        %1286 = vrot.lane.b32.xlu0 %v1119, 16
        %v1287 = vpop.permute.xlu0 %1286
        %1296 = vrot.lane.b32.xlu0 %v1124, 32
        %v1297 = vpop.permute.xlu0 %1296
        %1298 = vrot.lane.b32.xlu0 %v1125, 32
        %v1299 = vpop.permute.xlu0 %1298
        %1300 = vrot.lane.b32.xlu0 %v1126, 32
        %v1301 = vpop.permute.xlu0 %1300
        %1302 = vrot.lane.b32.xlu0 %v1127, 32
        %v1303 = vpop.permute.xlu0 %1302
        %1312 = vrot.lane.b32.xlu0 %v1132, 48
        %v1313 = vpop.permute.xlu0 %1312
        %1314 = vrot.lane.b32.xlu0 %v1133, 48
        %v1315 = vpop.permute.xlu0 %1314
        %1316 = vrot.lane.b32.xlu0 %v1134, 48
        %v1317 = vpop.permute.xlu0 %1316
        %1318 = vrot.lane.b32.xlu0 %v1135, 48
        %v1319 = vpop.permute.xlu0 %1318
        %1328 = vrot.lane.b32.xlu0 %v1140, 64
        %v1329 = vpop.permute.xlu0 %1328
        %1330 = vrot.lane.b32.xlu0 %v1141, 64
        %v1331 = vpop.permute.xlu0 %1330
        %1332 = vrot.lane.b32.xlu0 %v1142, 64
        %v1333 = vpop.permute.xlu0 %1332
        %1334 = vrot.lane.b32.xlu0 %v1143, 64
        %v1335 = vpop.permute.xlu0 %1334
        %1344 = vrot.lane.b32.xlu0 %v1148, 80
        %v1345 = vpop.permute.xlu0 %1344
        %1346 = vrot.lane.b32.xlu0 %v1149, 80
        %v1347 = vpop.permute.xlu0 %1346
        %1348 = vrot.lane.b32.xlu0 %v1150, 80
        %v1349 = vpop.permute.xlu0 %1348
        %1350 = vrot.lane.b32.xlu0 %v1151, 80
        %v1351 = vpop.permute.xlu0 %1350
        %1360 = vrot.lane.b32.xlu0 %v1156, 96
        %v1361 = vpop.permute.xlu0 %1360
        %1362 = vrot.lane.b32.xlu0 %v1157, 96
        %v1363 = vpop.permute.xlu0 %1362
        %1364 = vrot.lane.b32.xlu0 %v1158, 96
        %v1365 = vpop.permute.xlu0 %1364
        %1366 = vrot.lane.b32.xlu0 %v1159, 96
        %v1367 = vpop.permute.xlu0 %1366
        %1376 = vrot.lane.b32.xlu0 %v1160, 112
        %v1377 = vpop.permute.xlu0 %1376
        %1378 = vrot.lane.b32.xlu0 %v1161, 112
        %v1379 = vpop.permute.xlu0 %1378
        %1380 = vrot.lane.b32.xlu0 %v1162, 112
        %v1381 = vpop.permute.xlu0 %1380
        %1382 = vrot.lane.b32.xlu0 %v1163, 112
        %v1383 = vpop.permute.xlu0 %1382
        %vm1388 = vcmask 130048
        %v1389 = vsel %vm1388, %v1044, %v1169
        %v1390 = vsel %vm1388, %v1045, %v1171
        %v1391 = vsel %vm1388, %v1046, %v1173
        %v1392 = vsel %vm1388, %v1047, %v1175
        %v1393 = vsel %vm564, %v1389, %v1185
        %v1394 = vsel %vm564, %v1390, %v1187
        %v1395 = vsel %vm564, %v1391, %v1189
        %v1396 = vsel %vm564, %v1392, %v1191
        %vm1397 = vcmask 392192
        %v1398 = vsel %vm1397, %v1393, %v1201
        %v1399 = vsel %vm1397, %v1394, %v1203
        %v1400 = vsel %vm1397, %v1395, %v1205
        %v1401 = vsel %vm1397, %v1396, %v1207
        %vm1402 = vcmask 523264
        %v1403 = vsel %vm1402, %v1398, %v1217
        %v1404 = vsel %vm1402, %v1399, %v1219
        %v1405 = vsel %vm1402, %v1400, %v1221
        %v1406 = vsel %vm1402, %v1401, %v1223
        %vm1407 = vcmask 654336
        %v1408 = vsel %vm1407, %v1403, %v1233
        %v1409 = vsel %vm1407, %v1404, %v1235
        %v1410 = vsel %vm1407, %v1405, %v1237
        %v1411 = vsel %vm1407, %v1406, %v1239
        %vm1412 = vcmask 785408
        %v1413 = vsel %vm1412, %v1408, %v1249
        %v1414 = vsel %vm1412, %v1409, %v1251
        %v1415 = vsel %vm1412, %v1410, %v1253
        %v1416 = vsel %vm1412, %v1411, %v1255
        %vm1417 = vcmask 916480
        %v1418 = vsel %vm1417, %v1413, %v1265
        %v1419 = vsel %vm1417, %v1414, %v1267
        %v1420 = vsel %vm1417, %v1415, %v1269
        %v1421 = vsel %vm1417, %v1416, %v1271
        %v1422 = vsel %vm1388, %v1108, %v1281
        %v1423 = vsel %vm1388, %v1109, %v1283
        %v1424 = vsel %vm1388, %v1110, %v1285
        %v1425 = vsel %vm1388, %v1111, %v1287
        %v1426 = vsel %vm564, %v1422, %v1297
        %v1427 = vsel %vm564, %v1423, %v1299
        %v1428 = vsel %vm564, %v1424, %v1301
        %v1429 = vsel %vm564, %v1425, %v1303
        %v1430 = vsel %vm1397, %v1426, %v1313
        %v1431 = vsel %vm1397, %v1427, %v1315
        %v1432 = vsel %vm1397, %v1428, %v1317
        %v1433 = vsel %vm1397, %v1429, %v1319
        %v1434 = vsel %vm1402, %v1430, %v1329
        %v1435 = vsel %vm1402, %v1431, %v1331
        %v1436 = vsel %vm1402, %v1432, %v1333
        %v1437 = vsel %vm1402, %v1433, %v1335
        %v1438 = vsel %vm1407, %v1434, %v1345
        %v1439 = vsel %vm1407, %v1435, %v1347
        %v1440 = vsel %vm1407, %v1436, %v1349
        %v1441 = vsel %vm1407, %v1437, %v1351
        %v1442 = vsel %vm1412, %v1438, %v1361
        %v1443 = vsel %vm1412, %v1439, %v1363
        %v1444 = vsel %vm1412, %v1440, %v1365
        %v1445 = vsel %vm1412, %v1441, %v1367
        %v1446 = vsel %vm1417, %v1442, %v1377
        %v1447 = vsel %vm1417, %v1443, %v1379
        %v1448 = vsel %vm1417, %v1444, %v1381
        %v1449 = vsel %vm1417, %v1445, %v1383
        %v1450 = vmax.f32 %v785, %v789
        %v1451 = vmax.f32 %v787, %v791
        %v1452 = vmax.f32 %v1450, %v1451
        %v1453 = vrot.slane %v1452, 4
        %v1454 = vmax.f32 %v1452, %v1453
        %v1455 = vrot.slane %v1454, 2
        %v1456 = vmax.f32 %v1454, %v1455
        %v1457 = vrot.slane %v1456, 1
        %v1458 = vmax.f32 %v1456, %v1457
        %v1459 = vmax.f32 %v786, %v790
        %v1460 = vmax.f32 %v788, %v792
        %v1461 = vmax.f32 %v1459, %v1460
        %v1462 = vrot.slane %v1461, 4
        %v1463 = vmax.f32 %v1461, %v1462
        %v1464 = vrot.slane %v1463, 2
        %v1465 = vmax.f32 %v1463, %v1464
        %v1466 = vrot.slane %v1465, 1
        %v1467 = vmax.f32 %v1465, %v1466
        %v1468 = vadd.f32 %v785, %v787
        %v1469 = vadd.f32 %v1468, %v789
        %v1470 = vadd.f32 %v1469, %v791
        %v1471 = vrot.slane %v1470, 4
        %v1472 = vadd.f32 %v1470, %v1471
        %v1473 = vrot.slane %v1472, 2
        %v1474 = vadd.f32 %v1472, %v1473
        %v1475 = vrot.slane %v1474, 1
        %v1476 = vadd.f32 %v1474, %v1475
        %v1477 = vadd.f32 %v786, %v788
        %v1478 = vadd.f32 %v1477, %v790
        %v1479 = vadd.f32 %v1478, %v792
        %v1480 = vrot.slane %v1479, 4
        %v1481 = vadd.f32 %v1479, %v1480
        %v1482 = vrot.slane %v1481, 2
        %v1483 = vadd.f32 %v1481, %v1482
        %v1484 = vrot.slane %v1483, 1
        %v1485 = vadd.f32 %v1483, %v1484
        %v1486 = vmul.f32 %v1476, 0.03125
        %v1487 = vmul.f32 %v1485, 0.03125
        %v1488 = vlaneseq
        %vm1489 = vcmp.ge.s32.totalorder %v1488, 0
        %vm1490 = vcmp.lt.s32.totalorder %v1488, 128
        %vm1491 = vmand %vm1489, %vm1490
        %1492 = vst.msk [vmem:[#allocation2] sm:$0x1] %vm1491, 0.0
        %1493 = vst.msk [vmem:[#allocation2 + $0x3] sm:$0x1] %vm1491, 0.0
        %1494 = vst.msk [vmem:[#allocation3] sm:$0x1] %vm1491, 0.0
        %1495 = vst.msk [vmem:[#allocation3 + $0x3] sm:$0x1] %vm1491, 0.0
        %v1498 = vrot.slane %v1467, 7
        %vm1499 = vcmask 1040384
        %v1500 = vsel %vm1499, %v1458, %v1498
        %vm1502 = vcmp.lt.s32.totalorder %v1488, 256
        %vm1503 = vmand %vm1489, %vm1502
        %1504 = vst.msk [vmem:[#allocation2 + $0x1] sm:$0x3] %vm1503, %v1500
        %v1507 = vrot.slane %v1487, 7
        %v1508 = vsel %vm1499, %v1486, %v1507
        %1510 = vst.msk [vmem:[#allocation3 + $0x1] sm:$0x3] %vm1503, %v1508
        %s1511 = sld [smem:[#allocation6]]
        %s1512 = sld [smem:[#allocation6 + $0x1]]
        %s1513 = sld [smem:[#allocation6 + $0x2]]
        %s1514 = sld [smem:[#allocation6 + $0x3]]
        %s1515 = sld [smem:[#allocation6 + $0x4]]
        %s1516 = sld [smem:[#allocation6 + $0x5]]
        %s1517 = sld [smem:[#allocation6 + $0x6]]
        %s1518 = sld [smem:[#allocation6 + $0x7]]
        %s1519 = sld [smem:[#allocation6 + $0x8]]
        %s1520 = sld [smem:[#allocation6 + $0x9]]
        %s1521 = sld [smem:[#allocation6 + $0xa]]
        %s1522 = sld [smem:[#allocation6 + $0xb]]
        %s1523 = sld [smem:[#allocation6 + $0xc]]
        %s1524 = sld [smem:[#allocation6 + $0xd]]
        %s1525 = sld [smem:[#allocation6 + $0xe]]
        %s1526 = sld [smem:[#allocation6 + $0xf]]
        %s1527 = sld [smem:[#allocation6 + $0x10]]
        %s1528 = sld [smem:[#allocation6 + $0x11]]
        %s1529 = sld [smem:[#allocation6 + $0x12]]
        %s1530 = sld [smem:[#allocation6 + $0x13]]
        %s1531 = sld [smem:[#allocation6 + $0x14]]
        %s1532 = sld [smem:[#allocation6 + $0x15]]
        %s1533 = sld [smem:[#allocation6 + $0x16]]
        %s1534 = sld [smem:[#allocation6 + $0x17]]
        %s1535 = sld [smem:[#allocation6 + $0x18]]
        %s1536 = sld [smem:[#allocation6 + $0x19]]
        %s1537 = sld [smem:[#allocation6 + $0x1a]]
        %s1538 = sld [smem:[#allocation6 + $0x1b]]
        %s1539 = sld [smem:[#allocation6 + $0x1c]]
        %s1540 = sld [smem:[#allocation6 + $0x1d]]
        %s1541 = sld [smem:[#allocation6 + $0x1e]]
        %s1542 = sld [smem:[#allocation6 + $0x1f]]
        %s1543 = sld [smem:[#allocation6 + $0x20]]
        %s1544 = sld [smem:[#allocation6 + $0x21]]
        %s1545 = sld [smem:[#allocation6 + $0x22]]
        %s1546 = sld [smem:[#allocation6 + $0x23]]
        %s1547 = sld [smem:[#allocation6 + $0x24]]
        %s1548 = sld [smem:[#allocation6 + $0x25]]
        %s1549 = sld [smem:[#allocation6 + $0x26]]
        %s1550 = sld [smem:[#allocation6 + $0x27]]
        %s1551 = sld [smem:[#allocation6 + $0x28]]
        %s1552 = sld [smem:[#allocation6 + $0x29]]
        %s1553 = sld [smem:[#allocation6 + $0x2a]]
        %s1554 = sld [smem:[#allocation6 + $0x2b]]
        %s1555 = sld [smem:[#allocation6 + $0x2c]]
        %s1556 = sld [smem:[#allocation6 + $0x2d]]
        %s1557 = sld [smem:[#allocation6 + $0x2e]]
        %s1558 = sld [smem:[#allocation6 + $0x2f]]
        %s1559 = sld [smem:[#allocation6 + $0x30]]
        %s1560 = sld [smem:[#allocation6 + $0x31]]
        %s1561 = sld [smem:[#allocation6 + $0x32]]
        %s1562 = sld [smem:[#allocation6 + $0x33]]
        %s1563 = sld [smem:[#allocation6 + $0x34]]
        %s1564 = sld [smem:[#allocation6 + $0x35]]
        %s1565 = sld [smem:[#allocation6 + $0x36]]
        %s1566 = sld [smem:[#allocation6 + $0x37]]
        %s1567 = sld [smem:[#allocation6 + $0x38]]
        %s1568 = sld [smem:[#allocation6 + $0x39]]
        %s1569 = sld [smem:[#allocation6 + $0x3a]]
        %s1570 = sld [smem:[#allocation6 + $0x3b]]
        %s1571 = sld [smem:[#allocation6 + $0x3c]]
        %s1572 = sld [smem:[#allocation6 + $0x3d]]
        %s1573 = sld [smem:[#allocation6 + $0x3e]]
        %s1574 = sld [smem:[#allocation6 + $0x3f]]
        %s1575 = sld [smem:[#allocation6 + $0x40]]
        %s1576 = sld [smem:[#allocation6 + $0x41]]
        %s1577 = sld [smem:[#allocation6 + $0x42]]
        %s1578 = sld [smem:[#allocation6 + $0x43]]
        %s1579 = sld [smem:[#allocation6 + $0x44]]
        %s1580 = sld [smem:[#allocation6 + $0x45]]
        %s1581 = sld [smem:[#allocation6 + $0x46]]
        %s1582 = sld [smem:[#allocation6 + $0x47]]
        %s1583 = sld [smem:[#allocation6 + $0x48]]
        %s1584 = sld [smem:[#allocation6 + $0x49]]
        %s1585 = sld [smem:[#allocation6 + $0x4a]]
        %s1586 = sld [smem:[#allocation6 + $0x4b]]
        %s1587 = sld [smem:[#allocation6 + $0x4c]]
        %s1588 = sld [smem:[#allocation6 + $0x4d]]
        %s1589 = sld [smem:[#allocation6 + $0x4e]]
        %s1590 = sld [smem:[#allocation6 + $0x4f]]
        %s1591 = sld [smem:[#allocation6 + $0x50]]
        %s1592 = sld [smem:[#allocation6 + $0x51]]
        %s1593 = sld [smem:[#allocation6 + $0x52]]
        %s1594 = sld [smem:[#allocation6 + $0x53]]
        %s1595 = sld [smem:[#allocation6 + $0x54]]
        %s1596 = sld [smem:[#allocation6 + $0x55]]
        %s1597 = sld [smem:[#allocation6 + $0x56]]
        %s1598 = sld [smem:[#allocation6 + $0x57]]
        %s1599 = sld [smem:[#allocation6 + $0x58]]
        %s1600 = sld [smem:[#allocation6 + $0x59]]
        %s1601 = sld [smem:[#allocation6 + $0x5a]]
        %s1602 = sld [smem:[#allocation6 + $0x5b]]
        %s1603 = sld [smem:[#allocation6 + $0x5c]]
        %s1604 = sld [smem:[#allocation6 + $0x5d]]
        %s1605 = sld [smem:[#allocation6 + $0x5e]]
        %s1606 = sld [smem:[#allocation6 + $0x5f]]
        %s1607 = sld [smem:[#allocation6 + $0x60]]
        %s1608 = sld [smem:[#allocation6 + $0x61]]
        %v1609 = vlaneseq
        %v1610 = vand.u32 %v1609, 127
        %v1611 = vadd.s32 %v1610, 128
        %vm1612 = vcmp.lt.s32.totalorder %v1610, 0
        %v1613 = vsub.s32 0, %v1610
        %v1614 = vsel %vm1612, %v1613, %v1610
        %v1615 = vshrl.u32 %v1614, 4
        %v1616 = vand.u32 %v1614, 15
        %v1617 = vsub.s32 0, %v1616
        %v1618 = vsel %vm1612, %v1617, %v1616
        %vm1619 = vcmp.lt.s32.totalorder %v1611, 0
        %v1620 = vsub.s32 0, %v1611
        %v1621 = vsel %vm1619, %v1620, %v1611
        %v1622 = vshrl.u32 %v1621, 4
        %v1623 = vand.u32 %v1621, 15
        %v1624 = vsub.s32 0, %v1623
        %v1625 = vsel %vm1619, %v1624, %v1623
        %vm1626 = vcmp.ne.s32.totalorder %v1618, 0
        %vm1627 = vcmp.ne.s32.totalorder %v1625, 0
        %vm1628 = vcmp.lt.s32.totalorder %v1618, 0
        %vm1629 = vcmp.lt.s32.totalorder %v1625, 0
        %vm1630 = vmand %vm1628, %vm1626
        %vm1631 = vmand %vm1629, %vm1627
        %v1632 = vadd.s32 %v1618, 16
        %v1633 = vadd.s32 %v1625, 16
        %v1634 = vsel %vm1630, %v1632, %v1618
        %v1635 = vsel %vm1631, %v1633, %v1625
        %v1636 = vld [vmem:[#allocation2] sm:$0x7]
        %v1637 = vstv %s1511
        %v1638 = vmul.f32 %v1637, %v1636
        %v1639 = vstv %s1518
        %v1640 = vmul.f32 %v1639, %v1636
        %v1641 = vstv %s1525
        %v1642 = vmul.f32 %v1641, %v1636
        %v1643 = vstv %s1532
        %v1644 = vmul.f32 %v1643, %v1636
        %v1645 = vld [vmem:[#allocation2 + $0x1] sm:$0x7]
        %v1646 = vstv %s1539
        %v1647 = vmul.f32 %v1646, %v1645
        %v1648 = vstv %s1546
        %v1649 = vmul.f32 %v1648, %v1645
        %v1650 = vstv %s1553
        %v1651 = vmul.f32 %v1650, %v1645
        %1653 = vrot.lane.b32.xlu0 %v1640, 112
        %v1654 = vpop.permute.xlu0 %1653
        %v1655 = vrot.slane %v1654, 1
        %v1656 = vsel %vm1417, %v1654, %v1655
        %v1658 = vadd.f32 %v1638, %v1656
        %1660 = vrot.lane.b32.xlu0 %v1644, 112
        %v1661 = vpop.permute.xlu0 %1660
        %v1662 = vrot.slane %v1661, 1
        %v1663 = vsel %vm1417, %v1661, %v1662
        %v1665 = vadd.f32 %v1642, %v1663
        %1667 = vrot.lane.b32.xlu0 %v1649, 112
        %v1668 = vpop.permute.xlu0 %1667
        %v1669 = vrot.slane %v1668, 1
        %v1670 = vsel %vm1417, %v1668, %v1669
        %v1672 = vadd.f32 %v1647, %v1670
        %1674 = vrot.lane.b32.xlu0 %v1665, 96
        %v1675 = vpop.permute.xlu0 %1674
        %v1676 = vrot.slane %v1675, 1
        %v1677 = vsel %vm1412, %v1675, %v1676
        %v1679 = vadd.f32 %v1658, %v1677
        %1681 = vrot.lane.b32.xlu0 %v1651, 96
        %v1682 = vpop.permute.xlu0 %1681
        %v1683 = vrot.slane %v1682, 1
        %v1684 = vsel %vm1412, %v1682, %v1683
        %v1686 = vadd.f32 %v1672, %v1684
        %1688 = vrot.lane.b32.xlu0 %v1686, 64
        %v1689 = vpop.permute.xlu0 %1688
        %v1690 = vrot.slane %v1689, 7
        %v1691 = vsel %vm1402, %v1690, %v1689
        %v1693 = vadd.f32 %v1679, %v1691
        %v1694 = vld [vmem:[#allocation3] sm:$0x7]
        %v1695 = vstv %s1560
        %v1696 = vmul.f32 %v1695, %v1694
        %v1697 = vstv %s1567
        %v1698 = vmul.f32 %v1697, %v1694
        %v1699 = vstv %s1574
        %v1700 = vmul.f32 %v1699, %v1694
        %v1701 = vstv %s1581
        %v1702 = vmul.f32 %v1701, %v1694
        %v1703 = vld [vmem:[#allocation3 + $0x1] sm:$0x7]
        %v1704 = vstv %s1588
        %v1705 = vmul.f32 %v1704, %v1703
        %v1706 = vstv %s1595
        %v1707 = vmul.f32 %v1706, %v1703
        %v1708 = vstv %s1602
        %v1709 = vmul.f32 %v1708, %v1703
        %1711 = vrot.lane.b32.xlu0 %v1698, 112
        %v1712 = vpop.permute.xlu0 %1711
        %v1713 = vrot.slane %v1712, 1
        %v1714 = vsel %vm1417, %v1712, %v1713
        %v1716 = vadd.f32 %v1696, %v1714
        %1718 = vrot.lane.b32.xlu0 %v1702, 112
        %v1719 = vpop.permute.xlu0 %1718
        %v1720 = vrot.slane %v1719, 1
        %v1721 = vsel %vm1417, %v1719, %v1720
        %v1723 = vadd.f32 %v1700, %v1721
        %1725 = vrot.lane.b32.xlu0 %v1707, 112
        %v1726 = vpop.permute.xlu0 %1725
        %v1727 = vrot.slane %v1726, 1
        %v1728 = vsel %vm1417, %v1726, %v1727
        %v1730 = vadd.f32 %v1705, %v1728
        %1732 = vrot.lane.b32.xlu0 %v1723, 96
        %v1733 = vpop.permute.xlu0 %1732
        %v1734 = vrot.slane %v1733, 1
        %v1735 = vsel %vm1412, %v1733, %v1734
        %v1737 = vadd.f32 %v1716, %v1735
        %1739 = vrot.lane.b32.xlu0 %v1709, 96
        %v1740 = vpop.permute.xlu0 %1739
        %v1741 = vrot.slane %v1740, 1
        %v1742 = vsel %vm1412, %v1740, %v1741
        %v1744 = vadd.f32 %v1730, %v1742
        %1746 = vrot.lane.b32.xlu0 %v1744, 64
        %v1747 = vpop.permute.xlu0 %1746
        %v1748 = vrot.slane %v1747, 7
        %v1749 = vsel %vm1402, %v1748, %v1747
        %v1751 = vadd.f32 %v1737, %v1749
        %v1752 = vadd.f32 %v1693, %v1751
        %v1753 = vadd.s32 %v1634, 4294967293
        %v1754 = vadd.s32 %v1635, 4294967293
        %vm1755 = vcmp.ge.s32.totalorder %v1753, 0
        %vm1756 = vcmp.ge.s32.totalorder %v1754, 0
        %vm1757 = vcmp.lt.s32.totalorder %v1753, 16
        %vm1758 = vcmp.lt.s32.totalorder %v1754, 16
        %vm1759 = vmand %vm1755, %vm1757
        %vm1760 = vmand %vm1756, %vm1758
        %v1762 = vperm.slane %v1752, 0
        %v1763 = vperm.slane %v1752, 1
        %v1764 = vperm.slane %v1752, 2
        %1765 = vrot.lane.b32.xlu0 %v1762, 51
        %v1766 = vpop.permute.xlu0 %1765
        %1767 = vrot.lane.b32.xlu0 %v1763, 51
        %v1768 = vpop.permute.xlu0 %1767
        %1769 = vrot.lane.b32.xlu0 %v1764, 51
        %v1770 = vpop.permute.xlu0 %1769
        %vm1771 = vcmask 416768
        %v1772 = vsel %vm1771, %v1766, %v1768
        %v1773 = vsel %vm1771, %v1768, %v1770
        %v1776 = vsel %vm1759, %v1772, 0.0
        %v1777 = vsel %vm1760, %v1773, 0.0
        %v1778 = vadd.f32 %v1776, 0.0
        %v1779 = vadd.f32 %v1777, 0.0
        %v1780 = vstv %s1512
        %v1781 = vmul.f32 %v1780, %v1636
        %v1782 = vstv %s1519
        %v1783 = vmul.f32 %v1782, %v1636
        %v1784 = vstv %s1526
        %v1785 = vmul.f32 %v1784, %v1636
        %v1786 = vstv %s1533
        %v1787 = vmul.f32 %v1786, %v1636
        %v1788 = vstv %s1540
        %v1789 = vmul.f32 %v1788, %v1645
        %v1790 = vstv %s1547
        %v1791 = vmul.f32 %v1790, %v1645
        %v1792 = vstv %s1554
        %v1793 = vmul.f32 %v1792, %v1645
        %1795 = vrot.lane.b32.xlu0 %v1783, 112
        %v1796 = vpop.permute.xlu0 %1795
        %v1797 = vrot.slane %v1796, 1
        %v1798 = vsel %vm1417, %v1796, %v1797
        %v1800 = vadd.f32 %v1781, %v1798
        %1802 = vrot.lane.b32.xlu0 %v1787, 112
        %v1803 = vpop.permute.xlu0 %1802
        %v1804 = vrot.slane %v1803, 1
        %v1805 = vsel %vm1417, %v1803, %v1804
        %v1807 = vadd.f32 %v1785, %v1805
        %1809 = vrot.lane.b32.xlu0 %v1791, 112
        %v1810 = vpop.permute.xlu0 %1809
        %v1811 = vrot.slane %v1810, 1
        %v1812 = vsel %vm1417, %v1810, %v1811
        %v1814 = vadd.f32 %v1789, %v1812
        %1816 = vrot.lane.b32.xlu0 %v1807, 96
        %v1817 = vpop.permute.xlu0 %1816
        %v1818 = vrot.slane %v1817, 1
        %v1819 = vsel %vm1412, %v1817, %v1818
        %v1821 = vadd.f32 %v1800, %v1819
        %1823 = vrot.lane.b32.xlu0 %v1793, 96
        %v1824 = vpop.permute.xlu0 %1823
        %v1825 = vrot.slane %v1824, 1
        %v1826 = vsel %vm1412, %v1824, %v1825
        %v1828 = vadd.f32 %v1814, %v1826
        %1830 = vrot.lane.b32.xlu0 %v1828, 64
        %v1831 = vpop.permute.xlu0 %1830
        %v1832 = vrot.slane %v1831, 7
        %v1833 = vsel %vm1402, %v1832, %v1831
        %v1835 = vadd.f32 %v1821, %v1833
        %v1836 = vstv %s1561
        %v1837 = vmul.f32 %v1836, %v1694
        %v1838 = vstv %s1568
        %v1839 = vmul.f32 %v1838, %v1694
        %v1840 = vstv %s1575
        %v1841 = vmul.f32 %v1840, %v1694
        %v1842 = vstv %s1582
        %v1843 = vmul.f32 %v1842, %v1694
        %v1844 = vstv %s1589
        %v1845 = vmul.f32 %v1844, %v1703
        %v1846 = vstv %s1596
        %v1847 = vmul.f32 %v1846, %v1703
        %v1848 = vstv %s1603
        %v1849 = vmul.f32 %v1848, %v1703
        %1851 = vrot.lane.b32.xlu0 %v1839, 112
        %v1852 = vpop.permute.xlu0 %1851
        %v1853 = vrot.slane %v1852, 1
        %v1854 = vsel %vm1417, %v1852, %v1853
        %v1856 = vadd.f32 %v1837, %v1854
        %1858 = vrot.lane.b32.xlu0 %v1843, 112
        %v1859 = vpop.permute.xlu0 %1858
        %v1860 = vrot.slane %v1859, 1
        %v1861 = vsel %vm1417, %v1859, %v1860
        %v1863 = vadd.f32 %v1841, %v1861
        %1865 = vrot.lane.b32.xlu0 %v1847, 112
        %v1866 = vpop.permute.xlu0 %1865
        %v1867 = vrot.slane %v1866, 1
        %v1868 = vsel %vm1417, %v1866, %v1867
        %v1870 = vadd.f32 %v1845, %v1868
        %1872 = vrot.lane.b32.xlu0 %v1863, 96
        %v1873 = vpop.permute.xlu0 %1872
        %v1874 = vrot.slane %v1873, 1
        %v1875 = vsel %vm1412, %v1873, %v1874
        %v1877 = vadd.f32 %v1856, %v1875
        %1879 = vrot.lane.b32.xlu0 %v1849, 96
        %v1880 = vpop.permute.xlu0 %1879
        %v1881 = vrot.slane %v1880, 1
        %v1882 = vsel %vm1412, %v1880, %v1881
        %v1884 = vadd.f32 %v1870, %v1882
        %1886 = vrot.lane.b32.xlu0 %v1884, 64
        %v1887 = vpop.permute.xlu0 %1886
        %v1888 = vrot.slane %v1887, 7
        %v1889 = vsel %vm1402, %v1888, %v1887
        %v1891 = vadd.f32 %v1877, %v1889
        %v1892 = vadd.f32 %v1835, %v1891
        %v1893 = vadd.s32 %v1634, 4294967294
        %v1894 = vadd.s32 %v1635, 4294967294
        %vm1895 = vcmp.ge.s32.totalorder %v1893, 0
        %vm1896 = vcmp.ge.s32.totalorder %v1894, 0
        %vm1897 = vcmp.lt.s32.totalorder %v1893, 16
        %vm1898 = vcmp.lt.s32.totalorder %v1894, 16
        %vm1899 = vmand %vm1895, %vm1897
        %vm1900 = vmand %vm1896, %vm1898
        %v1902 = vperm.slane %v1892, 0
        %v1903 = vperm.slane %v1892, 1
        %v1904 = vperm.slane %v1892, 2
        %1905 = vrot.lane.b32.xlu0 %v1902, 50
        %v1906 = vpop.permute.xlu0 %1905
        %1907 = vrot.lane.b32.xlu0 %v1903, 50
        %v1908 = vpop.permute.xlu0 %1907
        %1909 = vrot.lane.b32.xlu0 %v1904, 50
        %v1910 = vpop.permute.xlu0 %1909
        %vm1911 = vcmask 408576
        %v1912 = vsel %vm1911, %v1906, %v1908
        %v1913 = vsel %vm1911, %v1908, %v1910
        %v1916 = vsel %vm1899, %v1912, 0.0
        %v1917 = vsel %vm1900, %v1913, 0.0
        %v1918 = vadd.f32 %v1916, 0.0
        %v1919 = vadd.f32 %v1917, 0.0
        %v1920 = vstv %s1513
        %v1921 = vmul.f32 %v1920, %v1636
        %v1922 = vstv %s1520
        %v1923 = vmul.f32 %v1922, %v1636
        %v1924 = vstv %s1527
        %v1925 = vmul.f32 %v1924, %v1636
        %v1926 = vstv %s1534
        %v1927 = vmul.f32 %v1926, %v1636
        %v1928 = vstv %s1541
        %v1929 = vmul.f32 %v1928, %v1645
        %v1930 = vstv %s1548
        %v1931 = vmul.f32 %v1930, %v1645
        %v1932 = vstv %s1555
        %v1933 = vmul.f32 %v1932, %v1645
        %1935 = vrot.lane.b32.xlu0 %v1923, 112
        %v1936 = vpop.permute.xlu0 %1935
        %v1937 = vrot.slane %v1936, 1
        %v1938 = vsel %vm1417, %v1936, %v1937
        %v1940 = vadd.f32 %v1921, %v1938
        %1942 = vrot.lane.b32.xlu0 %v1927, 112
        %v1943 = vpop.permute.xlu0 %1942
        %v1944 = vrot.slane %v1943, 1
        %v1945 = vsel %vm1417, %v1943, %v1944
        %v1947 = vadd.f32 %v1925, %v1945
        %1949 = vrot.lane.b32.xlu0 %v1931, 112
        %v1950 = vpop.permute.xlu0 %1949
        %v1951 = vrot.slane %v1950, 1
        %v1952 = vsel %vm1417, %v1950, %v1951
        %v1954 = vadd.f32 %v1929, %v1952
        %1956 = vrot.lane.b32.xlu0 %v1947, 96
        %v1957 = vpop.permute.xlu0 %1956
        %v1958 = vrot.slane %v1957, 1
        %v1959 = vsel %vm1412, %v1957, %v1958
        %v1961 = vadd.f32 %v1940, %v1959
        %1963 = vrot.lane.b32.xlu0 %v1933, 96
        %v1964 = vpop.permute.xlu0 %1963
        %v1965 = vrot.slane %v1964, 1
        %v1966 = vsel %vm1412, %v1964, %v1965
        %v1968 = vadd.f32 %v1954, %v1966
        %1970 = vrot.lane.b32.xlu0 %v1968, 64
        %v1971 = vpop.permute.xlu0 %1970
        %v1972 = vrot.slane %v1971, 7
        %v1973 = vsel %vm1402, %v1972, %v1971
        %v1975 = vadd.f32 %v1961, %v1973
        %v1976 = vstv %s1562
        %v1977 = vmul.f32 %v1976, %v1694
        %v1978 = vstv %s1569
        %v1979 = vmul.f32 %v1978, %v1694
        %v1980 = vstv %s1576
        %v1981 = vmul.f32 %v1980, %v1694
        %v1982 = vstv %s1583
        %v1983 = vmul.f32 %v1982, %v1694
        %v1984 = vstv %s1590
        %v1985 = vmul.f32 %v1984, %v1703
        %v1986 = vstv %s1597
        %v1987 = vmul.f32 %v1986, %v1703
        %v1988 = vstv %s1604
        %v1989 = vmul.f32 %v1988, %v1703
        %1991 = vrot.lane.b32.xlu0 %v1979, 112
        %v1992 = vpop.permute.xlu0 %1991
        %v1993 = vrot.slane %v1992, 1
        %v1994 = vsel %vm1417, %v1992, %v1993
        %v1996 = vadd.f32 %v1977, %v1994
        %1998 = vrot.lane.b32.xlu0 %v1983, 112
        %v1999 = vpop.permute.xlu0 %1998
        %v2000 = vrot.slane %v1999, 1
        %v2001 = vsel %vm1417, %v1999, %v2000
        %v2003 = vadd.f32 %v1981, %v2001
        %2005 = vrot.lane.b32.xlu0 %v1987, 112
        %v2006 = vpop.permute.xlu0 %2005
        %v2007 = vrot.slane %v2006, 1
        %v2008 = vsel %vm1417, %v2006, %v2007
        %v2010 = vadd.f32 %v1985, %v2008
        %2012 = vrot.lane.b32.xlu0 %v2003, 96
        %v2013 = vpop.permute.xlu0 %2012
        %v2014 = vrot.slane %v2013, 1
        %v2015 = vsel %vm1412, %v2013, %v2014
        %v2017 = vadd.f32 %v1996, %v2015
        %2019 = vrot.lane.b32.xlu0 %v1989, 96
        %v2020 = vpop.permute.xlu0 %2019
        %v2021 = vrot.slane %v2020, 1
        %v2022 = vsel %vm1412, %v2020, %v2021
        %v2024 = vadd.f32 %v2010, %v2022
        %2026 = vrot.lane.b32.xlu0 %v2024, 64
        %v2027 = vpop.permute.xlu0 %2026
        %v2028 = vrot.slane %v2027, 7
        %v2029 = vsel %vm1402, %v2028, %v2027
        %v2031 = vadd.f32 %v2017, %v2029
        %v2032 = vadd.f32 %v1975, %v2031
        %v2033 = vadd.s32 %v1634, 4294967295
        %v2034 = vadd.s32 %v1635, 4294967295
        %vm2035 = vcmp.ge.s32.totalorder %v2033, 0
        %vm2036 = vcmp.ge.s32.totalorder %v2034, 0
        %vm2037 = vcmp.lt.s32.totalorder %v2033, 16
        %vm2038 = vcmp.lt.s32.totalorder %v2034, 16
        %vm2039 = vmand %vm2035, %vm2037
        %vm2040 = vmand %vm2036, %vm2038
        %v2042 = vperm.slane %v2032, 0
        %v2043 = vperm.slane %v2032, 1
        %v2044 = vperm.slane %v2032, 2
        %2045 = vrot.lane.b32.xlu0 %v2042, 49
        %v2046 = vpop.permute.xlu0 %2045
        %2047 = vrot.lane.b32.xlu0 %v2043, 49
        %v2048 = vpop.permute.xlu0 %2047
        %2049 = vrot.lane.b32.xlu0 %v2044, 49
        %v2050 = vpop.permute.xlu0 %2049
        %vm2051 = vcmask 400384
        %v2052 = vsel %vm2051, %v2046, %v2048
        %v2053 = vsel %vm2051, %v2048, %v2050
        %v2056 = vsel %vm2039, %v2052, 0.0
        %v2057 = vsel %vm2040, %v2053, 0.0
        %v2058 = vadd.f32 %v2056, 0.0
        %v2059 = vadd.f32 %v2057, 0.0
        %v2060 = vstv %s1514
        %v2061 = vmul.f32 %v2060, %v1636
        %v2062 = vstv %s1521
        %v2063 = vmul.f32 %v2062, %v1636
        %v2064 = vstv %s1528
        %v2065 = vmul.f32 %v2064, %v1636
        %v2066 = vld [vmem:[#allocation2 + $0x1] sm:$0x3]
        %v2067 = vstv %s1535
        %v2068 = vmul.f32 %v2067, %v2066
        %v2069 = vstv %s1542
        %v2070 = vmul.f32 %v2069, %v1645
        %v2071 = vstv %s1549
        %v2072 = vmul.f32 %v2071, %v1645
        %v2073 = vstv %s1556
        %v2074 = vmul.f32 %v2073, %v1645
        %2076 = vrot.lane.b32.xlu0 %v2063, 112
        %v2077 = vpop.permute.xlu0 %2076
        %v2078 = vrot.slane %v2077, 1
        %v2079 = vsel %vm1417, %v2077, %v2078
        %v2081 = vadd.f32 %v2061, %v2079
        %2083 = vrot.lane.b32.xlu0 %v2068, 112
        %v2084 = vpop.permute.xlu0 %2083
        %v2085 = vrot.slane %v2084, 7
        %v2086 = vsel %vm1417, %v2085, %v2084
        %v2088 = vadd.f32 %v2065, %v2086
        %2090 = vrot.lane.b32.xlu0 %v2072, 112
        %v2091 = vpop.permute.xlu0 %2090
        %v2092 = vrot.slane %v2091, 1
        %v2093 = vsel %vm1417, %v2091, %v2092
        %v2095 = vadd.f32 %v2070, %v2093
        %2097 = vrot.lane.b32.xlu0 %v2088, 96
        %v2098 = vpop.permute.xlu0 %2097
        %v2099 = vrot.slane %v2098, 1
        %v2100 = vsel %vm1412, %v2098, %v2099
        %v2102 = vadd.f32 %v2081, %v2100
        %2104 = vrot.lane.b32.xlu0 %v2074, 96
        %v2105 = vpop.permute.xlu0 %2104
        %v2106 = vrot.slane %v2105, 1
        %v2107 = vsel %vm1412, %v2105, %v2106
        %v2109 = vadd.f32 %v2095, %v2107
        %2111 = vrot.lane.b32.xlu0 %v2109, 64
        %v2112 = vpop.permute.xlu0 %2111
        %v2113 = vrot.slane %v2112, 7
        %v2114 = vsel %vm1402, %v2113, %v2112
        %v2116 = vadd.f32 %v2102, %v2114
        %v2117 = vstv %s1563
        %v2118 = vmul.f32 %v2117, %v1694
        %v2119 = vstv %s1570
        %v2120 = vmul.f32 %v2119, %v1694
        %v2121 = vstv %s1577
        %v2122 = vmul.f32 %v2121, %v1694
        %v2123 = vld [vmem:[#allocation3 + $0x1] sm:$0x3]
        %v2124 = vstv %s1584
        %v2125 = vmul.f32 %v2124, %v2123
        %v2126 = vstv %s1591
        %v2127 = vmul.f32 %v2126, %v1703
        %v2128 = vstv %s1598
        %v2129 = vmul.f32 %v2128, %v1703
        %v2130 = vstv %s1605
        %v2131 = vmul.f32 %v2130, %v1703
        %2133 = vrot.lane.b32.xlu0 %v2120, 112
        %v2134 = vpop.permute.xlu0 %2133
        %v2135 = vrot.slane %v2134, 1
        %v2136 = vsel %vm1417, %v2134, %v2135
        %v2138 = vadd.f32 %v2118, %v2136
        %2140 = vrot.lane.b32.xlu0 %v2125, 112
        %v2141 = vpop.permute.xlu0 %2140
        %v2142 = vrot.slane %v2141, 7
        %v2143 = vsel %vm1417, %v2142, %v2141
        %v2145 = vadd.f32 %v2122, %v2143
        %2147 = vrot.lane.b32.xlu0 %v2129, 112
        %v2148 = vpop.permute.xlu0 %2147
        %v2149 = vrot.slane %v2148, 1
        %v2150 = vsel %vm1417, %v2148, %v2149
        %v2152 = vadd.f32 %v2127, %v2150
        %2154 = vrot.lane.b32.xlu0 %v2145, 96
        %v2155 = vpop.permute.xlu0 %2154
        %v2156 = vrot.slane %v2155, 1
        %v2157 = vsel %vm1412, %v2155, %v2156
        %v2159 = vadd.f32 %v2138, %v2157
        %2161 = vrot.lane.b32.xlu0 %v2131, 96
        %v2162 = vpop.permute.xlu0 %2161
        %v2163 = vrot.slane %v2162, 1
        %v2164 = vsel %vm1412, %v2162, %v2163
        %v2166 = vadd.f32 %v2152, %v2164
        %2168 = vrot.lane.b32.xlu0 %v2166, 64
        %v2169 = vpop.permute.xlu0 %2168
        %v2170 = vrot.slane %v2169, 7
        %v2171 = vsel %vm1402, %v2170, %v2169
        %v2173 = vadd.f32 %v2159, %v2171
        %v2174 = vadd.f32 %v2116, %v2173
        %v2175 = vadd.f32 %v2174, 0.0
        %v2176 = vstv %s1515
        %v2177 = vmul.f32 %v2176, %v1636
        %v2178 = vstv %s1522
        %v2179 = vmul.f32 %v2178, %v1636
        %v2180 = vstv %s1529
        %v2181 = vmul.f32 %v2180, %v1636
        %v2182 = vstv %s1536
        %v2183 = vmul.f32 %v2182, %v1645
        %v2184 = vstv %s1543
        %v2185 = vmul.f32 %v2184, %v1645
        %v2186 = vstv %s1550
        %v2187 = vmul.f32 %v2186, %v1645
        %v2188 = vstv %s1557
        %v2189 = vmul.f32 %v2188, %v1645
        %2191 = vrot.lane.b32.xlu0 %v2179, 112
        %v2192 = vpop.permute.xlu0 %2191
        %v2193 = vrot.slane %v2192, 1
        %v2194 = vsel %vm1417, %v2192, %v2193
        %v2196 = vadd.f32 %v2177, %v2194
        %2198 = vrot.lane.b32.xlu0 %v2183, 112
        %v2199 = vpop.permute.xlu0 %2198
        %v2200 = vrot.slane %v2199, 7
        %v2201 = vsel %vm1417, %v2200, %v2199
        %v2203 = vadd.f32 %v2181, %v2201
        %2205 = vrot.lane.b32.xlu0 %v2187, 112
        %v2206 = vpop.permute.xlu0 %2205
        %v2207 = vrot.slane %v2206, 1
        %v2208 = vsel %vm1417, %v2206, %v2207
        %v2210 = vadd.f32 %v2185, %v2208
        %2212 = vrot.lane.b32.xlu0 %v2203, 96
        %v2213 = vpop.permute.xlu0 %2212
        %v2214 = vrot.slane %v2213, 1
        %v2215 = vsel %vm1412, %v2213, %v2214
        %v2217 = vadd.f32 %v2196, %v2215
        %2219 = vrot.lane.b32.xlu0 %v2189, 96
        %v2220 = vpop.permute.xlu0 %2219
        %v2221 = vrot.slane %v2220, 1
        %v2222 = vsel %vm1412, %v2220, %v2221
        %v2224 = vadd.f32 %v2210, %v2222
        %2226 = vrot.lane.b32.xlu0 %v2224, 64
        %v2227 = vpop.permute.xlu0 %2226
        %v2228 = vrot.slane %v2227, 7
        %v2229 = vsel %vm1402, %v2228, %v2227
        %v2231 = vadd.f32 %v2217, %v2229
        %v2232 = vstv %s1564
        %v2233 = vmul.f32 %v2232, %v1694
        %v2234 = vstv %s1571
        %v2235 = vmul.f32 %v2234, %v1694
        %v2236 = vstv %s1578
        %v2237 = vmul.f32 %v2236, %v1694
        %v2238 = vstv %s1585
        %v2239 = vmul.f32 %v2238, %v1703
        %v2240 = vstv %s1592
        %v2241 = vmul.f32 %v2240, %v1703
        %v2242 = vstv %s1599
        %v2243 = vmul.f32 %v2242, %v1703
        %v2244 = vstv %s1606
        %v2245 = vmul.f32 %v2244, %v1703
        %2247 = vrot.lane.b32.xlu0 %v2235, 112
        %v2248 = vpop.permute.xlu0 %2247
        %v2249 = vrot.slane %v2248, 1
        %v2250 = vsel %vm1417, %v2248, %v2249
        %v2252 = vadd.f32 %v2233, %v2250
        %2254 = vrot.lane.b32.xlu0 %v2239, 112
        %v2255 = vpop.permute.xlu0 %2254
        %v2256 = vrot.slane %v2255, 7
        %v2257 = vsel %vm1417, %v2256, %v2255
        %v2259 = vadd.f32 %v2237, %v2257
        %2261 = vrot.lane.b32.xlu0 %v2243, 112
        %v2262 = vpop.permute.xlu0 %2261
        %v2263 = vrot.slane %v2262, 1
        %v2264 = vsel %vm1417, %v2262, %v2263
        %v2266 = vadd.f32 %v2241, %v2264
        %2268 = vrot.lane.b32.xlu0 %v2259, 96
        %v2269 = vpop.permute.xlu0 %2268
        %v2270 = vrot.slane %v2269, 1
        %v2271 = vsel %vm1412, %v2269, %v2270
        %v2273 = vadd.f32 %v2252, %v2271
        %2275 = vrot.lane.b32.xlu0 %v2245, 96
        %v2276 = vpop.permute.xlu0 %2275
        %v2277 = vrot.slane %v2276, 1
        %v2278 = vsel %vm1412, %v2276, %v2277
        %v2280 = vadd.f32 %v2266, %v2278
        %2282 = vrot.lane.b32.xlu0 %v2280, 64
        %v2283 = vpop.permute.xlu0 %2282
        %v2284 = vrot.slane %v2283, 7
        %v2285 = vsel %vm1402, %v2284, %v2283
        %v2287 = vadd.f32 %v2273, %v2285
        %v2288 = vadd.f32 %v2231, %v2287
        %v2289 = vadd.s32 %v1634, 1
        %v2290 = vadd.s32 %v1635, 1
        %vm2291 = vcmp.ge.s32.totalorder %v2289, 0
        %vm2292 = vcmp.ge.s32.totalorder %v2290, 0
        %vm2293 = vcmp.lt.s32.totalorder %v2289, 16
        %vm2294 = vcmp.lt.s32.totalorder %v2290, 16
        %vm2295 = vmand %vm2291, %vm2293
        %vm2296 = vmand %vm2292, %vm2294
        %v2298 = vperm.slane %v2288, 0
        %v2299 = vperm.slane %v2288, 1
        %v2300 = vperm.slane %v2288, 2
        %2301 = vrot.lane.b32.xlu0 %v2298, 47
        %v2302 = vpop.permute.xlu0 %2301
        %2303 = vrot.lane.b32.xlu0 %v2299, 47
        %v2304 = vpop.permute.xlu0 %2303
        %2305 = vrot.lane.b32.xlu0 %v2300, 47
        %v2306 = vpop.permute.xlu0 %2305
        %vm2307 = vcmask 384000
        %v2308 = vsel %vm2307, %v2302, %v2304
        %v2309 = vsel %vm2307, %v2304, %v2306
        %v2312 = vsel %vm2295, %v2308, 0.0
        %v2313 = vsel %vm2296, %v2309, 0.0
        %v2314 = vadd.f32 %v1778, %v2312
        %v2315 = vadd.f32 %v1779, %v2313
        %v2316 = vstv %s1516
        %v2317 = vmul.f32 %v2316, %v1636
        %v2318 = vstv %s1523
        %v2319 = vmul.f32 %v2318, %v1636
        %v2320 = vstv %s1530
        %v2321 = vmul.f32 %v2320, %v1636
        %v2322 = vstv %s1537
        %v2323 = vmul.f32 %v2322, %v1645
        %v2324 = vstv %s1544
        %v2325 = vmul.f32 %v2324, %v1645
        %v2326 = vstv %s1551
        %v2327 = vmul.f32 %v2326, %v1645
        %v2328 = vstv %s1558
        %v2329 = vmul.f32 %v2328, %v1645
        %2331 = vrot.lane.b32.xlu0 %v2319, 112
        %v2332 = vpop.permute.xlu0 %2331
        %v2333 = vrot.slane %v2332, 1
        %v2334 = vsel %vm1417, %v2332, %v2333
        %v2336 = vadd.f32 %v2317, %v2334
        %2338 = vrot.lane.b32.xlu0 %v2323, 112
        %v2339 = vpop.permute.xlu0 %2338
        %v2340 = vrot.slane %v2339, 7
        %v2341 = vsel %vm1417, %v2340, %v2339
        %v2343 = vadd.f32 %v2321, %v2341
        %2345 = vrot.lane.b32.xlu0 %v2327, 112
        %v2346 = vpop.permute.xlu0 %2345
        %v2347 = vrot.slane %v2346, 1
        %v2348 = vsel %vm1417, %v2346, %v2347
        %v2350 = vadd.f32 %v2325, %v2348
        %2352 = vrot.lane.b32.xlu0 %v2343, 96
        %v2353 = vpop.permute.xlu0 %2352
        %v2354 = vrot.slane %v2353, 1
        %v2355 = vsel %vm1412, %v2353, %v2354
        %v2357 = vadd.f32 %v2336, %v2355
        %2359 = vrot.lane.b32.xlu0 %v2329, 96
        %v2360 = vpop.permute.xlu0 %2359
        %v2361 = vrot.slane %v2360, 1
        %v2362 = vsel %vm1412, %v2360, %v2361
        %v2364 = vadd.f32 %v2350, %v2362
        %2366 = vrot.lane.b32.xlu0 %v2364, 64
        %v2367 = vpop.permute.xlu0 %2366
        %v2368 = vrot.slane %v2367, 7
        %v2369 = vsel %vm1402, %v2368, %v2367
        %v2371 = vadd.f32 %v2357, %v2369
        %v2372 = vstv %s1565
        %v2373 = vmul.f32 %v2372, %v1694
        %v2374 = vstv %s1572
        %v2375 = vmul.f32 %v2374, %v1694
        %v2376 = vstv %s1579
        %v2377 = vmul.f32 %v2376, %v1694
        %v2378 = vstv %s1586
        %v2379 = vmul.f32 %v2378, %v1703
        %v2380 = vstv %s1593
        %v2381 = vmul.f32 %v2380, %v1703
        %v2382 = vstv %s1600
        %v2383 = vmul.f32 %v2382, %v1703
        %v2384 = vstv %s1607
        %v2385 = vmul.f32 %v2384, %v1703
        %2387 = vrot.lane.b32.xlu0 %v2375, 112
        %v2388 = vpop.permute.xlu0 %2387
        %v2389 = vrot.slane %v2388, 1
        %v2390 = vsel %vm1417, %v2388, %v2389
        %v2392 = vadd.f32 %v2373, %v2390
        %2394 = vrot.lane.b32.xlu0 %v2379, 112
        %v2395 = vpop.permute.xlu0 %2394
        %v2396 = vrot.slane %v2395, 7
        %v2397 = vsel %vm1417, %v2396, %v2395
        %v2399 = vadd.f32 %v2377, %v2397
        %2401 = vrot.lane.b32.xlu0 %v2383, 112
        %v2402 = vpop.permute.xlu0 %2401
        %v2403 = vrot.slane %v2402, 1
        %v2404 = vsel %vm1417, %v2402, %v2403
        %v2406 = vadd.f32 %v2381, %v2404
        %2408 = vrot.lane.b32.xlu0 %v2399, 96
        %v2409 = vpop.permute.xlu0 %2408
        %v2410 = vrot.slane %v2409, 1
        %v2411 = vsel %vm1412, %v2409, %v2410
        %v2413 = vadd.f32 %v2392, %v2411
        %2415 = vrot.lane.b32.xlu0 %v2385, 96
        %v2416 = vpop.permute.xlu0 %2415
        %v2417 = vrot.slane %v2416, 1
        %v2418 = vsel %vm1412, %v2416, %v2417
        %v2420 = vadd.f32 %v2406, %v2418
        %2422 = vrot.lane.b32.xlu0 %v2420, 64
        %v2423 = vpop.permute.xlu0 %2422
        %v2424 = vrot.slane %v2423, 7
        %v2425 = vsel %vm1402, %v2424, %v2423
        %v2427 = vadd.f32 %v2413, %v2425
        %v2428 = vadd.f32 %v2371, %v2427
        %v2429 = vadd.s32 %v1634, 2
        %v2430 = vadd.s32 %v1635, 2
        %vm2431 = vcmp.ge.s32.totalorder %v2429, 0
        %vm2432 = vcmp.ge.s32.totalorder %v2430, 0
        %vm2433 = vcmp.lt.s32.totalorder %v2429, 16
        %vm2434 = vcmp.lt.s32.totalorder %v2430, 16
        %vm2435 = vmand %vm2431, %vm2433
        %vm2436 = vmand %vm2432, %vm2434
        %v2438 = vperm.slane %v2428, 0
        %v2439 = vperm.slane %v2428, 1
        %v2440 = vperm.slane %v2428, 2
        %2441 = vrot.lane.b32.xlu0 %v2438, 46
        %v2442 = vpop.permute.xlu0 %2441
        %2443 = vrot.lane.b32.xlu0 %v2439, 46
        %v2444 = vpop.permute.xlu0 %2443
        %2445 = vrot.lane.b32.xlu0 %v2440, 46
        %v2446 = vpop.permute.xlu0 %2445
        %vm2447 = vcmask 375808
        %v2448 = vsel %vm2447, %v2442, %v2444
        %v2449 = vsel %vm2447, %v2444, %v2446
        %v2452 = vsel %vm2435, %v2448, 0.0
        %v2453 = vsel %vm2436, %v2449, 0.0
        %v2454 = vadd.f32 %v1918, %v2452
        %v2455 = vadd.f32 %v1919, %v2453
        %v2456 = vstv %s1517
        %v2457 = vmul.f32 %v2456, %v1636
        %v2458 = vstv %s1524
        %v2459 = vmul.f32 %v2458, %v1636
        %v2460 = vstv %s1531
        %v2461 = vmul.f32 %v2460, %v1636
        %v2462 = vstv %s1538
        %v2463 = vmul.f32 %v2462, %v1645
        %v2464 = vstv %s1545
        %v2465 = vmul.f32 %v2464, %v1645
        %v2466 = vstv %s1552
        %v2467 = vmul.f32 %v2466, %v1645
        %v2468 = vstv %s1559
        %v2469 = vmul.f32 %v2468, %v1645
        %2471 = vrot.lane.b32.xlu0 %v2459, 112
        %v2472 = vpop.permute.xlu0 %2471
        %v2473 = vrot.slane %v2472, 1
        %v2474 = vsel %vm1417, %v2472, %v2473
        %v2476 = vadd.f32 %v2457, %v2474
        %2478 = vrot.lane.b32.xlu0 %v2463, 112
        %v2479 = vpop.permute.xlu0 %2478
        %v2480 = vrot.slane %v2479, 7
        %v2481 = vsel %vm1417, %v2480, %v2479
        %v2483 = vadd.f32 %v2461, %v2481
        %2485 = vrot.lane.b32.xlu0 %v2467, 112
        %v2486 = vpop.permute.xlu0 %2485
        %v2487 = vrot.slane %v2486, 1
        %v2488 = vsel %vm1417, %v2486, %v2487
        %v2490 = vadd.f32 %v2465, %v2488
        %2492 = vrot.lane.b32.xlu0 %v2483, 96
        %v2493 = vpop.permute.xlu0 %2492
        %v2494 = vrot.slane %v2493, 1
        %v2495 = vsel %vm1412, %v2493, %v2494
        %v2497 = vadd.f32 %v2476, %v2495
        %2499 = vrot.lane.b32.xlu0 %v2469, 96
        %v2500 = vpop.permute.xlu0 %2499
        %v2501 = vrot.slane %v2500, 1
        %v2502 = vsel %vm1412, %v2500, %v2501
        %v2504 = vadd.f32 %v2490, %v2502
        %2506 = vrot.lane.b32.xlu0 %v2504, 64
        %v2507 = vpop.permute.xlu0 %2506
        %v2508 = vrot.slane %v2507, 7
        %v2509 = vsel %vm1402, %v2508, %v2507
        %v2511 = vadd.f32 %v2497, %v2509
        %v2512 = vstv %s1566
        %v2513 = vmul.f32 %v2512, %v1694
        %v2514 = vstv %s1573
        %v2515 = vmul.f32 %v2514, %v1694
        %v2516 = vstv %s1580
        %v2517 = vmul.f32 %v2516, %v1694
        %v2518 = vstv %s1587
        %v2519 = vmul.f32 %v2518, %v1703
        %v2520 = vstv %s1594
        %v2521 = vmul.f32 %v2520, %v1703
        %v2522 = vstv %s1601
        %v2523 = vmul.f32 %v2522, %v1703
        %v2524 = vstv %s1608
        %v2525 = vmul.f32 %v2524, %v1703
        %2527 = vrot.lane.b32.xlu0 %v2515, 112
        %v2528 = vpop.permute.xlu0 %2527
        %v2529 = vrot.slane %v2528, 1
        %v2530 = vsel %vm1417, %v2528, %v2529
        %v2532 = vadd.f32 %v2513, %v2530
        %2534 = vrot.lane.b32.xlu0 %v2519, 112
        %v2535 = vpop.permute.xlu0 %2534
        %v2536 = vrot.slane %v2535, 7
        %v2537 = vsel %vm1417, %v2536, %v2535
        %v2539 = vadd.f32 %v2517, %v2537
        %2541 = vrot.lane.b32.xlu0 %v2523, 112
        %v2542 = vpop.permute.xlu0 %2541
        %v2543 = vrot.slane %v2542, 1
        %v2544 = vsel %vm1417, %v2542, %v2543
        %v2546 = vadd.f32 %v2521, %v2544
        %2548 = vrot.lane.b32.xlu0 %v2539, 96
        %v2549 = vpop.permute.xlu0 %2548
        %v2550 = vrot.slane %v2549, 1
        %v2551 = vsel %vm1412, %v2549, %v2550
        %v2553 = vadd.f32 %v2532, %v2551
        %2555 = vrot.lane.b32.xlu0 %v2525, 96
        %v2556 = vpop.permute.xlu0 %2555
        %v2557 = vrot.slane %v2556, 1
        %v2558 = vsel %vm1412, %v2556, %v2557
        %v2560 = vadd.f32 %v2546, %v2558
        %2562 = vrot.lane.b32.xlu0 %v2560, 64
        %v2563 = vpop.permute.xlu0 %2562
        %v2564 = vrot.slane %v2563, 7
        %v2565 = vsel %vm1402, %v2564, %v2563
        %v2567 = vadd.f32 %v2553, %v2565
        %v2568 = vadd.f32 %v2511, %v2567
        %v2569 = vadd.s32 %v1634, 3
        %v2570 = vadd.s32 %v1635, 3
        %vm2571 = vcmp.ge.s32.totalorder %v2569, 0
        %vm2572 = vcmp.ge.s32.totalorder %v2570, 0
        %vm2573 = vcmp.lt.s32.totalorder %v2569, 16
        %vm2574 = vcmp.lt.s32.totalorder %v2570, 16
        %vm2575 = vmand %vm2571, %vm2573
        %vm2576 = vmand %vm2572, %vm2574
        %v2578 = vperm.slane %v2568, 0
        %v2579 = vperm.slane %v2568, 1
        %v2580 = vperm.slane %v2568, 2
        %2581 = vrot.lane.b32.xlu0 %v2578, 45
        %v2582 = vpop.permute.xlu0 %2581
        %2583 = vrot.lane.b32.xlu0 %v2579, 45
        %v2584 = vpop.permute.xlu0 %2583
        %2585 = vrot.lane.b32.xlu0 %v2580, 45
        %v2586 = vpop.permute.xlu0 %2585
        %vm2587 = vcmask 367616
        %v2588 = vsel %vm2587, %v2582, %v2584
        %v2589 = vsel %vm2587, %v2584, %v2586
        %v2592 = vsel %vm2575, %v2588, 0.0
        %v2593 = vsel %vm2576, %v2589, 0.0
        %v2594 = vadd.f32 %v2058, %v2592
        %v2595 = vadd.f32 %v2059, %v2593
        %v2596 = vadd.f32 %v2314, %v2454
        %v2597 = vadd.f32 %v2315, %v2455
        %v2599 = vperm.slane %v2175, 0
        %v2600 = vperm.slane %v2175, 1
        %v2601 = vperm.slane %v2175, 2
        %2602 = vrot.lane.b32.xlu0 %v2599, 48
        %v2603 = vpop.permute.xlu0 %2602
        %2604 = vrot.lane.b32.xlu0 %v2600, 48
        %v2605 = vpop.permute.xlu0 %2604
        %2606 = vrot.lane.b32.xlu0 %v2601, 48
        %v2607 = vpop.permute.xlu0 %2606
        %v2608 = vsel %vm1397, %v2603, %v2605
        %v2609 = vsel %vm1397, %v2605, %v2607
        %v2612 = vadd.f32 %v2594, %v2608
        %v2613 = vadd.f32 %v2595, %v2609
        %v2614 = vadd.f32 %v2596, %v2612
        %v2615 = vadd.f32 %v2597, %v2613
        %s2616 = sld [smem:[#allocation4]]
        %v2617 = vstv %s2616
        %v2618 = vadd.f32 %v2614, %v2617
        %v2619 = vadd.f32 %v2615, %v2617
        %v2620 = vxor.u32 %v2618, 2147483648
        %v2621 = vxor.u32 %v2619, 2147483648
        %v2622 = vmul.f32 %v2620, 1.442695
        %v2623 = vpow.pop %v2622
        %v2624 = vmul.f32 %v2621, 1.442695
        %v2625 = vpow.pop %v2624
        %v2626 = vadd.f32 %v2623, 1.0
        %v2627 = vadd.f32 %v2625, 1.0
        %v2628 = vrcp.pop %v2626
        %v2629 = vmul.f32 %v2626, %v2628
        %v2630 = vsub.f32 1.0, %v2629
        %v2631 = vmul.f32 %v2628, %v2630
        %v2632 = vadd.f32 %v2628, %v2631
        %vm2633 = vweird.f32 %v2626
        %vm2634 = vweird.f32 %v2628
        %vm2635 = vmor %vm2633, %vm2634
        %v2636 = vsel %vm2635, %v2628, %v2632
        %v2637 = vand.u32 2147483647, %v2626
        %vm2638 = vcmp.eq.f32.partialorder %v2637, 8.507059e+37
        %v2639 = vand.u32 %v2626, 2147483648
        %v2640 = vor.u32 1.1754944e-38, %v2639
        %v2641 = vsel %vm2638, %v2640, %v2636
        %v2642 = vmul.f32 1.0, %v2641
        %v2643 = vrcp.pop %v2627
        %v2644 = vmul.f32 %v2627, %v2643
        %v2645 = vsub.f32 1.0, %v2644
        %v2646 = vmul.f32 %v2643, %v2645
        %v2647 = vadd.f32 %v2643, %v2646
        %vm2648 = vweird.f32 %v2627
        %vm2649 = vweird.f32 %v2643
        %vm2650 = vmor %vm2648, %vm2649
        %v2651 = vsel %vm2650, %v2643, %v2647
        %v2652 = vand.u32 2147483647, %v2627
        %vm2653 = vcmp.eq.f32.partialorder %v2652, 8.507059e+37
        %v2654 = vand.u32 %v2627, 2147483648
        %v2655 = vor.u32 1.1754944e-38, %v2654
        %v2656 = vsel %vm2653, %v2655, %v2651
        %v2657 = vmul.f32 1.0, %v2656
        %v2658 = vperm.slane %v2642, 0
        %v2659 = vperm.slane %v2657, 0
        %v2660 = vmul.f32 %v785, %v2658
        %v2661 = vmul.f32 %v786, %v2659
        %v2662 = vmul.f32 %v787, %v2658
        %v2663 = vmul.f32 %v788, %v2659
        %v2664 = vmul.f32 %v789, %v2658
        %v2665 = vmul.f32 %v790, %v2659
        %v2666 = vmul.f32 %v791, %v2658
        %v2667 = vmul.f32 %v792, %v2659
        %v2668 = vadd.f32 %v2660, %v518
        %v2669 = vadd.f32 %v2661, %v519
        %v2670 = vadd.f32 %v2662, %v520
        %v2671 = vadd.f32 %v2663, %v521
        %v2672 = vadd.f32 %v2664, %v522
        %v2673 = vadd.f32 %v2665, %v523
        %v2674 = vadd.f32 %v2666, %v524
        %v2675 = vadd.f32 %v2667, %v525
        %v2676 = vadd.f32 %v2668, %v1418
        %v2677 = vadd.f32 %v2669, %v1446
        %v2678 = vadd.f32 %v2670, %v1419
        %v2679 = vadd.f32 %v2671, %v1447
        %v2680 = vadd.f32 %v2672, %v1420
        %v2681 = vadd.f32 %v2673, %v1448
        %v2682 = vadd.f32 %v2674, %v1421
        %v2683 = vadd.f32 %v2675, %v1449
        %2684 = vst [vmem:[%s517] sm:$0xff] %v2676
        %2685 = vst [vmem:[%s517 + $0x8] sm:$0xff] %v2677
        %2686 = vst [vmem:[%s517 + $0x10] sm:$0xff] %v2678
        %2687 = vst [vmem:[%s517 + $0x18] sm:$0xff] %v2679
        %2688 = vst [vmem:[%s517 + $0x20] sm:$0xff] %v2680
        %2689 = vst [vmem:[%s517 + $0x28] sm:$0xff] %v2681
        %2690 = vst [vmem:[%s517 + $0x30] sm:$0xff] %v2682
        %2691 = vst [vmem:[%s517 + $0x38] sm:$0xff] %v2683
        %p2692 = scmp.lt.s32.totalorder %s21, 1
        %s2693 = scalar_select %p2692, %s21, 1
        %s2694 = smul.addr %s2693, 8
        %s2695 = smul.addr %s2694, 8
        %s2696 = scalar_lea.vmem %s8, %s2695
        // Predicated region
        $region95: #{ra1_forward.1} parent=85 // pred_check
          %p2697 = pneg %p222
        $region96: #{ra1_forward.1} parent=85 // pred_check_branch
          %2699 = sbr.rel (%p2697) target = $region98
        $region97: #{ra1_forward.1} parent=85 // pred_region
          _
        $region98: #{ra1_forward.1} parent=85 // pred_fallthru
          _
      $region86: #{ra1_forward.1} parent=5 // pred_fallthru
        _
      %p2700 = scmp.le.s32.totalorder 2, %s16
      // Predicated region
      $region99: #{ra1_forward.1} parent=5 // pred_check
        %p2701 = pneg %p2700
      $region100: #{ra1_forward.1} parent=5 // pred_check_branch
        %2703 = sbr.rel (%p2701) target = $region102
      $region101: #{ra1_forward.1} parent=5 // pred_region
        %s2704 = ssub.s32 %s16, 2
        // Predicated region
        $region103: #{ra1_forward.1} parent=101 // pred_check
          %p2705 = pneg %p228
        $region104: #{ra1_forward.1} parent=101 // pred_check_branch
          %2707 = sbr.rel (%p2705) target = $region106
        $region105: #{ra1_forward.1} parent=101 // pred_region
          %p2708 = scmp.lt.s32.totalorder %s22, 1
          %s2709 = scalar_select %p2708, %s22, 1
          %s2710 = smul.addr %s2709, 8
          %s2711 = smul.addr %s2710, 8
          %s2712 = scalar_lea.vmem %s8, %s2711
        $region106: #{ra1_forward.1} parent=101 // pred_fallthru
          _
      $region102: #{ra1_forward.1} parent=5 // pred_fallthru
        _
    $region6: #{ra1_forward.1} parent=1 // loop_footer
      %s20 = sadd.s32 1, %s16
    $region7: #{ra1_forward.1} parent=1 // loop_footer_branch
      %15 = sbr.rel target = $region3
    $region8: #{ra1_forward.1} parent=1 // loop_exit
      _
    %2713 = vsyncpa [#allocation7], 1
    %s2714 = scalar_lea.sflag [#allocation7], 1
    %2715 = vsyncpa %s2714, 1

</llo_original>
